<compile_context>
chip_gen: v5e
topology: v5e:2x2
jax: 0.10.0
libtpu: 0.0.40
codegen_flags: <defaults>
</compile_context>

<pallas_src>
from math import log2

import jax
import jax.numpy as jnp
from jax import lax
from jax.experimental import pallas as pl
from jax.experimental.pallas import tpu as pltpu

EPS = 1e-5
MXU_DTYPE = jnp.bfloat16      # operand dtype for stage/head matmuls (f32 accumulation)


# ----------------------------- Pallas kernel -------------------------------

def _cnn_fused_kernel(x_ref,
                      m1_ref, b1_ref, rm1_ref, rb1_ref,
                      m2_ref, b2_ref, rm2_ref, rb2_ref,
                      m3_ref, b3_ref, rm3_ref, rb3_ref,
                      w1_ref, c1_ref, w2_ref, c2_ref,
                      o_ref):
    """Whole CNN forward for the batch in one grid step.

    Activation layout: one row per sample, lanes = channel-major (c*S + p) flatten.
      x_ref : (N, Cin*H*W)         f32   raw NCHW-flattened input
      m*    : (Sin*Cin, Sout*Cout) bf16  dense conv matrix (embedding folded into m1)
      b*    : (1, Sout*Cout)       f32   conv bias, pre-broadcast over spatial lanes
      rm*   : (Sout*Cout, Cout)    f32   per-channel spatial mean reduction (1/S)
      rb*   : (Cout, Sout*Cout)    f32   per-channel spatial broadcast (0/1)
      w1/c1 : (feat, 128)/(1, 128)       first Linear (hidden padded 100 -> 128)
      w2/c2 : (128, nc)/(1, nc)          logits Linear
      o_ref : (N, nc)              f32
    """
    a = x_ref[...]
    for m_ref, b_ref, rm_ref, rb_ref in (
            (m1_ref, b1_ref, rm1_ref, rb1_ref),
            (m2_ref, b2_ref, rm2_ref, rb2_ref),
            (m3_ref, b3_ref, rm3_ref, rb3_ref)):
        # conv (dense matmul) + bias + ReLU
        y = jnp.dot(a.astype(MXU_DTYPE), m_ref[...],
                    preferred_element_type=jnp.float32) + b_ref[...]
        y = jnp.maximum(y, 0.0)
        # InstanceNorm2d: per-(sample, channel) spatial stats via tiny f32 matmuls
        mean = jnp.dot(y, rm_ref[...], preferred_element_type=jnp.float32)      # (N, C)
        centered = y - jnp.dot(mean, rb_ref[...], preferred_element_type=jnp.float32)
        var = jnp.dot(centered * centered, rm_ref[...],
                      preferred_element_type=jnp.float32)                        # (N, C)
        scale = lax.rsqrt(var + EPS)
        a = centered * jnp.dot(scale, rb_ref[...], preferred_element_type=jnp.float32)
    # head: Linear(feat -> hidden_pad) -> Linear(hidden_pad -> num_classes)
    h = jnp.dot(a.astype(MXU_DTYPE), w1_ref[...],
                preferred_element_type=jnp.float32) + c1_ref[...]
    o_ref[...] = (jnp.dot(h.astype(MXU_DTYPE), w2_ref[...],
                          preferred_element_type=jnp.float32)
                  + c2_ref[...]).astype(o_ref.dtype)


# ----------------------------- pallas_call wrapper --------------------------

def cnn_forward(operands, x_nchw):
    """operands: tuple from prepare_params; x_nchw: (N, C, H, W) f32 (PyTorch layout)."""
    N = x_nchw.shape[0]
    xf = x_nchw.reshape(N, -1).astype(jnp.float32)   # NCHW flatten (free reshape)
    nc = operands[-1].shape[1]

    mm_flops = 0
    bytes_accessed = xf.size * 4 + N * nc * 4
    for o in operands:
        bytes_accessed += o.size * o.dtype.itemsize
        if o.shape[0] > 1:                           # used as a matmul RHS
            mm_flops += 2 * N * o.shape[0] * o.shape[1]

    in_specs = [pl.BlockSpec(xf.shape, lambda i: (0, 0))]
    in_specs += [pl.BlockSpec(o.shape, lambda i: (0, 0)) for o in operands]

    return pl.pallas_call(
        _cnn_fused_kernel,
        out_shape=jax.ShapeDtypeStruct((N, nc), jnp.float32),
        grid=(1,),
        in_specs=in_specs,
        out_specs=pl.BlockSpec((N, nc), lambda i: (0, 0)),
        compiler_params=pltpu.CompilerParams(
            dimension_semantics=("arbitrary",),
            vmem_limit_bytes=32 * 1024 * 1024),
        cost_estimate=pl.CostEstimate(flops=int(mm_flops),
                                      transcendentals=int(N * 64),
                                      bytes_accessed=int(bytes_accessed)),
    )(xf, *operands)


# ----------------------------- weight preparation (plain JAX, one-time) -----

def dense_conv_matrix(w, h_in, w_in):
    """PyTorch OIHW (Cout, Cin, 4, 4) 4x4/stride-2/pad-1 conv -> dense matrix of
    shape (Cin*H*W, Cout*OH*OW) acting on channel-major (NCHW) flattened rows."""
    c_out, c_in = w.shape[0], w.shape[1]
    oh, ow = h_in // 2, w_in // 2
    ky = jnp.arange(h_in)[:, None] - 2 * jnp.arange(oh)[None, :] + 1     # (H, OH)
    kx = jnp.arange(w_in)[:, None] - 2 * jnp.arange(ow)[None, :] + 1     # (W, OW)
    vy = (ky >= 0) & (ky < 4)
    vx = (kx >= 0) & (kx < 4)
    wt = jnp.transpose(w, (1, 0, 2, 3))                                  # (Cin, Cout, 4, 4)
    t = wt[:, :, jnp.clip(ky, 0, 3)[:, :, None, None],
           jnp.clip(kx, 0, 3)[None, None, :, :]]                         # (Cin,Cout,H,OH,W,OW)
    t = t * (vy[:, :, None, None] & vx[None, None, :, :]).astype(w.dtype)
    # rows = (ci, iy, ix), cols = (co, oy, ox): both channel-major / NCHW order
    return jnp.transpose(t, (0, 2, 4, 1, 3, 5)).reshape(c_in * h_in * w_in,
                                                        c_out * oh * ow)


def prepare_params(params, input_shape):
    """Embedding folding, dense conv matrices, pre-broadcast biases, InstanceNorm
    reduce/broadcast matrices and padded head weights (all done once)."""
    c_in, h, w = input_shape
    we = params["embedding"].reshape(params["embedding"].shape[0], c_in)   # (Cemb, Cin)
    ops = []
    for idx, (wk, bk) in enumerate(params["stages"]):
        if idx == 0:
            # Fold the bias-free 1x1 embedding conv into stage 1 (exact: both are
            # linear and zero padding commutes with a bias-free 1x1 conv).
            wk = jnp.einsum('oekl,ei->oikl', wk, we)
        c_out = wk.shape[0]
        oh, ow = h // 2, w // 2
        s = oh * ow
        ops.append(dense_conv_matrix(wk, h, w).astype(MXU_DTYPE))
        ops.append(jnp.repeat(bk, s)[None, :].astype(jnp.float32))
        ops.append((jnp.kron(jnp.eye(c_out), jnp.ones((s, 1))) / s).astype(jnp.float32))
        ops.append(jnp.kron(jnp.eye(c_out), jnp.ones((1, s))).astype(jnp.float32))
        h, w = oh, ow

    l1, b1 = params["linear"]            # (hidden, feat), (hidden,)
    l2, b2 = params["logits"]            # (nc, hidden),   (nc,)
    hidden = l1.shape[0]
    hp = ((hidden + 127) // 128) * 128   # pad hidden to a multiple of 128 lanes
    # activation flatten order is channel-major == torch.flatten(NCHW): no permutation
    ops.append(jnp.pad(l1.T, ((0, 0), (0, hp - hidden))).astype(MXU_DTYPE))
    ops.append(jnp.pad(b1, (0, hp - hidden))[None, :].astype(jnp.float32))
    ops.append(jnp.pad(l2.T, ((0, hp - hidden), (0, 0))).astype(MXU_DTYPE))
    ops.append(b2[None, :].astype(jnp.float32))
    return tuple(ops)


# ----------------------------- model init & reference ----------------------

def init_params(key, input_shape, num_classes, embedding_filters_log=2, hidden_dim=100):
    Cin, H, W = input_shape
    efl = embedding_filters_log
    num_stages = min(7, min(int(log2(W) - log2(efl)), int(log2(H) - log2(efl))))
    keys = jax.random.split(key, 2 + 2 * num_stages + 4)
    ki = iter(range(len(keys)))
    params = {}
    # embedding: Conv2d(Cin, 2**efl, kernel_size=1, bias=False), PyTorch OIHW layout
    params["embedding"] = 0.2 * jax.random.normal(
        keys[next(ki)], (2 ** efl, Cin, 1, 1), jnp.float32)
    stages = []
    for i in range(num_stages):
        ci = 2 ** (i + efl)
        co = 2 ** (i + efl + 1)
        w = 0.1 * jax.random.normal(keys[next(ki)], (co, ci, 4, 4), jnp.float32)
        b = 0.1 * jax.random.normal(keys[next(ki)], (co,), jnp.float32)
        stages.append((w, b))
    params["stages"] = stages
    out_filters = 2 ** (num_stages + efl)
    feat = out_filters * (H // 2 ** num_stages) * (W // 2 ** num_stages)
    params["linear"] = (
        0.05 * jax.random.normal(keys[next(ki)], (hidden_dim, feat), jnp.float32),
        0.05 * jax.random.normal(keys[next(ki)], (hidden_dim,), jnp.float32),
    )
    params["logits"] = (
        0.05 * jax.random.normal(keys[next(ki)], (num_classes, hidden_dim), jnp.float32),
        0.05 * jax.random.normal(keys[next(ki)], (num_classes,), jnp.float32),
    )
    return params


def reference_forward(params, x):
    # pure-JAX f32 reference mirroring the PyTorch module exactly (NCHW, OIHW)
    dn = ("NCHW", "OIHW", "NCHW")
    y = lax.conv_general_dilated(x, params["embedding"], (1, 1), "VALID",
                                 dimension_numbers=dn)
    for (w, b) in params["stages"]:
        y = lax.conv_general_dilated(y, w, (2, 2), ((1, 1), (1, 1)),
                                     dimension_numbers=dn)
        y = y + b.reshape(1, -1, 1, 1)
        y = jnp.maximum(y, 0.0)
        mean = jnp.mean(y, axis=(2, 3), keepdims=True)
        var = jnp.mean((y - mean) ** 2, axis=(2, 3), keepdims=True)
        y = (y - mean) / jnp.sqrt(var + EPS)
    f = y.reshape(y.shape[0], -1)
    w1, b1 = params["linear"]
    w2, b2 = params["logits"]
    return (f @ w1.T + b1) @ w2.T + b2


if __name__ == "__main__":
    key = jax.random.PRNGKey(0)
    kx, kw = jax.random.split(key)

    # input_shape = (C, H, W) = (4, 16, 16), batch=2, num_classes=10
    # -> num_stages = 3, out_filters = 32, feat = 32*2*2 = 128
    input_shape = (4, 16, 16)
    num_classes = 10
    x = jax.random.normal(kx, (2,) + input_shape, jnp.float32)

    params = init_params(kw, input_shape, num_classes)
    operands = prepare_params(params, input_shape)

    out = jax.jit(cnn_forward)(operands, x)
    out = jax.block_until_ready(out)

    ref = reference_forward(params, x)
    assert out.shape == (2, num_classes), out.shape
    # Stage and head matmuls use bf16 MXU operands (f32 accumulation); compare against
    # the pure-f32 reference at a bf16-appropriate tolerance.
    max_err = float(jnp.max(jnp.abs(out - ref)))
    assert jnp.allclose(out, ref, atol=2e-2, rtol=2e-2), max_err

    print("KERNEL_OK")
</pallas_src>

<mosaic_0001>
module attributes {stable_mosaic.version = 11 : i64} {
  func.func @_cnn_fused_kernel(%arg0: i32, %arg1: memref<2x1024xf32, #tpu.memory_space<vmem>>, %arg2: memref<1024x512xbf16, #tpu.memory_space<vmem>>, %arg3: memref<1x512xf32, #tpu.memory_space<vmem>>, %arg4: memref<512x8xf32, #tpu.memory_space<vmem>>, %arg5: memref<8x512xf32, #tpu.memory_space<vmem>>, %arg6: memref<512x256xbf16, #tpu.memory_space<vmem>>, %arg7: memref<1x256xf32, #tpu.memory_space<vmem>>, %arg8: memref<256x16xf32, #tpu.memory_space<vmem>>, %arg9: memref<16x256xf32, #tpu.memory_space<vmem>>, %arg10: memref<256x128xbf16, #tpu.memory_space<vmem>>, %arg11: memref<1x128xf32, #tpu.memory_space<vmem>>, %arg12: memref<128x32xf32, #tpu.memory_space<vmem>>, %arg13: memref<32x128xf32, #tpu.memory_space<vmem>>, %arg14: memref<128x128xbf16, #tpu.memory_space<vmem>>, %arg15: memref<1x128xf32, #tpu.memory_space<vmem>>, %arg16: memref<128x10xbf16, #tpu.memory_space<vmem>>, %arg17: memref<1x10xf32, #tpu.memory_space<vmem>>, %arg18: memref<2x10xf32, #tpu.memory_space<vmem>>) attributes {dimension_semantics = [#tpu.dimension_semantics<arbitrary>], iteration_bounds = array<i64: 1>, scalar_prefetch = 0 : i64, scratch_operands = 0 : i64, tpu.core_type = #tpu.core_type<tc>, window_params = [{pipeline_mode = #tpu.pipeline_mode<synchronous>, transform_indices = @transform_0, window_bounds = array<i64: 2, 1024>}, {pipeline_mode = #tpu.pipeline_mode<synchronous>, transform_indices = @transform_1, window_bounds = array<i64: 1024, 512>}, {pipeline_mode = #tpu.pipeline_mode<synchronous>, transform_indices = @transform_2, window_bounds = array<i64: 1, 512>}, {pipeline_mode = #tpu.pipeline_mode<synchronous>, transform_indices = @transform_3, window_bounds = array<i64: 512, 8>}, {pipeline_mode = #tpu.pipeline_mode<synchronous>, transform_indices = @transform_4, window_bounds = array<i64: 8, 512>}, {pipeline_mode = #tpu.pipeline_mode<synchronous>, transform_indices = @transform_5, window_bounds = array<i64: 512, 256>}, {pipeline_mode = #tpu.pipeline_mode<synchronous>, transform_indices = @transform_6, window_bounds = array<i64: 1, 256>}, {pipeline_mode = #tpu.pipeline_mode<synchronous>, transform_indices = @transform_7, window_bounds = array<i64: 256, 16>}, {pipeline_mode = #tpu.pipeline_mode<synchronous>, transform_indices = @transform_8, window_bounds = array<i64: 16, 256>}, {pipeline_mode = #tpu.pipeline_mode<synchronous>, transform_indices = @transform_9, window_bounds = array<i64: 256, 128>}, {pipeline_mode = #tpu.pipeline_mode<synchronous>, transform_indices = @transform_10, window_bounds = array<i64: 1, 128>}, {pipeline_mode = #tpu.pipeline_mode<synchronous>, transform_indices = @transform_11, window_bounds = array<i64: 128, 32>}, {pipeline_mode = #tpu.pipeline_mode<synchronous>, transform_indices = @transform_12, window_bounds = array<i64: 32, 128>}, {pipeline_mode = #tpu.pipeline_mode<synchronous>, transform_indices = @transform_13, window_bounds = array<i64: 128, 128>}, {pipeline_mode = #tpu.pipeline_mode<synchronous>, transform_indices = @transform_14, window_bounds = array<i64: 1, 128>}, {pipeline_mode = #tpu.pipeline_mode<synchronous>, transform_indices = @transform_15, window_bounds = array<i64: 128, 10>}, {pipeline_mode = #tpu.pipeline_mode<synchronous>, transform_indices = @transform_16, window_bounds = array<i64: 1, 10>}, {pipeline_mode = #tpu.pipeline_mode<synchronous>, transform_indices = @transform_17, window_bounds = array<i64: 2, 10>}]} {
    %c0 = arith.constant 0 : index
    %c0_0 = arith.constant 0 : index
    %0 = vector.load %arg1[%c0, %c0_0] : memref<2x1024xf32, #tpu.memory_space<vmem>>, vector<2x1024xf32>
    %1 = arith.truncf %0 : vector<2x1024xf32> to vector<2x1024xbf16>
    %c0_1 = arith.constant 0 : index
    %c0_2 = arith.constant 0 : index
    %2 = vector.load %arg2[%c0_1, %c0_2] : memref<1024x512xbf16, #tpu.memory_space<vmem>>, vector<1024x512xbf16>
    %cst = arith.constant dense<0.000000e+00> : vector<2x512xf32>
    %3 = tpu.matmul %1, %2, %cst {dimension_numbers = #tpu.dot_dimension_numbers<[1], [0], [0], [1], [0, 0, 1, 1], [], []>} : vector<2x1024xbf16>, vector<1024x512xbf16>, vector<2x512xf32> -> vector<2x512xf32>
    %c0_3 = arith.constant 0 : index
    %c0_4 = arith.constant 0 : index
    %4 = vector.load %arg3[%c0_3, %c0_4] : memref<1x512xf32, #tpu.memory_space<vmem>>, vector<1x512xf32>
    %5 = vector.broadcast %4 : vector<1x512xf32> to vector<2x512xf32>
    %6 = arith.addf %3, %5 : vector<2x512xf32>
    %cst_5 = arith.constant 0.000000e+00 : f32
    %7 = vector.broadcast %cst_5 : f32 to vector<2x512xf32>
    %8 = arith.maximumf %6, %7 : vector<2x512xf32>
    %c0_6 = arith.constant 0 : index
    %c0_7 = arith.constant 0 : index
    %9 = vector.load %arg4[%c0_6, %c0_7] : memref<512x8xf32, #tpu.memory_space<vmem>>, vector<512x8xf32>
    %cst_8 = arith.constant dense<0.000000e+00> : vector<2x8xf32>
    %10 = tpu.matmul %8, %9, %cst_8 {dimension_numbers = #tpu.dot_dimension_numbers<[1], [0], [0], [1], [0, 0, 1, 1], [], []>} : vector<2x512xf32>, vector<512x8xf32>, vector<2x8xf32> -> vector<2x8xf32>
    %c0_9 = arith.constant 0 : index
    %c0_10 = arith.constant 0 : index
    %11 = vector.load %arg5[%c0_9, %c0_10] : memref<8x512xf32, #tpu.memory_space<vmem>>, vector<8x512xf32>
    %cst_11 = arith.constant dense<0.000000e+00> : vector<2x512xf32>
    %12 = tpu.matmul %10, %11, %cst_11 {dimension_numbers = #tpu.dot_dimension_numbers<[1], [0], [0], [1], [0, 0, 1, 1], [], []>} : vector<2x8xf32>, vector<8x512xf32>, vector<2x512xf32> -> vector<2x512xf32>
    %13 = arith.subf %8, %12 : vector<2x512xf32>
    %14 = arith.mulf %13, %13 : vector<2x512xf32>
    %c0_12 = arith.constant 0 : index
    %c0_13 = arith.constant 0 : index
    %15 = vector.load %arg4[%c0_12, %c0_13] : memref<512x8xf32, #tpu.memory_space<vmem>>, vector<512x8xf32>
    %cst_14 = arith.constant dense<0.000000e+00> : vector<2x8xf32>
    %16 = tpu.matmul %14, %15, %cst_14 {dimension_numbers = #tpu.dot_dimension_numbers<[1], [0], [0], [1], [0, 0, 1, 1], [], []>} : vector<2x512xf32>, vector<512x8xf32>, vector<2x8xf32> -> vector<2x8xf32>
    %cst_15 = arith.constant 9.99999974E-6 : f32
    %17 = vector.broadcast %cst_15 : f32 to vector<2x8xf32>
    %18 = arith.addf %16, %17 : vector<2x8xf32>
    %19 = math.rsqrt %18 : vector<2x8xf32>
    %c0_16 = arith.constant 0 : index
    %c0_17 = arith.constant 0 : index
    %20 = vector.load %arg5[%c0_16, %c0_17] : memref<8x512xf32, #tpu.memory_space<vmem>>, vector<8x512xf32>
    %cst_18 = arith.constant dense<0.000000e+00> : vector<2x512xf32>
    %21 = tpu.matmul %19, %20, %cst_18 {dimension_numbers = #tpu.dot_dimension_numbers<[1], [0], [0], [1], [0, 0, 1, 1], [], []>} : vector<2x8xf32>, vector<8x512xf32>, vector<2x512xf32> -> vector<2x512xf32>
    %22 = arith.mulf %13, %21 : vector<2x512xf32>
    %23 = arith.truncf %22 : vector<2x512xf32> to vector<2x512xbf16>
    %c0_19 = arith.constant 0 : index
    %c0_20 = arith.constant 0 : index
    %24 = vector.load %arg6[%c0_19, %c0_20] : memref<512x256xbf16, #tpu.memory_space<vmem>>, vector<512x256xbf16>
    %cst_21 = arith.constant dense<0.000000e+00> : vector<2x256xf32>
    %25 = tpu.matmul %23, %24, %cst_21 {dimension_numbers = #tpu.dot_dimension_numbers<[1], [0], [0], [1], [0, 0, 1, 1], [], []>} : vector<2x512xbf16>, vector<512x256xbf16>, vector<2x256xf32> -> vector<2x256xf32>
    %c0_22 = arith.constant 0 : index
    %c0_23 = arith.constant 0 : index
    %26 = vector.load %arg7[%c0_22, %c0_23] : memref<1x256xf32, #tpu.memory_space<vmem>>, vector<1x256xf32>
    %27 = vector.broadcast %26 : vector<1x256xf32> to vector<2x256xf32>
    %28 = arith.addf %25, %27 : vector<2x256xf32>
    %cst_24 = arith.constant 0.000000e+00 : f32
    %29 = vector.broadcast %cst_24 : f32 to vector<2x256xf32>
    %30 = arith.maximumf %28, %29 : vector<2x256xf32>
    %c0_25 = arith.constant 0 : index
    %c0_26 = arith.constant 0 : index
    %31 = vector.load %arg8[%c0_25, %c0_26] : memref<256x16xf32, #tpu.memory_space<vmem>>, vector<256x16xf32>
    %cst_27 = arith.constant dense<0.000000e+00> : vector<2x16xf32>
    %32 = tpu.matmul %30, %31, %cst_27 {dimension_numbers = #tpu.dot_dimension_numbers<[1], [0], [0], [1], [0, 0, 1, 1], [], []>} : vector<2x256xf32>, vector<256x16xf32>, vector<2x16xf32> -> vector<2x16xf32>
    %c0_28 = arith.constant 0 : index
    %c0_29 = arith.constant 0 : index
    %33 = vector.load %arg9[%c0_28, %c0_29] : memref<16x256xf32, #tpu.memory_space<vmem>>, vector<16x256xf32>
    %cst_30 = arith.constant dense<0.000000e+00> : vector<2x256xf32>
    %34 = tpu.matmul %32, %33, %cst_30 {dimension_numbers = #tpu.dot_dimension_numbers<[1], [0], [0], [1], [0, 0, 1, 1], [], []>} : vector<2x16xf32>, vector<16x256xf32>, vector<2x256xf32> -> vector<2x256xf32>
    %35 = arith.subf %30, %34 : vector<2x256xf32>
    %36 = arith.mulf %35, %35 : vector<2x256xf32>
    %c0_31 = arith.constant 0 : index
    %c0_32 = arith.constant 0 : index
    %37 = vector.load %arg8[%c0_31, %c0_32] : memref<256x16xf32, #tpu.memory_space<vmem>>, vector<256x16xf32>
    %cst_33 = arith.constant dense<0.000000e+00> : vector<2x16xf32>
    %38 = tpu.matmul %36, %37, %cst_33 {dimension_numbers = #tpu.dot_dimension_numbers<[1], [0], [0], [1], [0, 0, 1, 1], [], []>} : vector<2x256xf32>, vector<256x16xf32>, vector<2x16xf32> -> vector<2x16xf32>
    %cst_34 = arith.constant 9.99999974E-6 : f32
    %39 = vector.broadcast %cst_34 : f32 to vector<2x16xf32>
    %40 = arith.addf %38, %39 : vector<2x16xf32>
    %41 = math.rsqrt %40 : vector<2x16xf32>
    %c0_35 = arith.constant 0 : index
    %c0_36 = arith.constant 0 : index
    %42 = vector.load %arg9[%c0_35, %c0_36] : memref<16x256xf32, #tpu.memory_space<vmem>>, vector<16x256xf32>
    %cst_37 = arith.constant dense<0.000000e+00> : vector<2x256xf32>
    %43 = tpu.matmul %41, %42, %cst_37 {dimension_numbers = #tpu.dot_dimension_numbers<[1], [0], [0], [1], [0, 0, 1, 1], [], []>} : vector<2x16xf32>, vector<16x256xf32>, vector<2x256xf32> -> vector<2x256xf32>
    %44 = arith.mulf %35, %43 : vector<2x256xf32>
    %45 = arith.truncf %44 : vector<2x256xf32> to vector<2x256xbf16>
    %c0_38 = arith.constant 0 : index
    %c0_39 = arith.constant 0 : index
    %46 = vector.load %arg10[%c0_38, %c0_39] : memref<256x128xbf16, #tpu.memory_space<vmem>>, vector<256x128xbf16>
    %cst_40 = arith.constant dense<0.000000e+00> : vector<2x128xf32>
    %47 = tpu.matmul %45, %46, %cst_40 {dimension_numbers = #tpu.dot_dimension_numbers<[1], [0], [0], [1], [0, 0, 1, 1], [], []>} : vector<2x256xbf16>, vector<256x128xbf16>, vector<2x128xf32> -> vector<2x128xf32>
    %c0_41 = arith.constant 0 : index
    %c0_42 = arith.constant 0 : index
    %48 = vector.load %arg11[%c0_41, %c0_42] : memref<1x128xf32, #tpu.memory_space<vmem>>, vector<1x128xf32>
    %49 = vector.broadcast %48 : vector<1x128xf32> to vector<2x128xf32>
    %50 = arith.addf %47, %49 : vector<2x128xf32>
    %cst_43 = arith.constant 0.000000e+00 : f32
    %51 = vector.broadcast %cst_43 : f32 to vector<2x128xf32>
    %52 = arith.maximumf %50, %51 : vector<2x128xf32>
    %c0_44 = arith.constant 0 : index
    %c0_45 = arith.constant 0 : index
    %53 = vector.load %arg12[%c0_44, %c0_45] : memref<128x32xf32, #tpu.memory_space<vmem>>, vector<128x32xf32>
    %cst_46 = arith.constant dense<0.000000e+00> : vector<2x32xf32>
    %54 = tpu.matmul %52, %53, %cst_46 {dimension_numbers = #tpu.dot_dimension_numbers<[1], [0], [0], [1], [0, 0, 1, 1], [], []>} : vector<2x128xf32>, vector<128x32xf32>, vector<2x32xf32> -> vector<2x32xf32>
    %c0_47 = arith.constant 0 : index
    %c0_48 = arith.constant 0 : index
    %55 = vector.load %arg13[%c0_47, %c0_48] : memref<32x128xf32, #tpu.memory_space<vmem>>, vector<32x128xf32>
    %cst_49 = arith.constant dense<0.000000e+00> : vector<2x128xf32>
    %56 = tpu.matmul %54, %55, %cst_49 {dimension_numbers = #tpu.dot_dimension_numbers<[1], [0], [0], [1], [0, 0, 1, 1], [], []>} : vector<2x32xf32>, vector<32x128xf32>, vector<2x128xf32> -> vector<2x128xf32>
    %57 = arith.subf %52, %56 : vector<2x128xf32>
    %58 = arith.mulf %57, %57 : vector<2x128xf32>
    %c0_50 = arith.constant 0 : index
    %c0_51 = arith.constant 0 : index
    %59 = vector.load %arg12[%c0_50, %c0_51] : memref<128x32xf32, #tpu.memory_space<vmem>>, vector<128x32xf32>
    %cst_52 = arith.constant dense<0.000000e+00> : vector<2x32xf32>
    %60 = tpu.matmul %58, %59, %cst_52 {dimension_numbers = #tpu.dot_dimension_numbers<[1], [0], [0], [1], [0, 0, 1, 1], [], []>} : vector<2x128xf32>, vector<128x32xf32>, vector<2x32xf32> -> vector<2x32xf32>
    %cst_53 = arith.constant 9.99999974E-6 : f32
    %61 = vector.broadcast %cst_53 : f32 to vector<2x32xf32>
    %62 = arith.addf %60, %61 : vector<2x32xf32>
    %63 = math.rsqrt %62 : vector<2x32xf32>
    %c0_54 = arith.constant 0 : index
    %c0_55 = arith.constant 0 : index
    %64 = vector.load %arg13[%c0_54, %c0_55] : memref<32x128xf32, #tpu.memory_space<vmem>>, vector<32x128xf32>
    %cst_56 = arith.constant dense<0.000000e+00> : vector<2x128xf32>
    %65 = tpu.matmul %63, %64, %cst_56 {dimension_numbers = #tpu.dot_dimension_numbers<[1], [0], [0], [1], [0, 0, 1, 1], [], []>} : vector<2x32xf32>, vector<32x128xf32>, vector<2x128xf32> -> vector<2x128xf32>
    %66 = arith.mulf %57, %65 : vector<2x128xf32>
    %67 = arith.truncf %66 : vector<2x128xf32> to vector<2x128xbf16>
    %c0_57 = arith.constant 0 : index
    %c0_58 = arith.constant 0 : index
    %68 = vector.load %arg14[%c0_57, %c0_58] : memref<128x128xbf16, #tpu.memory_space<vmem>>, vector<128x128xbf16>
    %cst_59 = arith.constant dense<0.000000e+00> : vector<2x128xf32>
    %69 = tpu.matmul %67, %68, %cst_59 {dimension_numbers = #tpu.dot_dimension_numbers<[1], [0], [0], [1], [0, 0, 1, 1], [], []>} : vector<2x128xbf16>, vector<128x128xbf16>, vector<2x128xf32> -> vector<2x128xf32>
    %c0_60 = arith.constant 0 : index
    %c0_61 = arith.constant 0 : index
    %70 = vector.load %arg15[%c0_60, %c0_61] : memref<1x128xf32, #tpu.memory_space<vmem>>, vector<1x128xf32>
    %71 = vector.broadcast %70 : vector<1x128xf32> to vector<2x128xf32>
    %72 = arith.addf %69, %71 : vector<2x128xf32>
    %73 = arith.truncf %72 : vector<2x128xf32> to vector<2x128xbf16>
    %c0_62 = arith.constant 0 : index
    %c0_63 = arith.constant 0 : index
    %74 = vector.load %arg16[%c0_62, %c0_63] : memref<128x10xbf16, #tpu.memory_space<vmem>>, vector<128x10xbf16>
    %cst_64 = arith.constant dense<0.000000e+00> : vector<2x10xf32>
    %75 = tpu.matmul %73, %74, %cst_64 {dimension_numbers = #tpu.dot_dimension_numbers<[1], [0], [0], [1], [0, 0, 1, 1], [], []>} : vector<2x128xbf16>, vector<128x10xbf16>, vector<2x10xf32> -> vector<2x10xf32>
    %c0_65 = arith.constant 0 : index
    %c0_66 = arith.constant 0 : index
    %76 = vector.load %arg17[%c0_65, %c0_66] : memref<1x10xf32, #tpu.memory_space<vmem>>, vector<1x10xf32>
    %77 = vector.broadcast %76 : vector<1x10xf32> to vector<2x10xf32>
    %78 = arith.addf %75, %77 : vector<2x10xf32>
    %c0_67 = arith.constant 0 : index
    %c0_68 = arith.constant 0 : index
    %79 = vector.load %arg18[%c0_67, %c0_68] : memref<2x10xf32, #tpu.memory_space<vmem>>, vector<2x10xf32>
    tpu.vector_store %arg18[%c0_67, %c0_68], %78 {strides = array<i32>} : memref<2x10xf32, #tpu.memory_space<vmem>>, vector<2x10xf32>,
    return
  }
  func.func @transform_0(%arg0: i32) -> (i32, i32) {
    %c0_i32 = arith.constant 0 : i32
    %c0_i32_0 = arith.constant 0 : i32
    %c0_i32_1 = arith.constant 0 : i32
    return %c0_i32, %c0_i32_0 : i32, i32
  }
  func.func @transform_1(%arg0: i32) -> (i32, i32) {
    %c0_i32 = arith.constant 0 : i32
    %c0_i32_0 = arith.constant 0 : i32
    %c0_i32_1 = arith.constant 0 : i32
    return %c0_i32, %c0_i32_0 : i32, i32
  }
  func.func @transform_2(%arg0: i32) -> (i32, i32) {
    %c0_i32 = arith.constant 0 : i32
    %c0_i32_0 = arith.constant 0 : i32
    %c0_i32_1 = arith.constant 0 : i32
    return %c0_i32, %c0_i32_0 : i32, i32
  }
  func.func @transform_3(%arg0: i32) -> (i32, i32) {
    %c0_i32 = arith.constant 0 : i32
    %c0_i32_0 = arith.constant 0 : i32
    %c0_i32_1 = arith.constant 0 : i32
    return %c0_i32, %c0_i32_0 : i32, i32
  }
  func.func @transform_4(%arg0: i32) -> (i32, i32) {
    %c0_i32 = arith.constant 0 : i32
    %c0_i32_0 = arith.constant 0 : i32
    %c0_i32_1 = arith.constant 0 : i32
    return %c0_i32, %c0_i32_0 : i32, i32
  }
  func.func @transform_5(%arg0: i32) -> (i32, i32) {
    %c0_i32 = arith.constant 0 : i32
    %c0_i32_0 = arith.constant 0 : i32
    %c0_i32_1 = arith.constant 0 : i32
    return %c0_i32, %c0_i32_0 : i32, i32
  }
  func.func @transform_6(%arg0: i32) -> (i32, i32) {
    %c0_i32 = arith.constant 0 : i32
    %c0_i32_0 = arith.constant 0 : i32
    %c0_i32_1 = arith.constant 0 : i32
    return %c0_i32, %c0_i32_0 : i32, i32
  }
  func.func @transform_7(%arg0: i32) -> (i32, i32) {
    %c0_i32 = arith.constant 0 : i32
    %c0_i32_0 = arith.constant 0 : i32
    %c0_i32_1 = arith.constant 0 : i32
    return %c0_i32, %c0_i32_0 : i32, i32
  }
  func.func @transform_8(%arg0: i32) -> (i32, i32) {
    %c0_i32 = arith.constant 0 : i32
    %c0_i32_0 = arith.constant 0 : i32
    %c0_i32_1 = arith.constant 0 : i32
    return %c0_i32, %c0_i32_0 : i32, i32
  }
  func.func @transform_9(%arg0: i32) -> (i32, i32) {
    %c0_i32 = arith.constant 0 : i32
    %c0_i32_0 = arith.constant 0 : i32
    %c0_i32_1 = arith.constant 0 : i32
    return %c0_i32, %c0_i32_0 : i32, i32
  }
  func.func @transform_10(%arg0: i32) -> (i32, i32) {
    %c0_i32 = arith.constant 0 : i32
    %c0_i32_0 = arith.constant 0 : i32
    %c0_i32_1 = arith.constant 0 : i32
    return %c0_i32, %c0_i32_0 : i32, i32
  }
  func.func @transform_11(%arg0: i32) -> (i32, i32) {
    %c0_i32 = arith.constant 0 : i32
    %c0_i32_0 = arith.constant 0 : i32
    %c0_i32_1 = arith.constant 0 : i32
    return %c0_i32, %c0_i32_0 : i32, i32
  }
  func.func @transform_12(%arg0: i32) -> (i32, i32) {
    %c0_i32 = arith.constant 0 : i32
    %c0_i32_0 = arith.constant 0 : i32
    %c0_i32_1 = arith.constant 0 : i32
    return %c0_i32, %c0_i32_0 : i32, i32
  }
  func.func @transform_13(%arg0: i32) -> (i32, i32) {
    %c0_i32 = arith.constant 0 : i32
    %c0_i32_0 = arith.constant 0 : i32
    %c0_i32_1 = arith.constant 0 : i32
    return %c0_i32, %c0_i32_0 : i32, i32
  }
  func.func @transform_14(%arg0: i32) -> (i32, i32) {
    %c0_i32 = arith.constant 0 : i32
    %c0_i32_0 = arith.constant 0 : i32
    %c0_i32_1 = arith.constant 0 : i32
    return %c0_i32, %c0_i32_0 : i32, i32
  }
  func.func @transform_15(%arg0: i32) -> (i32, i32) {
    %c0_i32 = arith.constant 0 : i32
    %c0_i32_0 = arith.constant 0 : i32
    %c0_i32_1 = arith.constant 0 : i32
    return %c0_i32, %c0_i32_0 : i32, i32
  }
  func.func @transform_16(%arg0: i32) -> (i32, i32) {
    %c0_i32 = arith.constant 0 : i32
    %c0_i32_0 = arith.constant 0 : i32
    %c0_i32_1 = arith.constant 0 : i32
    return %c0_i32, %c0_i32_0 : i32, i32
  }
  func.func @transform_17(%arg0: i32) -> (i32, i32) {
    %c0_i32 = arith.constant 0 : i32
    %c0_i32_0 = arith.constant 0 : i32
    %c0_i32_1 = arith.constant 0 : i32
    return %c0_i32, %c0_i32_0 : i32, i32
  }
}

</mosaic_0001>

<llo_original>
// kernel: cnn_forward.1
$region0: #{cnn_forward.1}
  #allocation0 [shape = 'u32[]', space=smem, size = 0x4, offset = 0x4, fixed_abs, tag = 'smem constant byte address 0x4 - core index']
  #allocation1 [shape = 'u32[72,128]{1,0:T(1,128)}', space=vmem, size = 0x9000, scoped, tag = 'internal scratch']
  %s0 = inlined_call_operand.vmem [shape: f32[2,1024], index: 0, kind: input, shape index: {}]
  %s1 = inlined_call_operand.hbm [shape: bf16[1024,512], index: 1, kind: input, shape index: {}]
  %s2 = inlined_call_operand.vmem [shape: f32[1,512], index: 2, kind: input, shape index: {}]
  %s3 = inlined_call_operand.vmem [shape: f32[512,8], index: 3, kind: input, shape index: {}]
  %s4 = inlined_call_operand.vmem [shape: f32[8,512], index: 4, kind: input, shape index: {}]
  %s5 = inlined_call_operand.vmem [shape: bf16[512,256], index: 5, kind: input, shape index: {}]
  %s6 = inlined_call_operand.vmem [shape: f32[1,256], index: 6, kind: input, shape index: {}]
  %s7 = inlined_call_operand.vmem [shape: f32[256,16], index: 7, kind: input, shape index: {}]
  %s8 = inlined_call_operand.vmem [shape: f32[16,256], index: 8, kind: input, shape index: {}]
  %s9 = inlined_call_operand.vmem [shape: bf16[256,128], index: 9, kind: input, shape index: {}]
  %s10 = inlined_call_operand.vmem [shape: f32[1,128], index: 10, kind: input, shape index: {}]
  %s11 = inlined_call_operand.vmem [shape: f32[128,32], index: 11, kind: input, shape index: {}]
  %s12 = inlined_call_operand.vmem [shape: f32[32,128], index: 12, kind: input, shape index: {}]
  %s13 = inlined_call_operand.vmem [shape: bf16[128,128], index: 13, kind: input, shape index: {}]
  %s14 = inlined_call_operand.vmem [shape: f32[1,128], index: 14, kind: input, shape index: {}]
  %s15 = inlined_call_operand.vmem [shape: bf16[128,10], index: 15, kind: input, shape index: {}]
  %s16 = inlined_call_operand.vmem [shape: f32[1,10], index: 16, kind: input, shape index: {}]
  %s17 = inlined_call_operand.hbm [shape: f32[2,10], index: 17, kind: output, shape index: {}]
  %s18 = sld [smem:[#allocation0]]
  $region82: #{cnn_forward.1} parent=0
    _
  %s20 = ssub.s32 1, %s18
  %s21 = scalar_select 0, %s20, %s18
  $region1: #{cnn_forward.1} parent=0
    #allocation2 [shape = 'u8[1048576]{0}', space=vmem, size = 0x100000, scoped, tag = 'input window, operand 1, single buffered']
    #allocation3 [shape = 's32[1]{0}', space=sflag, size = 0x4, scoped, tag = 'scoped memory for cnn_forward.1']
    #allocation4 [shape = 's32[1]{0}', space=sflag, size = 0x4, scoped, tag = 'scoped memory for cnn_forward.1']
    #allocation5 [shape = 'u8[1024]{0}', space=vmem, size = 0x400, scoped, tag = 'output window, operand 0, single buffered']
    %22 = vsyncpa [#allocation3], 0
    %23 = vsyncpa [#allocation4], 0
    // Predicated region
    $region2: #{cnn_forward.1} parent=1 // pred_check
      _
    $region3: #{cnn_forward.1} parent=1 // pred_check_branch
      %25 = sbr.rel (0) target = $region5
    $region4: #{cnn_forward.1} parent=1 // pred_region
      _
    $region5: #{cnn_forward.1} parent=1 // pred_fallthru
      _
    // Predicated region
    $region6: #{cnn_forward.1} parent=1 // pred_check
      _
    $region7: #{cnn_forward.1} parent=1 // pred_check_branch
      %27 = sbr.rel (0) target = $region9
    $region8: #{cnn_forward.1} parent=1 // pred_region
      %29 = vsyncadd [#allocation3], 0
      %s30 = sshll.u32 %s1, 4
      %s31 = int_to_ptr.hbm [resolvable:$true] %s30
      %s32 = sshll.u32 [#allocation2], 4
      %s33 = int_to_ptr.vmem [resolvable:$true] %s32
      %38 = dma.hbm_to_vmem [thread:$0]  %s31, 32768, %s33, [#allocation3], 256, 256, 16
    $region9: #{cnn_forward.1} parent=1 // pred_fallthru
      _
    // Predicated region
    $region10: #{cnn_forward.1} parent=1 // pred_check
      _
    $region11: #{cnn_forward.1} parent=1 // pred_check_branch
      %40 = sbr.rel (0) target = $region13
    $region12: #{cnn_forward.1} parent=1 // pred_region
      _
    $region13: #{cnn_forward.1} parent=1 // pred_fallthru
      _
    // Predicated region
    $region14: #{cnn_forward.1} parent=1 // pred_check
      _
    $region15: #{cnn_forward.1} parent=1 // pred_check_branch
      %42 = sbr.rel (0) target = $region17
    $region16: #{cnn_forward.1} parent=1 // pred_region
      _
    $region17: #{cnn_forward.1} parent=1 // pred_fallthru
      _
    // Predicated region
    $region18: #{cnn_forward.1} parent=1 // pred_check
      _
    $region19: #{cnn_forward.1} parent=1 // pred_check_branch
      %44 = sbr.rel (0) target = $region21
    $region20: #{cnn_forward.1} parent=1 // pred_region
      _
    $region21: #{cnn_forward.1} parent=1 // pred_fallthru
      _
    // Predicated region
    $region22: #{cnn_forward.1} parent=1 // pred_check
      _
    $region23: #{cnn_forward.1} parent=1 // pred_check_branch
      %46 = sbr.rel (0) target = $region25
    $region24: #{cnn_forward.1} parent=1 // pred_region
      _
    $region25: #{cnn_forward.1} parent=1 // pred_fallthru
      _
    // Predicated region
    $region26: #{cnn_forward.1} parent=1 // pred_check
      _
    $region27: #{cnn_forward.1} parent=1 // pred_check_branch
      %48 = sbr.rel (0) target = $region29
    $region28: #{cnn_forward.1} parent=1 // pred_region
      _
    $region29: #{cnn_forward.1} parent=1 // pred_fallthru
      _
    // Predicated region
    $region30: #{cnn_forward.1} parent=1 // pred_check
      _
    $region31: #{cnn_forward.1} parent=1 // pred_check_branch
      %50 = sbr.rel (0) target = $region33
    $region32: #{cnn_forward.1} parent=1 // pred_region
      _
    $region33: #{cnn_forward.1} parent=1 // pred_fallthru
      _
    // Predicated region
    $region34: #{cnn_forward.1} parent=1 // pred_check
      _
    $region35: #{cnn_forward.1} parent=1 // pred_check_branch
      %52 = sbr.rel (0) target = $region37
    $region36: #{cnn_forward.1} parent=1 // pred_region
      _
    $region37: #{cnn_forward.1} parent=1 // pred_fallthru
      _
    // Predicated region
    $region38: #{cnn_forward.1} parent=1 // pred_check
      _
    $region39: #{cnn_forward.1} parent=1 // pred_check_branch
      %54 = sbr.rel (0) target = $region41
    $region40: #{cnn_forward.1} parent=1 // pred_region
      _
    $region41: #{cnn_forward.1} parent=1 // pred_fallthru
      _
    // Predicated region
    $region42: #{cnn_forward.1} parent=1 // pred_check
      _
    $region43: #{cnn_forward.1} parent=1 // pred_check_branch
      %56 = sbr.rel (0) target = $region45
    $region44: #{cnn_forward.1} parent=1 // pred_region
      _
    $region45: #{cnn_forward.1} parent=1 // pred_fallthru
      _
    // Predicated region
    $region46: #{cnn_forward.1} parent=1 // pred_check
      _
    $region47: #{cnn_forward.1} parent=1 // pred_check_branch
      %58 = sbr.rel (0) target = $region49
    $region48: #{cnn_forward.1} parent=1 // pred_region
      _
    $region49: #{cnn_forward.1} parent=1 // pred_fallthru
      _
    // Predicated region
    $region50: #{cnn_forward.1} parent=1 // pred_check
      _
    $region51: #{cnn_forward.1} parent=1 // pred_check_branch
      %60 = sbr.rel (0) target = $region53
    $region52: #{cnn_forward.1} parent=1 // pred_region
      _
    $region53: #{cnn_forward.1} parent=1 // pred_fallthru
      _
    // Predicated region
    $region54: #{cnn_forward.1} parent=1 // pred_check
      _
    $region55: #{cnn_forward.1} parent=1 // pred_check_branch
      %62 = sbr.rel (0) target = $region57
    $region56: #{cnn_forward.1} parent=1 // pred_region
      _
    $region57: #{cnn_forward.1} parent=1 // pred_fallthru
      _
    // Predicated region
    $region58: #{cnn_forward.1} parent=1 // pred_check
      _
    $region59: #{cnn_forward.1} parent=1 // pred_check_branch
      %64 = sbr.rel (0) target = $region61
    $region60: #{cnn_forward.1} parent=1 // pred_region
      _
    $region61: #{cnn_forward.1} parent=1 // pred_fallthru
      _
    // Predicated region
    $region62: #{cnn_forward.1} parent=1 // pred_check
      _
    $region63: #{cnn_forward.1} parent=1 // pred_check_branch
      %66 = sbr.rel (0) target = $region65
    $region64: #{cnn_forward.1} parent=1 // pred_region
      _
    $region65: #{cnn_forward.1} parent=1 // pred_fallthru
      _
    // Predicated region
    $region66: #{cnn_forward.1} parent=1 // pred_check
      _
    $region67: #{cnn_forward.1} parent=1 // pred_check_branch
      %68 = sbr.rel (0) target = $region69
    $region68: #{cnn_forward.1} parent=1 // pred_region
      _
    $region69: #{cnn_forward.1} parent=1 // pred_fallthru
      _
    // Predicated region
    $region70: #{cnn_forward.1} parent=1 // pred_check
      _
    $region71: #{cnn_forward.1} parent=1 // pred_check_branch
      %70 = sbr.rel (0) target = $region73
    $region72: #{cnn_forward.1} parent=1 // pred_region
      %72 = dma.done [#allocation3], 32768
    $region73: #{cnn_forward.1} parent=1 // pred_fallthru
      _
    %v73 = vld [vmem:[%s0] sm:$0xff]
    %v74 = vld [vmem:[%s0 + $0x8] sm:$0xff]
    %77 = vst [vmem:[#allocation1] ss:$4 sm:$0xff] %v73
    %s78 = scalar_lea.vmem [#allocation1], 32
    %79 = vst [vmem:[%s78] ss:$4 sm:$0xff] %v74
    %v80 = vld.sshfl [vmem:[#allocation1] sm:$0xff pattern:$0x73625140]
    %v81 = vld.sshfl [vmem:[#allocation1 + $0x8] sm:$0xff pattern:$0x73625140]
    %v82 = vld.sshfl [vmem:[#allocation1 + $0x10] sm:$0xff pattern:$0x73625140]
    %v83 = vld.sshfl [vmem:[#allocation1 + $0x18] sm:$0xff pattern:$0x73625140]
    %v84 = vld.sshfl [vmem:[#allocation1 + $0x20] sm:$0xff pattern:$0x73625140]
    %v85 = vld.sshfl [vmem:[#allocation1 + $0x28] sm:$0xff pattern:$0x73625140]
    %v86 = vld.sshfl [vmem:[#allocation1 + $0x30] sm:$0xff pattern:$0x73625140]
    %v87 = vld.sshfl [vmem:[#allocation1 + $0x38] sm:$0xff pattern:$0x73625140]
    %v96 = vpack.c.bf16 %v80, %v80
    %v97 = vpack.c.bf16 %v81, %v81
    %v98 = vpack.c.bf16 %v82, %v82
    %v99 = vpack.c.bf16 %v83, %v83
    %v100 = vpack.c.bf16 %v84, %v84
    %v101 = vpack.c.bf16 %v85, %v85
    %v102 = vpack.c.bf16 %v86, %v86
    %v103 = vpack.c.bf16 %v87, %v87
    %v104 = vld [vmem:[#allocation2] sm:$0xff]
    %v105 = vld [vmem:[#allocation2 + $0x8] sm:$0xff]
    %v106 = vld [vmem:[#allocation2 + $0x10] sm:$0xff]
    %v107 = vld [vmem:[#allocation2 + $0x18] sm:$0xff]
    %v108 = vld [vmem:[#allocation2 + $0x20] sm:$0xff]
    %v109 = vld [vmem:[#allocation2 + $0x28] sm:$0xff]
    %v110 = vld [vmem:[#allocation2 + $0x30] sm:$0xff]
    %v111 = vld [vmem:[#allocation2 + $0x38] sm:$0xff]
    %v112 = vld [vmem:[#allocation2 + $0x40] sm:$0xff]
    %v113 = vld [vmem:[#allocation2 + $0x48] sm:$0xff]
    %v114 = vld [vmem:[#allocation2 + $0x50] sm:$0xff]
    %v115 = vld [vmem:[#allocation2 + $0x58] sm:$0xff]
    %v116 = vld [vmem:[#allocation2 + $0x60] sm:$0xff]
    %v117 = vld [vmem:[#allocation2 + $0x68] sm:$0xff]
    %v118 = vld [vmem:[#allocation2 + $0x70] sm:$0xff]
    %v119 = vld [vmem:[#allocation2 + $0x78] sm:$0xff]
    %v120 = vld [vmem:[#allocation2 + $0x80] sm:$0xff]
    %v121 = vld [vmem:[#allocation2 + $0x88] sm:$0xff]
    %v122 = vld [vmem:[#allocation2 + $0x90] sm:$0xff]
    %v123 = vld [vmem:[#allocation2 + $0x98] sm:$0xff]
    %v124 = vld [vmem:[#allocation2 + $0xa0] sm:$0xff]
    %v125 = vld [vmem:[#allocation2 + $0xa8] sm:$0xff]
    %v126 = vld [vmem:[#allocation2 + $0xb0] sm:$0xff]
    %v127 = vld [vmem:[#allocation2 + $0xb8] sm:$0xff]
    %v128 = vld [vmem:[#allocation2 + $0xc0] sm:$0xff]
    %v129 = vld [vmem:[#allocation2 + $0xc8] sm:$0xff]
    %v130 = vld [vmem:[#allocation2 + $0xd0] sm:$0xff]
    %v131 = vld [vmem:[#allocation2 + $0xd8] sm:$0xff]
    %v132 = vld [vmem:[#allocation2 + $0xe0] sm:$0xff]
    %v133 = vld [vmem:[#allocation2 + $0xe8] sm:$0xff]
    %v134 = vld [vmem:[#allocation2 + $0xf0] sm:$0xff]
    %v135 = vld [vmem:[#allocation2 + $0xf8] sm:$0xff]
    %v136 = vld [vmem:[#allocation2 + $0x100] sm:$0xff]
    %v137 = vld [vmem:[#allocation2 + $0x108] sm:$0xff]
    %v138 = vld [vmem:[#allocation2 + $0x110] sm:$0xff]
    %v139 = vld [vmem:[#allocation2 + $0x118] sm:$0xff]
    %v140 = vld [vmem:[#allocation2 + $0x120] sm:$0xff]
    %v141 = vld [vmem:[#allocation2 + $0x128] sm:$0xff]
    %v142 = vld [vmem:[#allocation2 + $0x130] sm:$0xff]
    %v143 = vld [vmem:[#allocation2 + $0x138] sm:$0xff]
    %v144 = vld [vmem:[#allocation2 + $0x140] sm:$0xff]
    %v145 = vld [vmem:[#allocation2 + $0x148] sm:$0xff]
    %v146 = vld [vmem:[#allocation2 + $0x150] sm:$0xff]
    %v147 = vld [vmem:[#allocation2 + $0x158] sm:$0xff]
    %v148 = vld [vmem:[#allocation2 + $0x160] sm:$0xff]
    %v149 = vld [vmem:[#allocation2 + $0x168] sm:$0xff]
    %v150 = vld [vmem:[#allocation2 + $0x170] sm:$0xff]
    %v151 = vld [vmem:[#allocation2 + $0x178] sm:$0xff]
    %v152 = vld [vmem:[#allocation2 + $0x180] sm:$0xff]
    %v153 = vld [vmem:[#allocation2 + $0x188] sm:$0xff]
    %v154 = vld [vmem:[#allocation2 + $0x190] sm:$0xff]
    %v155 = vld [vmem:[#allocation2 + $0x198] sm:$0xff]
    %v156 = vld [vmem:[#allocation2 + $0x1a0] sm:$0xff]
    %v157 = vld [vmem:[#allocation2 + $0x1a8] sm:$0xff]
    %v158 = vld [vmem:[#allocation2 + $0x1b0] sm:$0xff]
    %v159 = vld [vmem:[#allocation2 + $0x1b8] sm:$0xff]
    %v160 = vld [vmem:[#allocation2 + $0x1c0] sm:$0xff]
    %v161 = vld [vmem:[#allocation2 + $0x1c8] sm:$0xff]
    %v162 = vld [vmem:[#allocation2 + $0x1d0] sm:$0xff]
    %v163 = vld [vmem:[#allocation2 + $0x1d8] sm:$0xff]
    %v164 = vld [vmem:[#allocation2 + $0x1e0] sm:$0xff]
    %v165 = vld [vmem:[#allocation2 + $0x1e8] sm:$0xff]
    %v166 = vld [vmem:[#allocation2 + $0x1f0] sm:$0xff]
    %v167 = vld [vmem:[#allocation2 + $0x1f8] sm:$0xff]
    %v168 = vld [vmem:[#allocation2 + $0x200] sm:$0xff]
    %v169 = vld [vmem:[#allocation2 + $0x208] sm:$0xff]
    %v170 = vld [vmem:[#allocation2 + $0x210] sm:$0xff]
    %v171 = vld [vmem:[#allocation2 + $0x218] sm:$0xff]
    %v172 = vld [vmem:[#allocation2 + $0x220] sm:$0xff]
    %v173 = vld [vmem:[#allocation2 + $0x228] sm:$0xff]
    %v174 = vld [vmem:[#allocation2 + $0x230] sm:$0xff]
    %v175 = vld [vmem:[#allocation2 + $0x238] sm:$0xff]
    %v176 = vld [vmem:[#allocation2 + $0x240] sm:$0xff]
    %v177 = vld [vmem:[#allocation2 + $0x248] sm:$0xff]
    %v178 = vld [vmem:[#allocation2 + $0x250] sm:$0xff]
    %v179 = vld [vmem:[#allocation2 + $0x258] sm:$0xff]
    %v180 = vld [vmem:[#allocation2 + $0x260] sm:$0xff]
    %v181 = vld [vmem:[#allocation2 + $0x268] sm:$0xff]
    %v182 = vld [vmem:[#allocation2 + $0x270] sm:$0xff]
    %v183 = vld [vmem:[#allocation2 + $0x278] sm:$0xff]
    %v184 = vld [vmem:[#allocation2 + $0x280] sm:$0xff]
    %v185 = vld [vmem:[#allocation2 + $0x288] sm:$0xff]
    %v186 = vld [vmem:[#allocation2 + $0x290] sm:$0xff]
    %v187 = vld [vmem:[#allocation2 + $0x298] sm:$0xff]
    %v188 = vld [vmem:[#allocation2 + $0x2a0] sm:$0xff]
    %v189 = vld [vmem:[#allocation2 + $0x2a8] sm:$0xff]
    %v190 = vld [vmem:[#allocation2 + $0x2b0] sm:$0xff]
    %v191 = vld [vmem:[#allocation2 + $0x2b8] sm:$0xff]
    %v192 = vld [vmem:[#allocation2 + $0x2c0] sm:$0xff]
    %v193 = vld [vmem:[#allocation2 + $0x2c8] sm:$0xff]
    %v194 = vld [vmem:[#allocation2 + $0x2d0] sm:$0xff]
    %v195 = vld [vmem:[#allocation2 + $0x2d8] sm:$0xff]
    %v196 = vld [vmem:[#allocation2 + $0x2e0] sm:$0xff]
    %v197 = vld [vmem:[#allocation2 + $0x2e8] sm:$0xff]
    %v198 = vld [vmem:[#allocation2 + $0x2f0] sm:$0xff]
    %v199 = vld [vmem:[#allocation2 + $0x2f8] sm:$0xff]
    %v200 = vld [vmem:[#allocation2 + $0x300] sm:$0xff]
    %v201 = vld [vmem:[#allocation2 + $0x308] sm:$0xff]
    %v202 = vld [vmem:[#allocation2 + $0x310] sm:$0xff]
    %v203 = vld [vmem:[#allocation2 + $0x318] sm:$0xff]
    %v204 = vld [vmem:[#allocation2 + $0x320] sm:$0xff]
    %v205 = vld [vmem:[#allocation2 + $0x328] sm:$0xff]
    %v206 = vld [vmem:[#allocation2 + $0x330] sm:$0xff]
    %v207 = vld [vmem:[#allocation2 + $0x338] sm:$0xff]
    %v208 = vld [vmem:[#allocation2 + $0x340] sm:$0xff]
    %v209 = vld [vmem:[#allocation2 + $0x348] sm:$0xff]
    %v210 = vld [vmem:[#allocation2 + $0x350] sm:$0xff]
    %v211 = vld [vmem:[#allocation2 + $0x358] sm:$0xff]
    %v212 = vld [vmem:[#allocation2 + $0x360] sm:$0xff]
    %v213 = vld [vmem:[#allocation2 + $0x368] sm:$0xff]
    %v214 = vld [vmem:[#allocation2 + $0x370] sm:$0xff]
    %v215 = vld [vmem:[#allocation2 + $0x378] sm:$0xff]
    %v216 = vld [vmem:[#allocation2 + $0x380] sm:$0xff]
    %v217 = vld [vmem:[#allocation2 + $0x388] sm:$0xff]
    %v218 = vld [vmem:[#allocation2 + $0x390] sm:$0xff]
    %v219 = vld [vmem:[#allocation2 + $0x398] sm:$0xff]
    %v220 = vld [vmem:[#allocation2 + $0x3a0] sm:$0xff]
    %v221 = vld [vmem:[#allocation2 + $0x3a8] sm:$0xff]
    %v222 = vld [vmem:[#allocation2 + $0x3b0] sm:$0xff]
    %v223 = vld [vmem:[#allocation2 + $0x3b8] sm:$0xff]
    %v224 = vld [vmem:[#allocation2 + $0x3c0] sm:$0xff]
    %v225 = vld [vmem:[#allocation2 + $0x3c8] sm:$0xff]
    %v226 = vld [vmem:[#allocation2 + $0x3d0] sm:$0xff]
    %v227 = vld [vmem:[#allocation2 + $0x3d8] sm:$0xff]
    %v228 = vld [vmem:[#allocation2 + $0x3e0] sm:$0xff]
    %v229 = vld [vmem:[#allocation2 + $0x3e8] sm:$0xff]
    %v230 = vld [vmem:[#allocation2 + $0x3f0] sm:$0xff]
    %v231 = vld [vmem:[#allocation2 + $0x3f8] sm:$0xff]
    %v232 = vld [vmem:[#allocation2 + $0x400] sm:$0xff]
    %v233 = vld [vmem:[#allocation2 + $0x408] sm:$0xff]
    %v234 = vld [vmem:[#allocation2 + $0x410] sm:$0xff]
    %v235 = vld [vmem:[#allocation2 + $0x418] sm:$0xff]
    %v236 = vld [vmem:[#allocation2 + $0x420] sm:$0xff]
    %v237 = vld [vmem:[#allocation2 + $0x428] sm:$0xff]
    %v238 = vld [vmem:[#allocation2 + $0x430] sm:$0xff]
    %v239 = vld [vmem:[#allocation2 + $0x438] sm:$0xff]
    %v240 = vld [vmem:[#allocation2 + $0x440] sm:$0xff]
    %v241 = vld [vmem:[#allocation2 + $0x448] sm:$0xff]
    %v242 = vld [vmem:[#allocation2 + $0x450] sm:$0xff]
    %v243 = vld [vmem:[#allocation2 + $0x458] sm:$0xff]
    %v244 = vld [vmem:[#allocation2 + $0x460] sm:$0xff]
    %v245 = vld [vmem:[#allocation2 + $0x468] sm:$0xff]
    %v246 = vld [vmem:[#allocation2 + $0x470] sm:$0xff]
    %v247 = vld [vmem:[#allocation2 + $0x478] sm:$0xff]
    %v248 = vld [vmem:[#allocation2 + $0x480] sm:$0xff]
    %v249 = vld [vmem:[#allocation2 + $0x488] sm:$0xff]
    %v250 = vld [vmem:[#allocation2 + $0x490] sm:$0xff]
    %v251 = vld [vmem:[#allocation2 + $0x498] sm:$0xff]
    %v252 = vld [vmem:[#allocation2 + $0x4a0] sm:$0xff]
    %v253 = vld [vmem:[#allocation2 + $0x4a8] sm:$0xff]
    %v254 = vld [vmem:[#allocation2 + $0x4b0] sm:$0xff]
    %v255 = vld [vmem:[#allocation2 + $0x4b8] sm:$0xff]
    %v256 = vld [vmem:[#allocation2 + $0x4c0] sm:$0xff]
    %v257 = vld [vmem:[#allocation2 + $0x4c8] sm:$0xff]
    %v258 = vld [vmem:[#allocation2 + $0x4d0] sm:$0xff]
    %v259 = vld [vmem:[#allocation2 + $0x4d8] sm:$0xff]
    %v260 = vld [vmem:[#allocation2 + $0x4e0] sm:$0xff]
    %v261 = vld [vmem:[#allocation2 + $0x4e8] sm:$0xff]
    %v262 = vld [vmem:[#allocation2 + $0x4f0] sm:$0xff]
    %v263 = vld [vmem:[#allocation2 + $0x4f8] sm:$0xff]
    %v264 = vld [vmem:[#allocation2 + $0x500] sm:$0xff]
    %v265 = vld [vmem:[#allocation2 + $0x508] sm:$0xff]
    %v266 = vld [vmem:[#allocation2 + $0x510] sm:$0xff]
    %v267 = vld [vmem:[#allocation2 + $0x518] sm:$0xff]
    %v268 = vld [vmem:[#allocation2 + $0x520] sm:$0xff]
    %v269 = vld [vmem:[#allocation2 + $0x528] sm:$0xff]
    %v270 = vld [vmem:[#allocation2 + $0x530] sm:$0xff]
    %v271 = vld [vmem:[#allocation2 + $0x538] sm:$0xff]
    %v272 = vld [vmem:[#allocation2 + $0x540] sm:$0xff]
    %v273 = vld [vmem:[#allocation2 + $0x548] sm:$0xff]
    %v274 = vld [vmem:[#allocation2 + $0x550] sm:$0xff]
    %v275 = vld [vmem:[#allocation2 + $0x558] sm:$0xff]
    %v276 = vld [vmem:[#allocation2 + $0x560] sm:$0xff]
    %v277 = vld [vmem:[#allocation2 + $0x568] sm:$0xff]
    %v278 = vld [vmem:[#allocation2 + $0x570] sm:$0xff]
    %v279 = vld [vmem:[#allocation2 + $0x578] sm:$0xff]
    %v280 = vld [vmem:[#allocation2 + $0x580] sm:$0xff]
    %v281 = vld [vmem:[#allocation2 + $0x588] sm:$0xff]
    %v282 = vld [vmem:[#allocation2 + $0x590] sm:$0xff]
    %v283 = vld [vmem:[#allocation2 + $0x598] sm:$0xff]
    %v284 = vld [vmem:[#allocation2 + $0x5a0] sm:$0xff]
    %v285 = vld [vmem:[#allocation2 + $0x5a8] sm:$0xff]
    %v286 = vld [vmem:[#allocation2 + $0x5b0] sm:$0xff]
    %v287 = vld [vmem:[#allocation2 + $0x5b8] sm:$0xff]
    %v288 = vld [vmem:[#allocation2 + $0x5c0] sm:$0xff]
    %v289 = vld [vmem:[#allocation2 + $0x5c8] sm:$0xff]
    %v290 = vld [vmem:[#allocation2 + $0x5d0] sm:$0xff]
    %v291 = vld [vmem:[#allocation2 + $0x5d8] sm:$0xff]
    %v292 = vld [vmem:[#allocation2 + $0x5e0] sm:$0xff]
    %v293 = vld [vmem:[#allocation2 + $0x5e8] sm:$0xff]
    %v294 = vld [vmem:[#allocation2 + $0x5f0] sm:$0xff]
    %v295 = vld [vmem:[#allocation2 + $0x5f8] sm:$0xff]
    %v296 = vld [vmem:[#allocation2 + $0x600] sm:$0xff]
    %v297 = vld [vmem:[#allocation2 + $0x608] sm:$0xff]
    %v298 = vld [vmem:[#allocation2 + $0x610] sm:$0xff]
    %v299 = vld [vmem:[#allocation2 + $0x618] sm:$0xff]
    %v300 = vld [vmem:[#allocation2 + $0x620] sm:$0xff]
    %v301 = vld [vmem:[#allocation2 + $0x628] sm:$0xff]
    %v302 = vld [vmem:[#allocation2 + $0x630] sm:$0xff]
    %v303 = vld [vmem:[#allocation2 + $0x638] sm:$0xff]
    %v304 = vld [vmem:[#allocation2 + $0x640] sm:$0xff]
    %v305 = vld [vmem:[#allocation2 + $0x648] sm:$0xff]
    %v306 = vld [vmem:[#allocation2 + $0x650] sm:$0xff]
    %v307 = vld [vmem:[#allocation2 + $0x658] sm:$0xff]
    %v308 = vld [vmem:[#allocation2 + $0x660] sm:$0xff]
    %v309 = vld [vmem:[#allocation2 + $0x668] sm:$0xff]
    %v310 = vld [vmem:[#allocation2 + $0x670] sm:$0xff]
    %v311 = vld [vmem:[#allocation2 + $0x678] sm:$0xff]
    %v312 = vld [vmem:[#allocation2 + $0x680] sm:$0xff]
    %v313 = vld [vmem:[#allocation2 + $0x688] sm:$0xff]
    %v314 = vld [vmem:[#allocation2 + $0x690] sm:$0xff]
    %v315 = vld [vmem:[#allocation2 + $0x698] sm:$0xff]
    %v316 = vld [vmem:[#allocation2 + $0x6a0] sm:$0xff]
    %v317 = vld [vmem:[#allocation2 + $0x6a8] sm:$0xff]
    %v318 = vld [vmem:[#allocation2 + $0x6b0] sm:$0xff]
    %v319 = vld [vmem:[#allocation2 + $0x6b8] sm:$0xff]
    %v320 = vld [vmem:[#allocation2 + $0x6c0] sm:$0xff]
    %v321 = vld [vmem:[#allocation2 + $0x6c8] sm:$0xff]
    %v322 = vld [vmem:[#allocation2 + $0x6d0] sm:$0xff]
    %v323 = vld [vmem:[#allocation2 + $0x6d8] sm:$0xff]
    %v324 = vld [vmem:[#allocation2 + $0x6e0] sm:$0xff]
    %v325 = vld [vmem:[#allocation2 + $0x6e8] sm:$0xff]
    %v326 = vld [vmem:[#allocation2 + $0x6f0] sm:$0xff]
    %v327 = vld [vmem:[#allocation2 + $0x6f8] sm:$0xff]
    %v328 = vld [vmem:[#allocation2 + $0x700] sm:$0xff]
    %v329 = vld [vmem:[#allocation2 + $0x708] sm:$0xff]
    %v330 = vld [vmem:[#allocation2 + $0x710] sm:$0xff]
    %v331 = vld [vmem:[#allocation2 + $0x718] sm:$0xff]
    %v332 = vld [vmem:[#allocation2 + $0x720] sm:$0xff]
    %v333 = vld [vmem:[#allocation2 + $0x728] sm:$0xff]
    %v334 = vld [vmem:[#allocation2 + $0x730] sm:$0xff]
    %v335 = vld [vmem:[#allocation2 + $0x738] sm:$0xff]
    %v336 = vld [vmem:[#allocation2 + $0x740] sm:$0xff]
    %v337 = vld [vmem:[#allocation2 + $0x748] sm:$0xff]
    %v338 = vld [vmem:[#allocation2 + $0x750] sm:$0xff]
    %v339 = vld [vmem:[#allocation2 + $0x758] sm:$0xff]
    %v340 = vld [vmem:[#allocation2 + $0x760] sm:$0xff]
    %v341 = vld [vmem:[#allocation2 + $0x768] sm:$0xff]
    %v342 = vld [vmem:[#allocation2 + $0x770] sm:$0xff]
    %v343 = vld [vmem:[#allocation2 + $0x778] sm:$0xff]
    %v344 = vld [vmem:[#allocation2 + $0x780] sm:$0xff]
    %v345 = vld [vmem:[#allocation2 + $0x788] sm:$0xff]
    %v346 = vld [vmem:[#allocation2 + $0x790] sm:$0xff]
    %v347 = vld [vmem:[#allocation2 + $0x798] sm:$0xff]
    %v348 = vld [vmem:[#allocation2 + $0x7a0] sm:$0xff]
    %v349 = vld [vmem:[#allocation2 + $0x7a8] sm:$0xff]
    %v350 = vld [vmem:[#allocation2 + $0x7b0] sm:$0xff]
    %v351 = vld [vmem:[#allocation2 + $0x7b8] sm:$0xff]
    %v352 = vld [vmem:[#allocation2 + $0x7c0] sm:$0xff]
    %v353 = vld [vmem:[#allocation2 + $0x7c8] sm:$0xff]
    %v354 = vld [vmem:[#allocation2 + $0x7d0] sm:$0xff]
    %v355 = vld [vmem:[#allocation2 + $0x7d8] sm:$0xff]
    %v356 = vld [vmem:[#allocation2 + $0x7e0] sm:$0xff]
    %v357 = vld [vmem:[#allocation2 + $0x7e8] sm:$0xff]
    %v358 = vld [vmem:[#allocation2 + $0x7f0] sm:$0xff]
    %v359 = vld [vmem:[#allocation2 + $0x7f8] sm:$0xff]
    %v360 = vld [vmem:[%s2] sm:$0xf]
    %v362 = vperm.slane %v360, 0
    %v363 = vperm.slane %v360, 1
    %v364 = vperm.slane %v360, 2
    %v365 = vperm.slane %v360, 3
    %v626 = vunpack.c.l.b16 %v104
    %v627 = vunpack.c.h.b16 %v104
    %v628 = vunpack.c.l.b16 %v105
    %v629 = vunpack.c.h.b16 %v105
    %v630 = vunpack.c.l.b16 %v106
    %v631 = vunpack.c.h.b16 %v106
    %v632 = vunpack.c.l.b16 %v107
    %v633 = vunpack.c.h.b16 %v107
    %v634 = vunpack.c.l.b16 %v108
    %v635 = vunpack.c.h.b16 %v108
    %v636 = vunpack.c.l.b16 %v109
    %v637 = vunpack.c.h.b16 %v109
    %v638 = vunpack.c.l.b16 %v110
    %v639 = vunpack.c.h.b16 %v110
    %v640 = vunpack.c.l.b16 %v111
    %v641 = vunpack.c.h.b16 %v111
    %v642 = vunpack.c.l.b16 %v112
    %v643 = vunpack.c.h.b16 %v112
    %v644 = vunpack.c.l.b16 %v113
    %v645 = vunpack.c.h.b16 %v113
    %v646 = vunpack.c.l.b16 %v114
    %v647 = vunpack.c.h.b16 %v114
    %v648 = vunpack.c.l.b16 %v115
    %v649 = vunpack.c.h.b16 %v115
    %v650 = vunpack.c.l.b16 %v116
    %v651 = vunpack.c.h.b16 %v116
    %v652 = vunpack.c.l.b16 %v117
    %v653 = vunpack.c.h.b16 %v117
    %v654 = vunpack.c.l.b16 %v118
    %v655 = vunpack.c.h.b16 %v118
    %v656 = vunpack.c.l.b16 %v119
    %v657 = vunpack.c.h.b16 %v119
    %v658 = vunpack.c.l.b16 %v120
    %v659 = vunpack.c.h.b16 %v120
    %v660 = vunpack.c.l.b16 %v121
    %v661 = vunpack.c.h.b16 %v121
    %v662 = vunpack.c.l.b16 %v122
    %v663 = vunpack.c.h.b16 %v122
    %v664 = vunpack.c.l.b16 %v123
    %v665 = vunpack.c.h.b16 %v123
    %v666 = vunpack.c.l.b16 %v124
    %v667 = vunpack.c.h.b16 %v124
    %v668 = vunpack.c.l.b16 %v125
    %v669 = vunpack.c.h.b16 %v125
    %v670 = vunpack.c.l.b16 %v126
    %v671 = vunpack.c.h.b16 %v126
    %v672 = vunpack.c.l.b16 %v127
    %v673 = vunpack.c.h.b16 %v127
    %v674 = vunpack.c.l.b16 %v128
    %v675 = vunpack.c.h.b16 %v128
    %v676 = vunpack.c.l.b16 %v129
    %v677 = vunpack.c.h.b16 %v129
    %v678 = vunpack.c.l.b16 %v130
    %v679 = vunpack.c.h.b16 %v130
    %v680 = vunpack.c.l.b16 %v131
    %v681 = vunpack.c.h.b16 %v131
    %v682 = vunpack.c.l.b16 %v132
    %v683 = vunpack.c.h.b16 %v132
    %v684 = vunpack.c.l.b16 %v133
    %v685 = vunpack.c.h.b16 %v133
    %v686 = vunpack.c.l.b16 %v134
    %v687 = vunpack.c.h.b16 %v134
    %v688 = vunpack.c.l.b16 %v135
    %v689 = vunpack.c.h.b16 %v135
    %v690 = vunpack.c.l.b16 %v136
    %v691 = vunpack.c.h.b16 %v136
    %v692 = vunpack.c.l.b16 %v137
    %v693 = vunpack.c.h.b16 %v137
    %v694 = vunpack.c.l.b16 %v138
    %v695 = vunpack.c.h.b16 %v138
    %v696 = vunpack.c.l.b16 %v139
    %v697 = vunpack.c.h.b16 %v139
    %v698 = vunpack.c.l.b16 %v140
    %v699 = vunpack.c.h.b16 %v140
    %v700 = vunpack.c.l.b16 %v141
    %v701 = vunpack.c.h.b16 %v141
    %v702 = vunpack.c.l.b16 %v142
    %v703 = vunpack.c.h.b16 %v142
    %v704 = vunpack.c.l.b16 %v143
    %v705 = vunpack.c.h.b16 %v143
    %v706 = vunpack.c.l.b16 %v144
    %v707 = vunpack.c.h.b16 %v144
    %v708 = vunpack.c.l.b16 %v145
    %v709 = vunpack.c.h.b16 %v145
    %v710 = vunpack.c.l.b16 %v146
    %v711 = vunpack.c.h.b16 %v146
    %v712 = vunpack.c.l.b16 %v147
    %v713 = vunpack.c.h.b16 %v147
    %v714 = vunpack.c.l.b16 %v148
    %v715 = vunpack.c.h.b16 %v148
    %v716 = vunpack.c.l.b16 %v149
    %v717 = vunpack.c.h.b16 %v149
    %v718 = vunpack.c.l.b16 %v150
    %v719 = vunpack.c.h.b16 %v150
    %v720 = vunpack.c.l.b16 %v151
    %v721 = vunpack.c.h.b16 %v151
    %v722 = vunpack.c.l.b16 %v152
    %v723 = vunpack.c.h.b16 %v152
    %v724 = vunpack.c.l.b16 %v153
    %v725 = vunpack.c.h.b16 %v153
    %v726 = vunpack.c.l.b16 %v154
    %v727 = vunpack.c.h.b16 %v154
    %v728 = vunpack.c.l.b16 %v155
    %v729 = vunpack.c.h.b16 %v155
    %v730 = vunpack.c.l.b16 %v156
    %v731 = vunpack.c.h.b16 %v156
    %v732 = vunpack.c.l.b16 %v157
    %v733 = vunpack.c.h.b16 %v157
    %v734 = vunpack.c.l.b16 %v158
    %v735 = vunpack.c.h.b16 %v158
    %v736 = vunpack.c.l.b16 %v159
    %v737 = vunpack.c.h.b16 %v159
    %v738 = vunpack.c.l.b16 %v160
    %v739 = vunpack.c.h.b16 %v160
    %v740 = vunpack.c.l.b16 %v161
    %v741 = vunpack.c.h.b16 %v161
    %v742 = vunpack.c.l.b16 %v162
    %v743 = vunpack.c.h.b16 %v162
    %v744 = vunpack.c.l.b16 %v163
    %v745 = vunpack.c.h.b16 %v163
    %v746 = vunpack.c.l.b16 %v164
    %v747 = vunpack.c.h.b16 %v164
    %v748 = vunpack.c.l.b16 %v165
    %v749 = vunpack.c.h.b16 %v165
    %v750 = vunpack.c.l.b16 %v166
    %v751 = vunpack.c.h.b16 %v166
    %v752 = vunpack.c.l.b16 %v167
    %v753 = vunpack.c.h.b16 %v167
    %v754 = vunpack.c.l.b16 %v168
    %v755 = vunpack.c.h.b16 %v168
    %v756 = vunpack.c.l.b16 %v169
    %v757 = vunpack.c.h.b16 %v169
    %v758 = vunpack.c.l.b16 %v170
    %v759 = vunpack.c.h.b16 %v170
    %v760 = vunpack.c.l.b16 %v171
    %v761 = vunpack.c.h.b16 %v171
    %v762 = vunpack.c.l.b16 %v172
    %v763 = vunpack.c.h.b16 %v172
    %v764 = vunpack.c.l.b16 %v173
    %v765 = vunpack.c.h.b16 %v173
    %v766 = vunpack.c.l.b16 %v174
    %v767 = vunpack.c.h.b16 %v174
    %v768 = vunpack.c.l.b16 %v175
    %v769 = vunpack.c.h.b16 %v175
    %v770 = vunpack.c.l.b16 %v176
    %v771 = vunpack.c.h.b16 %v176
    %v772 = vunpack.c.l.b16 %v177
    %v773 = vunpack.c.h.b16 %v177
    %v774 = vunpack.c.l.b16 %v178
    %v775 = vunpack.c.h.b16 %v178
    %v776 = vunpack.c.l.b16 %v179
    %v777 = vunpack.c.h.b16 %v179
    %v778 = vunpack.c.l.b16 %v180
    %v779 = vunpack.c.h.b16 %v180
    %v780 = vunpack.c.l.b16 %v181
    %v781 = vunpack.c.h.b16 %v181
    %v782 = vunpack.c.l.b16 %v182
    %v783 = vunpack.c.h.b16 %v182
    %v784 = vunpack.c.l.b16 %v183
    %v785 = vunpack.c.h.b16 %v183
    %v786 = vunpack.c.l.b16 %v184
    %v787 = vunpack.c.h.b16 %v184
    %v788 = vunpack.c.l.b16 %v185
    %v789 = vunpack.c.h.b16 %v185
    %v790 = vunpack.c.l.b16 %v186
    %v791 = vunpack.c.h.b16 %v186
    %v792 = vunpack.c.l.b16 %v187
    %v793 = vunpack.c.h.b16 %v187
    %v794 = vunpack.c.l.b16 %v188
    %v795 = vunpack.c.h.b16 %v188
    %v796 = vunpack.c.l.b16 %v189
    %v797 = vunpack.c.h.b16 %v189
    %v798 = vunpack.c.l.b16 %v190
    %v799 = vunpack.c.h.b16 %v190
    %v800 = vunpack.c.l.b16 %v191
    %v801 = vunpack.c.h.b16 %v191
    %v802 = vunpack.c.l.b16 %v192
    %v803 = vunpack.c.h.b16 %v192
    %v804 = vunpack.c.l.b16 %v193
    %v805 = vunpack.c.h.b16 %v193
    %v806 = vunpack.c.l.b16 %v194
    %v807 = vunpack.c.h.b16 %v194
    %v808 = vunpack.c.l.b16 %v195
    %v809 = vunpack.c.h.b16 %v195
    %v810 = vunpack.c.l.b16 %v196
    %v811 = vunpack.c.h.b16 %v196
    %v812 = vunpack.c.l.b16 %v197
    %v813 = vunpack.c.h.b16 %v197
    %v814 = vunpack.c.l.b16 %v198
    %v815 = vunpack.c.h.b16 %v198
    %v816 = vunpack.c.l.b16 %v199
    %v817 = vunpack.c.h.b16 %v199
    %v818 = vunpack.c.l.b16 %v200
    %v819 = vunpack.c.h.b16 %v200
    %v820 = vunpack.c.l.b16 %v201
    %v821 = vunpack.c.h.b16 %v201
    %v822 = vunpack.c.l.b16 %v202
    %v823 = vunpack.c.h.b16 %v202
    %v824 = vunpack.c.l.b16 %v203
    %v825 = vunpack.c.h.b16 %v203
    %v826 = vunpack.c.l.b16 %v204
    %v827 = vunpack.c.h.b16 %v204
    %v828 = vunpack.c.l.b16 %v205
    %v829 = vunpack.c.h.b16 %v205
    %v830 = vunpack.c.l.b16 %v206
    %v831 = vunpack.c.h.b16 %v206
    %v832 = vunpack.c.l.b16 %v207
    %v833 = vunpack.c.h.b16 %v207
    %v834 = vunpack.c.l.b16 %v208
    %v835 = vunpack.c.h.b16 %v208
    %v836 = vunpack.c.l.b16 %v209
    %v837 = vunpack.c.h.b16 %v209
    %v838 = vunpack.c.l.b16 %v210
    %v839 = vunpack.c.h.b16 %v210
    %v840 = vunpack.c.l.b16 %v211
    %v841 = vunpack.c.h.b16 %v211
    %v842 = vunpack.c.l.b16 %v212
    %v843 = vunpack.c.h.b16 %v212
    %v844 = vunpack.c.l.b16 %v213
    %v845 = vunpack.c.h.b16 %v213
    %v846 = vunpack.c.l.b16 %v214
    %v847 = vunpack.c.h.b16 %v214
    %v848 = vunpack.c.l.b16 %v215
    %v849 = vunpack.c.h.b16 %v215
    %v850 = vunpack.c.l.b16 %v216
    %v851 = vunpack.c.h.b16 %v216
    %v852 = vunpack.c.l.b16 %v217
    %v853 = vunpack.c.h.b16 %v217
    %v854 = vunpack.c.l.b16 %v218
    %v855 = vunpack.c.h.b16 %v218
    %v856 = vunpack.c.l.b16 %v219
    %v857 = vunpack.c.h.b16 %v219
    %v858 = vunpack.c.l.b16 %v220
    %v859 = vunpack.c.h.b16 %v220
    %v860 = vunpack.c.l.b16 %v221
    %v861 = vunpack.c.h.b16 %v221
    %v862 = vunpack.c.l.b16 %v222
    %v863 = vunpack.c.h.b16 %v222
    %v864 = vunpack.c.l.b16 %v223
    %v865 = vunpack.c.h.b16 %v223
    %v866 = vunpack.c.l.b16 %v224
    %v867 = vunpack.c.h.b16 %v224
    %v868 = vunpack.c.l.b16 %v225
    %v869 = vunpack.c.h.b16 %v225
    %v870 = vunpack.c.l.b16 %v226
    %v871 = vunpack.c.h.b16 %v226
    %v872 = vunpack.c.l.b16 %v227
    %v873 = vunpack.c.h.b16 %v227
    %v874 = vunpack.c.l.b16 %v228
    %v875 = vunpack.c.h.b16 %v228
    %v876 = vunpack.c.l.b16 %v229
    %v877 = vunpack.c.h.b16 %v229
    %v878 = vunpack.c.l.b16 %v230
    %v879 = vunpack.c.h.b16 %v230
    %v880 = vunpack.c.l.b16 %v231
    %v881 = vunpack.c.h.b16 %v231
    %v882 = vunpack.c.l.b16 %v232
    %v883 = vunpack.c.h.b16 %v232
    %v884 = vunpack.c.l.b16 %v233
    %v885 = vunpack.c.h.b16 %v233
    %v886 = vunpack.c.l.b16 %v234
    %v887 = vunpack.c.h.b16 %v234
    %v888 = vunpack.c.l.b16 %v235
    %v889 = vunpack.c.h.b16 %v235
    %v890 = vunpack.c.l.b16 %v236
    %v891 = vunpack.c.h.b16 %v236
    %v892 = vunpack.c.l.b16 %v237
    %v893 = vunpack.c.h.b16 %v237
    %v894 = vunpack.c.l.b16 %v238
    %v895 = vunpack.c.h.b16 %v238
    %v896 = vunpack.c.l.b16 %v239
    %v897 = vunpack.c.h.b16 %v239
    %v898 = vunpack.c.l.b16 %v240
    %v899 = vunpack.c.h.b16 %v240
    %v900 = vunpack.c.l.b16 %v241
    %v901 = vunpack.c.h.b16 %v241
    %v902 = vunpack.c.l.b16 %v242
    %v903 = vunpack.c.h.b16 %v242
    %v904 = vunpack.c.l.b16 %v243
    %v905 = vunpack.c.h.b16 %v243
    %v906 = vunpack.c.l.b16 %v244
    %v907 = vunpack.c.h.b16 %v244
    %v908 = vunpack.c.l.b16 %v245
    %v909 = vunpack.c.h.b16 %v245
    %v910 = vunpack.c.l.b16 %v246
    %v911 = vunpack.c.h.b16 %v246
    %v912 = vunpack.c.l.b16 %v247
    %v913 = vunpack.c.h.b16 %v247
    %v914 = vunpack.c.l.b16 %v248
    %v915 = vunpack.c.h.b16 %v248
    %v916 = vunpack.c.l.b16 %v249
    %v917 = vunpack.c.h.b16 %v249
    %v918 = vunpack.c.l.b16 %v250
    %v919 = vunpack.c.h.b16 %v250
    %v920 = vunpack.c.l.b16 %v251
    %v921 = vunpack.c.h.b16 %v251
    %v922 = vunpack.c.l.b16 %v252
    %v923 = vunpack.c.h.b16 %v252
    %v924 = vunpack.c.l.b16 %v253
    %v925 = vunpack.c.h.b16 %v253
    %v926 = vunpack.c.l.b16 %v254
    %v927 = vunpack.c.h.b16 %v254
    %v928 = vunpack.c.l.b16 %v255
    %v929 = vunpack.c.h.b16 %v255
    %v930 = vunpack.c.l.b16 %v256
    %v931 = vunpack.c.h.b16 %v256
    %v932 = vunpack.c.l.b16 %v257
    %v933 = vunpack.c.h.b16 %v257
    %v934 = vunpack.c.l.b16 %v258
    %v935 = vunpack.c.h.b16 %v258
    %v936 = vunpack.c.l.b16 %v259
    %v937 = vunpack.c.h.b16 %v259
    %v938 = vunpack.c.l.b16 %v260
    %v939 = vunpack.c.h.b16 %v260
    %v940 = vunpack.c.l.b16 %v261
    %v941 = vunpack.c.h.b16 %v261
    %v942 = vunpack.c.l.b16 %v262
    %v943 = vunpack.c.h.b16 %v262
    %v944 = vunpack.c.l.b16 %v263
    %v945 = vunpack.c.h.b16 %v263
    %v946 = vunpack.c.l.b16 %v264
    %v947 = vunpack.c.h.b16 %v264
    %v948 = vunpack.c.l.b16 %v265
    %v949 = vunpack.c.h.b16 %v265
    %v950 = vunpack.c.l.b16 %v266
    %v951 = vunpack.c.h.b16 %v266
    %v952 = vunpack.c.l.b16 %v267
    %v953 = vunpack.c.h.b16 %v267
    %v954 = vunpack.c.l.b16 %v268
    %v955 = vunpack.c.h.b16 %v268
    %v956 = vunpack.c.l.b16 %v269
    %v957 = vunpack.c.h.b16 %v269
    %v958 = vunpack.c.l.b16 %v270
    %v959 = vunpack.c.h.b16 %v270
    %v960 = vunpack.c.l.b16 %v271
    %v961 = vunpack.c.h.b16 %v271
    %v962 = vunpack.c.l.b16 %v272
    %v963 = vunpack.c.h.b16 %v272
    %v964 = vunpack.c.l.b16 %v273
    %v965 = vunpack.c.h.b16 %v273
    %v966 = vunpack.c.l.b16 %v274
    %v967 = vunpack.c.h.b16 %v274
    %v968 = vunpack.c.l.b16 %v275
    %v969 = vunpack.c.h.b16 %v275
    %v970 = vunpack.c.l.b16 %v276
    %v971 = vunpack.c.h.b16 %v276
    %v972 = vunpack.c.l.b16 %v277
    %v973 = vunpack.c.h.b16 %v277
    %v974 = vunpack.c.l.b16 %v278
    %v975 = vunpack.c.h.b16 %v278
    %v976 = vunpack.c.l.b16 %v279
    %v977 = vunpack.c.h.b16 %v279
    %v978 = vunpack.c.l.b16 %v280
    %v979 = vunpack.c.h.b16 %v280
    %v980 = vunpack.c.l.b16 %v281
    %v981 = vunpack.c.h.b16 %v281
    %v982 = vunpack.c.l.b16 %v282
    %v983 = vunpack.c.h.b16 %v282
    %v984 = vunpack.c.l.b16 %v283
    %v985 = vunpack.c.h.b16 %v283
    %v986 = vunpack.c.l.b16 %v284
    %v987 = vunpack.c.h.b16 %v284
    %v988 = vunpack.c.l.b16 %v285
    %v989 = vunpack.c.h.b16 %v285
    %v990 = vunpack.c.l.b16 %v286
    %v991 = vunpack.c.h.b16 %v286
    %v992 = vunpack.c.l.b16 %v287
    %v993 = vunpack.c.h.b16 %v287
    %v994 = vunpack.c.l.b16 %v288
    %v995 = vunpack.c.h.b16 %v288
    %v996 = vunpack.c.l.b16 %v289
    %v997 = vunpack.c.h.b16 %v289
    %v998 = vunpack.c.l.b16 %v290
    %v999 = vunpack.c.h.b16 %v290
    %v1000 = vunpack.c.l.b16 %v291
    %v1001 = vunpack.c.h.b16 %v291
    %v1002 = vunpack.c.l.b16 %v292
    %v1003 = vunpack.c.h.b16 %v292
    %v1004 = vunpack.c.l.b16 %v293
    %v1005 = vunpack.c.h.b16 %v293
    %v1006 = vunpack.c.l.b16 %v294
    %v1007 = vunpack.c.h.b16 %v294
    %v1008 = vunpack.c.l.b16 %v295
    %v1009 = vunpack.c.h.b16 %v295
    %v1010 = vunpack.c.l.b16 %v296
    %v1011 = vunpack.c.h.b16 %v296
    %v1012 = vunpack.c.l.b16 %v297
    %v1013 = vunpack.c.h.b16 %v297
    %v1014 = vunpack.c.l.b16 %v298
    %v1015 = vunpack.c.h.b16 %v298
    %v1016 = vunpack.c.l.b16 %v299
    %v1017 = vunpack.c.h.b16 %v299
    %v1018 = vunpack.c.l.b16 %v300
    %v1019 = vunpack.c.h.b16 %v300
    %v1020 = vunpack.c.l.b16 %v301
    %v1021 = vunpack.c.h.b16 %v301
    %v1022 = vunpack.c.l.b16 %v302
    %v1023 = vunpack.c.h.b16 %v302
    %v1024 = vunpack.c.l.b16 %v303
    %v1025 = vunpack.c.h.b16 %v303
    %v1026 = vunpack.c.l.b16 %v304
    %v1027 = vunpack.c.h.b16 %v304
    %v1028 = vunpack.c.l.b16 %v305
    %v1029 = vunpack.c.h.b16 %v305
    %v1030 = vunpack.c.l.b16 %v306
    %v1031 = vunpack.c.h.b16 %v306
    %v1032 = vunpack.c.l.b16 %v307
    %v1033 = vunpack.c.h.b16 %v307
    %v1034 = vunpack.c.l.b16 %v308
    %v1035 = vunpack.c.h.b16 %v308
    %v1036 = vunpack.c.l.b16 %v309
    %v1037 = vunpack.c.h.b16 %v309
    %v1038 = vunpack.c.l.b16 %v310
    %v1039 = vunpack.c.h.b16 %v310
    %v1040 = vunpack.c.l.b16 %v311
    %v1041 = vunpack.c.h.b16 %v311
    %v1042 = vunpack.c.l.b16 %v312
    %v1043 = vunpack.c.h.b16 %v312
    %v1044 = vunpack.c.l.b16 %v313
    %v1045 = vunpack.c.h.b16 %v313
    %v1046 = vunpack.c.l.b16 %v314
    %v1047 = vunpack.c.h.b16 %v314
    %v1048 = vunpack.c.l.b16 %v315
    %v1049 = vunpack.c.h.b16 %v315
    %v1050 = vunpack.c.l.b16 %v316
    %v1051 = vunpack.c.h.b16 %v316
    %v1052 = vunpack.c.l.b16 %v317
    %v1053 = vunpack.c.h.b16 %v317
    %v1054 = vunpack.c.l.b16 %v318
    %v1055 = vunpack.c.h.b16 %v318
    %v1056 = vunpack.c.l.b16 %v319
    %v1057 = vunpack.c.h.b16 %v319
    %v1058 = vunpack.c.l.b16 %v320
    %v1059 = vunpack.c.h.b16 %v320
    %v1060 = vunpack.c.l.b16 %v321
    %v1061 = vunpack.c.h.b16 %v321
    %v1062 = vunpack.c.l.b16 %v322
    %v1063 = vunpack.c.h.b16 %v322
    %v1064 = vunpack.c.l.b16 %v323
    %v1065 = vunpack.c.h.b16 %v323
    %v1066 = vunpack.c.l.b16 %v324
    %v1067 = vunpack.c.h.b16 %v324
    %v1068 = vunpack.c.l.b16 %v325
    %v1069 = vunpack.c.h.b16 %v325
    %v1070 = vunpack.c.l.b16 %v326
    %v1071 = vunpack.c.h.b16 %v326
    %v1072 = vunpack.c.l.b16 %v327
    %v1073 = vunpack.c.h.b16 %v327
    %v1074 = vunpack.c.l.b16 %v328
    %v1075 = vunpack.c.h.b16 %v328
    %v1076 = vunpack.c.l.b16 %v329
    %v1077 = vunpack.c.h.b16 %v329
    %v1078 = vunpack.c.l.b16 %v330
    %v1079 = vunpack.c.h.b16 %v330
    %v1080 = vunpack.c.l.b16 %v331
    %v1081 = vunpack.c.h.b16 %v331
    %v1082 = vunpack.c.l.b16 %v332
    %v1083 = vunpack.c.h.b16 %v332
    %v1084 = vunpack.c.l.b16 %v333
    %v1085 = vunpack.c.h.b16 %v333
    %v1086 = vunpack.c.l.b16 %v334
    %v1087 = vunpack.c.h.b16 %v334
    %v1088 = vunpack.c.l.b16 %v335
    %v1089 = vunpack.c.h.b16 %v335
    %v1090 = vunpack.c.l.b16 %v336
    %v1091 = vunpack.c.h.b16 %v336
    %v1092 = vunpack.c.l.b16 %v337
    %v1093 = vunpack.c.h.b16 %v337
    %v1094 = vunpack.c.l.b16 %v338
    %v1095 = vunpack.c.h.b16 %v338
    %v1096 = vunpack.c.l.b16 %v339
    %v1097 = vunpack.c.h.b16 %v339
    %v1098 = vunpack.c.l.b16 %v340
    %v1099 = vunpack.c.h.b16 %v340
    %v1100 = vunpack.c.l.b16 %v341
    %v1101 = vunpack.c.h.b16 %v341
    %v1102 = vunpack.c.l.b16 %v342
    %v1103 = vunpack.c.h.b16 %v342
    %v1104 = vunpack.c.l.b16 %v343
    %v1105 = vunpack.c.h.b16 %v343
    %v1106 = vunpack.c.l.b16 %v344
    %v1107 = vunpack.c.h.b16 %v344
    %v1108 = vunpack.c.l.b16 %v345
    %v1109 = vunpack.c.h.b16 %v345
    %v1110 = vunpack.c.l.b16 %v346
    %v1111 = vunpack.c.h.b16 %v346
    %v1112 = vunpack.c.l.b16 %v347
    %v1113 = vunpack.c.h.b16 %v347
    %v1114 = vunpack.c.l.b16 %v348
    %v1115 = vunpack.c.h.b16 %v348
    %v1116 = vunpack.c.l.b16 %v349
    %v1117 = vunpack.c.h.b16 %v349
    %v1118 = vunpack.c.l.b16 %v350
    %v1119 = vunpack.c.h.b16 %v350
    %v1120 = vunpack.c.l.b16 %v351
    %v1121 = vunpack.c.h.b16 %v351
    %v1122 = vunpack.c.l.b16 %v352
    %v1123 = vunpack.c.h.b16 %v352
    %v1124 = vunpack.c.l.b16 %v353
    %v1125 = vunpack.c.h.b16 %v353
    %v1126 = vunpack.c.l.b16 %v354
    %v1127 = vunpack.c.h.b16 %v354
    %v1128 = vunpack.c.l.b16 %v355
    %v1129 = vunpack.c.h.b16 %v355
    %v1130 = vunpack.c.l.b16 %v356
    %v1131 = vunpack.c.h.b16 %v356
    %v1132 = vunpack.c.l.b16 %v357
    %v1133 = vunpack.c.h.b16 %v357
    %v1134 = vunpack.c.l.b16 %v358
    %v1135 = vunpack.c.h.b16 %v358
    %v1136 = vunpack.c.l.b16 %v359
    %v1137 = vunpack.c.h.b16 %v359
    %v1138 = vpack.c.b16 %v630, %v626
    %v1139 = vpack.c.b16 %v631, %v627
    %v1140 = vpack.c.b16 %v632, %v628
    %v1141 = vpack.c.b16 %v633, %v629
    %v1142 = vpack.c.b16 %v638, %v634
    %v1143 = vpack.c.b16 %v639, %v635
    %v1144 = vpack.c.b16 %v640, %v636
    %v1145 = vpack.c.b16 %v641, %v637
    %v1146 = vpack.c.b16 %v646, %v642
    %v1147 = vpack.c.b16 %v647, %v643
    %v1148 = vpack.c.b16 %v648, %v644
    %v1149 = vpack.c.b16 %v649, %v645
    %v1150 = vpack.c.b16 %v654, %v650
    %v1151 = vpack.c.b16 %v655, %v651
    %v1152 = vpack.c.b16 %v656, %v652
    %v1153 = vpack.c.b16 %v657, %v653
    %v1154 = vpack.c.b16 %v662, %v658
    %v1155 = vpack.c.b16 %v663, %v659
    %v1156 = vpack.c.b16 %v664, %v660
    %v1157 = vpack.c.b16 %v665, %v661
    %v1158 = vpack.c.b16 %v670, %v666
    %v1159 = vpack.c.b16 %v671, %v667
    %v1160 = vpack.c.b16 %v672, %v668
    %v1161 = vpack.c.b16 %v673, %v669
    %v1162 = vpack.c.b16 %v678, %v674
    %v1163 = vpack.c.b16 %v679, %v675
    %v1164 = vpack.c.b16 %v680, %v676
    %v1165 = vpack.c.b16 %v681, %v677
    %v1166 = vpack.c.b16 %v686, %v682
    %v1167 = vpack.c.b16 %v687, %v683
    %v1168 = vpack.c.b16 %v688, %v684
    %v1169 = vpack.c.b16 %v689, %v685
    %v1170 = vpack.c.b16 %v694, %v690
    %v1171 = vpack.c.b16 %v695, %v691
    %v1172 = vpack.c.b16 %v696, %v692
    %v1173 = vpack.c.b16 %v697, %v693
    %v1174 = vpack.c.b16 %v702, %v698
    %v1175 = vpack.c.b16 %v703, %v699
    %v1176 = vpack.c.b16 %v704, %v700
    %v1177 = vpack.c.b16 %v705, %v701
    %v1178 = vpack.c.b16 %v710, %v706
    %v1179 = vpack.c.b16 %v711, %v707
    %v1180 = vpack.c.b16 %v712, %v708
    %v1181 = vpack.c.b16 %v713, %v709
    %v1182 = vpack.c.b16 %v718, %v714
    %v1183 = vpack.c.b16 %v719, %v715
    %v1184 = vpack.c.b16 %v720, %v716
    %v1185 = vpack.c.b16 %v721, %v717
    %v1186 = vpack.c.b16 %v726, %v722
    %v1187 = vpack.c.b16 %v727, %v723
    %v1188 = vpack.c.b16 %v728, %v724
    %v1189 = vpack.c.b16 %v729, %v725
    %v1190 = vpack.c.b16 %v734, %v730
    %v1191 = vpack.c.b16 %v735, %v731
    %v1192 = vpack.c.b16 %v736, %v732
    %v1193 = vpack.c.b16 %v737, %v733
    %v1194 = vpack.c.b16 %v742, %v738
    %v1195 = vpack.c.b16 %v743, %v739
    %v1196 = vpack.c.b16 %v744, %v740
    %v1197 = vpack.c.b16 %v745, %v741
    %v1198 = vpack.c.b16 %v750, %v746
    %v1199 = vpack.c.b16 %v751, %v747
    %v1200 = vpack.c.b16 %v752, %v748
    %v1201 = vpack.c.b16 %v753, %v749
    %v1202 = vpack.c.b16 %v758, %v754
    %v1203 = vpack.c.b16 %v759, %v755
    %v1204 = vpack.c.b16 %v760, %v756
    %v1205 = vpack.c.b16 %v761, %v757
    %v1206 = vpack.c.b16 %v766, %v762
    %v1207 = vpack.c.b16 %v767, %v763
    %v1208 = vpack.c.b16 %v768, %v764
    %v1209 = vpack.c.b16 %v769, %v765
    %v1210 = vpack.c.b16 %v774, %v770
    %v1211 = vpack.c.b16 %v775, %v771
    %v1212 = vpack.c.b16 %v776, %v772
    %v1213 = vpack.c.b16 %v777, %v773
    %v1214 = vpack.c.b16 %v782, %v778
    %v1215 = vpack.c.b16 %v783, %v779
    %v1216 = vpack.c.b16 %v784, %v780
    %v1217 = vpack.c.b16 %v785, %v781
    %v1218 = vpack.c.b16 %v790, %v786
    %v1219 = vpack.c.b16 %v791, %v787
    %v1220 = vpack.c.b16 %v792, %v788
    %v1221 = vpack.c.b16 %v793, %v789
    %v1222 = vpack.c.b16 %v798, %v794
    %v1223 = vpack.c.b16 %v799, %v795
    %v1224 = vpack.c.b16 %v800, %v796
    %v1225 = vpack.c.b16 %v801, %v797
    %v1226 = vpack.c.b16 %v806, %v802
    %v1227 = vpack.c.b16 %v807, %v803
    %v1228 = vpack.c.b16 %v808, %v804
    %v1229 = vpack.c.b16 %v809, %v805
    %v1230 = vpack.c.b16 %v814, %v810
    %v1231 = vpack.c.b16 %v815, %v811
    %v1232 = vpack.c.b16 %v816, %v812
    %v1233 = vpack.c.b16 %v817, %v813
    %v1234 = vpack.c.b16 %v822, %v818
    %v1235 = vpack.c.b16 %v823, %v819
    %v1236 = vpack.c.b16 %v824, %v820
    %v1237 = vpack.c.b16 %v825, %v821
    %v1238 = vpack.c.b16 %v830, %v826
    %v1239 = vpack.c.b16 %v831, %v827
    %v1240 = vpack.c.b16 %v832, %v828
    %v1241 = vpack.c.b16 %v833, %v829
    %v1242 = vpack.c.b16 %v838, %v834
    %v1243 = vpack.c.b16 %v839, %v835
    %v1244 = vpack.c.b16 %v840, %v836
    %v1245 = vpack.c.b16 %v841, %v837
    %v1246 = vpack.c.b16 %v846, %v842
    %v1247 = vpack.c.b16 %v847, %v843
    %v1248 = vpack.c.b16 %v848, %v844
    %v1249 = vpack.c.b16 %v849, %v845
    %v1250 = vpack.c.b16 %v854, %v850
    %v1251 = vpack.c.b16 %v855, %v851
    %v1252 = vpack.c.b16 %v856, %v852
    %v1253 = vpack.c.b16 %v857, %v853
    %v1254 = vpack.c.b16 %v862, %v858
    %v1255 = vpack.c.b16 %v863, %v859
    %v1256 = vpack.c.b16 %v864, %v860
    %v1257 = vpack.c.b16 %v865, %v861
    %v1258 = vpack.c.b16 %v870, %v866
    %v1259 = vpack.c.b16 %v871, %v867
    %v1260 = vpack.c.b16 %v872, %v868
    %v1261 = vpack.c.b16 %v873, %v869
    %v1262 = vpack.c.b16 %v878, %v874
    %v1263 = vpack.c.b16 %v879, %v875
    %v1264 = vpack.c.b16 %v880, %v876
    %v1265 = vpack.c.b16 %v881, %v877
    %v1266 = vpack.c.b16 %v886, %v882
    %v1267 = vpack.c.b16 %v887, %v883
    %v1268 = vpack.c.b16 %v888, %v884
    %v1269 = vpack.c.b16 %v889, %v885
    %v1270 = vpack.c.b16 %v894, %v890
    %v1271 = vpack.c.b16 %v895, %v891
    %v1272 = vpack.c.b16 %v896, %v892
    %v1273 = vpack.c.b16 %v897, %v893
    %v1274 = vpack.c.b16 %v902, %v898
    %v1275 = vpack.c.b16 %v903, %v899
    %v1276 = vpack.c.b16 %v904, %v900
    %v1277 = vpack.c.b16 %v905, %v901
    %v1278 = vpack.c.b16 %v910, %v906
    %v1279 = vpack.c.b16 %v911, %v907
    %v1280 = vpack.c.b16 %v912, %v908
    %v1281 = vpack.c.b16 %v913, %v909
    %v1282 = vpack.c.b16 %v918, %v914
    %v1283 = vpack.c.b16 %v919, %v915
    %v1284 = vpack.c.b16 %v920, %v916
    %v1285 = vpack.c.b16 %v921, %v917
    %v1286 = vpack.c.b16 %v926, %v922
    %v1287 = vpack.c.b16 %v927, %v923
    %v1288 = vpack.c.b16 %v928, %v924
    %v1289 = vpack.c.b16 %v929, %v925
    %v1290 = vpack.c.b16 %v934, %v930
    %v1291 = vpack.c.b16 %v935, %v931
    %v1292 = vpack.c.b16 %v936, %v932
    %v1293 = vpack.c.b16 %v937, %v933
    %v1294 = vpack.c.b16 %v942, %v938
    %v1295 = vpack.c.b16 %v943, %v939
    %v1296 = vpack.c.b16 %v944, %v940
    %v1297 = vpack.c.b16 %v945, %v941
    %v1298 = vpack.c.b16 %v950, %v946
    %v1299 = vpack.c.b16 %v951, %v947
    %v1300 = vpack.c.b16 %v952, %v948
    %v1301 = vpack.c.b16 %v953, %v949
    %v1302 = vpack.c.b16 %v958, %v954
    %v1303 = vpack.c.b16 %v959, %v955
    %v1304 = vpack.c.b16 %v960, %v956
    %v1305 = vpack.c.b16 %v961, %v957
    %v1306 = vpack.c.b16 %v966, %v962
    %v1307 = vpack.c.b16 %v967, %v963
    %v1308 = vpack.c.b16 %v968, %v964
    %v1309 = vpack.c.b16 %v969, %v965
    %v1310 = vpack.c.b16 %v974, %v970
    %v1311 = vpack.c.b16 %v975, %v971
    %v1312 = vpack.c.b16 %v976, %v972
    %v1313 = vpack.c.b16 %v977, %v973
    %v1314 = vpack.c.b16 %v982, %v978
    %v1315 = vpack.c.b16 %v983, %v979
    %v1316 = vpack.c.b16 %v984, %v980
    %v1317 = vpack.c.b16 %v985, %v981
    %v1318 = vpack.c.b16 %v990, %v986
    %v1319 = vpack.c.b16 %v991, %v987
    %v1320 = vpack.c.b16 %v992, %v988
    %v1321 = vpack.c.b16 %v993, %v989
    %v1322 = vpack.c.b16 %v998, %v994
    %v1323 = vpack.c.b16 %v999, %v995
    %v1324 = vpack.c.b16 %v1000, %v996
    %v1325 = vpack.c.b16 %v1001, %v997
    %v1326 = vpack.c.b16 %v1006, %v1002
    %v1327 = vpack.c.b16 %v1007, %v1003
    %v1328 = vpack.c.b16 %v1008, %v1004
    %v1329 = vpack.c.b16 %v1009, %v1005
    %v1330 = vpack.c.b16 %v1014, %v1010
    %v1331 = vpack.c.b16 %v1015, %v1011
    %v1332 = vpack.c.b16 %v1016, %v1012
    %v1333 = vpack.c.b16 %v1017, %v1013
    %v1334 = vpack.c.b16 %v1022, %v1018
    %v1335 = vpack.c.b16 %v1023, %v1019
    %v1336 = vpack.c.b16 %v1024, %v1020
    %v1337 = vpack.c.b16 %v1025, %v1021
    %v1338 = vpack.c.b16 %v1030, %v1026
    %v1339 = vpack.c.b16 %v1031, %v1027
    %v1340 = vpack.c.b16 %v1032, %v1028
    %v1341 = vpack.c.b16 %v1033, %v1029
    %v1342 = vpack.c.b16 %v1038, %v1034
    %v1343 = vpack.c.b16 %v1039, %v1035
    %v1344 = vpack.c.b16 %v1040, %v1036
    %v1345 = vpack.c.b16 %v1041, %v1037
    %v1346 = vpack.c.b16 %v1046, %v1042
    %v1347 = vpack.c.b16 %v1047, %v1043
    %v1348 = vpack.c.b16 %v1048, %v1044
    %v1349 = vpack.c.b16 %v1049, %v1045
    %v1350 = vpack.c.b16 %v1054, %v1050
    %v1351 = vpack.c.b16 %v1055, %v1051
    %v1352 = vpack.c.b16 %v1056, %v1052
    %v1353 = vpack.c.b16 %v1057, %v1053
    %v1354 = vpack.c.b16 %v1062, %v1058
    %v1355 = vpack.c.b16 %v1063, %v1059
    %v1356 = vpack.c.b16 %v1064, %v1060
    %v1357 = vpack.c.b16 %v1065, %v1061
    %v1358 = vpack.c.b16 %v1070, %v1066
    %v1359 = vpack.c.b16 %v1071, %v1067
    %v1360 = vpack.c.b16 %v1072, %v1068
    %v1361 = vpack.c.b16 %v1073, %v1069
    %v1362 = vpack.c.b16 %v1078, %v1074
    %v1363 = vpack.c.b16 %v1079, %v1075
    %v1364 = vpack.c.b16 %v1080, %v1076
    %v1365 = vpack.c.b16 %v1081, %v1077
    %v1366 = vpack.c.b16 %v1086, %v1082
    %v1367 = vpack.c.b16 %v1087, %v1083
    %v1368 = vpack.c.b16 %v1088, %v1084
    %v1369 = vpack.c.b16 %v1089, %v1085
    %v1370 = vpack.c.b16 %v1094, %v1090
    %v1371 = vpack.c.b16 %v1095, %v1091
    %v1372 = vpack.c.b16 %v1096, %v1092
    %v1373 = vpack.c.b16 %v1097, %v1093
    %v1374 = vpack.c.b16 %v1102, %v1098
    %v1375 = vpack.c.b16 %v1103, %v1099
    %v1376 = vpack.c.b16 %v1104, %v1100
    %v1377 = vpack.c.b16 %v1105, %v1101
    %v1378 = vpack.c.b16 %v1110, %v1106
    %v1379 = vpack.c.b16 %v1111, %v1107
    %v1380 = vpack.c.b16 %v1112, %v1108
    %v1381 = vpack.c.b16 %v1113, %v1109
    %v1382 = vpack.c.b16 %v1118, %v1114
    %v1383 = vpack.c.b16 %v1119, %v1115
    %v1384 = vpack.c.b16 %v1120, %v1116
    %v1385 = vpack.c.b16 %v1121, %v1117
    %v1386 = vpack.c.b16 %v1126, %v1122
    %v1387 = vpack.c.b16 %v1127, %v1123
    %v1388 = vpack.c.b16 %v1128, %v1124
    %v1389 = vpack.c.b16 %v1129, %v1125
    %v1390 = vpack.c.b16 %v1134, %v1130
    %v1391 = vpack.c.b16 %v1135, %v1131
    %v1392 = vpack.c.b16 %v1136, %v1132
    %v1393 = vpack.c.b16 %v1137, %v1133
    %1650 = vmatpush.bf16.msra.mxu0 %v1166
    %1651 = vmatpush.bf16.msra.mxu0 %v1162
    %1652 = vmatpush.bf16.msra.mxu0 %v1158
    %1653 = vmatpush.bf16.msra.mxu0 %v1154
    %1654 = vmatpush.bf16.msra.mxu0 %v1150
    %1655 = vmatpush.bf16.msra.mxu0 %v1146
    %1656 = vmatpush.bf16.msra.mxu0 %v1142
    %1657 = vmatpush.bf16.msra.mxu0 %v1138
    %1658 = vmatmul.bf16.gmra.mxu0 %v96
    %v1659 = vpop.f32.mrf.mxu0
    %v1660 = vadd.f32 %v362, %v1659
    %v1661 = vpop.f32.mrf.mxu0
    %1662 = vdwg.mxu0
    %1663 = vmatpush.bf16.msra.mxu0 %v1198
    %1664 = vmatpush.bf16.msra.mxu0 %v1194
    %1665 = vmatpush.bf16.msra.mxu0 %v1190
    %1666 = vmatpush.bf16.msra.mxu0 %v1186
    %1667 = vmatpush.bf16.msra.mxu0 %v1182
    %1668 = vmatpush.bf16.msra.mxu0 %v1178
    %1669 = vmatpush.bf16.msra.mxu0 %v1174
    %1670 = vmatpush.bf16.msra.mxu0 %v1170
    %1671 = vmatmul.bf16.gmra.mxu0 %v97
    %v1672 = vpop.f32.mrf.mxu0
    %v1673 = vadd.f32 %v1660, %v1672
    %v1674 = vpop.f32.mrf.mxu0
    %1675 = vdwg.mxu0
    %1676 = vmatpush.bf16.msra.mxu0 %v1230
    %1677 = vmatpush.bf16.msra.mxu0 %v1226
    %1678 = vmatpush.bf16.msra.mxu0 %v1222
    %1679 = vmatpush.bf16.msra.mxu0 %v1218
    %1680 = vmatpush.bf16.msra.mxu0 %v1214
    %1681 = vmatpush.bf16.msra.mxu0 %v1210
    %1682 = vmatpush.bf16.msra.mxu0 %v1206
    %1683 = vmatpush.bf16.msra.mxu0 %v1202
    %1684 = vmatmul.bf16.gmra.mxu0 %v98
    %v1685 = vpop.f32.mrf.mxu0
    %v1686 = vadd.f32 %v1673, %v1685
    %v1687 = vpop.f32.mrf.mxu0
    %1688 = vdwg.mxu0
    %1689 = vmatpush.bf16.msra.mxu0 %v1262
    %1690 = vmatpush.bf16.msra.mxu0 %v1258
    %1691 = vmatpush.bf16.msra.mxu0 %v1254
    %1692 = vmatpush.bf16.msra.mxu0 %v1250
    %1693 = vmatpush.bf16.msra.mxu0 %v1246
    %1694 = vmatpush.bf16.msra.mxu0 %v1242
    %1695 = vmatpush.bf16.msra.mxu0 %v1238
    %1696 = vmatpush.bf16.msra.mxu0 %v1234
    %1697 = vmatmul.bf16.gmra.mxu0 %v99
    %v1698 = vpop.f32.mrf.mxu0
    %v1699 = vadd.f32 %v1686, %v1698
    %v1700 = vpop.f32.mrf.mxu0
    %1701 = vdwg.mxu0
    %1702 = vmatpush.bf16.msra.mxu0 %v1294
    %1703 = vmatpush.bf16.msra.mxu0 %v1290
    %1704 = vmatpush.bf16.msra.mxu0 %v1286
    %1705 = vmatpush.bf16.msra.mxu0 %v1282
    %1706 = vmatpush.bf16.msra.mxu0 %v1278
    %1707 = vmatpush.bf16.msra.mxu0 %v1274
    %1708 = vmatpush.bf16.msra.mxu0 %v1270
    %1709 = vmatpush.bf16.msra.mxu0 %v1266
    %1710 = vmatmul.bf16.gmra.mxu0 %v100
    %v1711 = vpop.f32.mrf.mxu0
    %v1712 = vadd.f32 %v1699, %v1711
    %v1713 = vpop.f32.mrf.mxu0
    %1714 = vdwg.mxu0
    %1715 = vmatpush.bf16.msra.mxu0 %v1326
    %1716 = vmatpush.bf16.msra.mxu0 %v1322
    %1717 = vmatpush.bf16.msra.mxu0 %v1318
    %1718 = vmatpush.bf16.msra.mxu0 %v1314
    %1719 = vmatpush.bf16.msra.mxu0 %v1310
    %1720 = vmatpush.bf16.msra.mxu0 %v1306
    %1721 = vmatpush.bf16.msra.mxu0 %v1302
    %1722 = vmatpush.bf16.msra.mxu0 %v1298
    %1723 = vmatmul.bf16.gmra.mxu0 %v101
    %v1724 = vpop.f32.mrf.mxu0
    %v1725 = vadd.f32 %v1712, %v1724
    %v1726 = vpop.f32.mrf.mxu0
    %1727 = vdwg.mxu0
    %1728 = vmatpush.bf16.msra.mxu0 %v1358
    %1729 = vmatpush.bf16.msra.mxu0 %v1354
    %1730 = vmatpush.bf16.msra.mxu0 %v1350
    %1731 = vmatpush.bf16.msra.mxu0 %v1346
    %1732 = vmatpush.bf16.msra.mxu0 %v1342
    %1733 = vmatpush.bf16.msra.mxu0 %v1338
    %1734 = vmatpush.bf16.msra.mxu0 %v1334
    %1735 = vmatpush.bf16.msra.mxu0 %v1330
    %1736 = vmatmul.bf16.gmra.mxu0 %v102
    %v1737 = vpop.f32.mrf.mxu0
    %v1738 = vadd.f32 %v1725, %v1737
    %v1739 = vpop.f32.mrf.mxu0
    %1740 = vdwg.mxu0
    %1741 = vmatpush.bf16.msra.mxu0 %v1390
    %1742 = vmatpush.bf16.msra.mxu0 %v1386
    %1743 = vmatpush.bf16.msra.mxu0 %v1382
    %1744 = vmatpush.bf16.msra.mxu0 %v1378
    %1745 = vmatpush.bf16.msra.mxu0 %v1374
    %1746 = vmatpush.bf16.msra.mxu0 %v1370
    %1747 = vmatpush.bf16.msra.mxu0 %v1366
    %1748 = vmatpush.bf16.msra.mxu0 %v1362
    %1749 = vmatmul.bf16.gmra.mxu0 %v103
    %v1750 = vpop.f32.mrf.mxu0
    %v1751 = vadd.f32 %v1738, %v1750
    %v1752 = vpop.f32.mrf.mxu0
    %1753 = vdwg.mxu0
    %1754 = vmatpush.bf16.msra.mxu0 %v1167
    %1755 = vmatpush.bf16.msra.mxu0 %v1163
    %1756 = vmatpush.bf16.msra.mxu0 %v1159
    %1757 = vmatpush.bf16.msra.mxu0 %v1155
    %1758 = vmatpush.bf16.msra.mxu0 %v1151
    %1759 = vmatpush.bf16.msra.mxu0 %v1147
    %1760 = vmatpush.bf16.msra.mxu0 %v1143
    %1761 = vmatpush.bf16.msra.mxu0 %v1139
    %1762 = vmatmul.bf16.gmra.mxu0 %v96
    %v1763 = vpop.f32.mrf.mxu0
    %v1764 = vadd.f32 %v363, %v1763
    %v1765 = vpop.f32.mrf.mxu0
    %1766 = vdwg.mxu0
    %1767 = vmatpush.bf16.msra.mxu0 %v1199
    %1768 = vmatpush.bf16.msra.mxu0 %v1195
    %1769 = vmatpush.bf16.msra.mxu0 %v1191
    %1770 = vmatpush.bf16.msra.mxu0 %v1187
    %1771 = vmatpush.bf16.msra.mxu0 %v1183
    %1772 = vmatpush.bf16.msra.mxu0 %v1179
    %1773 = vmatpush.bf16.msra.mxu0 %v1175
    %1774 = vmatpush.bf16.msra.mxu0 %v1171
    %1775 = vmatmul.bf16.gmra.mxu0 %v97
    %v1776 = vpop.f32.mrf.mxu0
    %v1777 = vadd.f32 %v1764, %v1776
    %v1778 = vpop.f32.mrf.mxu0
    %1779 = vdwg.mxu0
    %1780 = vmatpush.bf16.msra.mxu0 %v1231
    %1781 = vmatpush.bf16.msra.mxu0 %v1227
    %1782 = vmatpush.bf16.msra.mxu0 %v1223
    %1783 = vmatpush.bf16.msra.mxu0 %v1219
    %1784 = vmatpush.bf16.msra.mxu0 %v1215
    %1785 = vmatpush.bf16.msra.mxu0 %v1211
    %1786 = vmatpush.bf16.msra.mxu0 %v1207
    %1787 = vmatpush.bf16.msra.mxu0 %v1203
    %1788 = vmatmul.bf16.gmra.mxu0 %v98
    %v1789 = vpop.f32.mrf.mxu0
    %v1790 = vadd.f32 %v1777, %v1789
    %v1791 = vpop.f32.mrf.mxu0
    %1792 = vdwg.mxu0
    %1793 = vmatpush.bf16.msra.mxu0 %v1263
    %1794 = vmatpush.bf16.msra.mxu0 %v1259
    %1795 = vmatpush.bf16.msra.mxu0 %v1255
    %1796 = vmatpush.bf16.msra.mxu0 %v1251
    %1797 = vmatpush.bf16.msra.mxu0 %v1247
    %1798 = vmatpush.bf16.msra.mxu0 %v1243
    %1799 = vmatpush.bf16.msra.mxu0 %v1239
    %1800 = vmatpush.bf16.msra.mxu0 %v1235
    %1801 = vmatmul.bf16.gmra.mxu0 %v99
    %v1802 = vpop.f32.mrf.mxu0
    %v1803 = vadd.f32 %v1790, %v1802
    %v1804 = vpop.f32.mrf.mxu0
    %1805 = vdwg.mxu0
    %1806 = vmatpush.bf16.msra.mxu0 %v1295
    %1807 = vmatpush.bf16.msra.mxu0 %v1291
    %1808 = vmatpush.bf16.msra.mxu0 %v1287
    %1809 = vmatpush.bf16.msra.mxu0 %v1283
    %1810 = vmatpush.bf16.msra.mxu0 %v1279
    %1811 = vmatpush.bf16.msra.mxu0 %v1275
    %1812 = vmatpush.bf16.msra.mxu0 %v1271
    %1813 = vmatpush.bf16.msra.mxu0 %v1267
    %1814 = vmatmul.bf16.gmra.mxu0 %v100
    %v1815 = vpop.f32.mrf.mxu0
    %v1816 = vadd.f32 %v1803, %v1815
    %v1817 = vpop.f32.mrf.mxu0
    %1818 = vdwg.mxu0
    %1819 = vmatpush.bf16.msra.mxu0 %v1327
    %1820 = vmatpush.bf16.msra.mxu0 %v1323
    %1821 = vmatpush.bf16.msra.mxu0 %v1319
    %1822 = vmatpush.bf16.msra.mxu0 %v1315
    %1823 = vmatpush.bf16.msra.mxu0 %v1311
    %1824 = vmatpush.bf16.msra.mxu0 %v1307
    %1825 = vmatpush.bf16.msra.mxu0 %v1303
    %1826 = vmatpush.bf16.msra.mxu0 %v1299
    %1827 = vmatmul.bf16.gmra.mxu0 %v101
    %v1828 = vpop.f32.mrf.mxu0
    %v1829 = vadd.f32 %v1816, %v1828
    %v1830 = vpop.f32.mrf.mxu0
    %1831 = vdwg.mxu0
    %1832 = vmatpush.bf16.msra.mxu0 %v1359
    %1833 = vmatpush.bf16.msra.mxu0 %v1355
    %1834 = vmatpush.bf16.msra.mxu0 %v1351
    %1835 = vmatpush.bf16.msra.mxu0 %v1347
    %1836 = vmatpush.bf16.msra.mxu0 %v1343
    %1837 = vmatpush.bf16.msra.mxu0 %v1339
    %1838 = vmatpush.bf16.msra.mxu0 %v1335
    %1839 = vmatpush.bf16.msra.mxu0 %v1331
    %1840 = vmatmul.bf16.gmra.mxu0 %v102
    %v1841 = vpop.f32.mrf.mxu0
    %v1842 = vadd.f32 %v1829, %v1841
    %v1843 = vpop.f32.mrf.mxu0
    %1844 = vdwg.mxu0
    %1845 = vmatpush.bf16.msra.mxu0 %v1391
    %1846 = vmatpush.bf16.msra.mxu0 %v1387
    %1847 = vmatpush.bf16.msra.mxu0 %v1383
    %1848 = vmatpush.bf16.msra.mxu0 %v1379
    %1849 = vmatpush.bf16.msra.mxu0 %v1375
    %1850 = vmatpush.bf16.msra.mxu0 %v1371
    %1851 = vmatpush.bf16.msra.mxu0 %v1367
    %1852 = vmatpush.bf16.msra.mxu0 %v1363
    %1853 = vmatmul.bf16.gmra.mxu0 %v103
    %v1854 = vpop.f32.mrf.mxu0
    %v1855 = vadd.f32 %v1842, %v1854
    %v1856 = vpop.f32.mrf.mxu0
    %1857 = vdwg.mxu0
    %1858 = vmatpush.bf16.msra.mxu0 %v1168
    %1859 = vmatpush.bf16.msra.mxu0 %v1164
    %1860 = vmatpush.bf16.msra.mxu0 %v1160
    %1861 = vmatpush.bf16.msra.mxu0 %v1156
    %1862 = vmatpush.bf16.msra.mxu0 %v1152
    %1863 = vmatpush.bf16.msra.mxu0 %v1148
    %1864 = vmatpush.bf16.msra.mxu0 %v1144
    %1865 = vmatpush.bf16.msra.mxu0 %v1140
    %1866 = vmatmul.bf16.gmra.mxu0 %v96
    %v1867 = vpop.f32.mrf.mxu0
    %v1868 = vadd.f32 %v364, %v1867
    %v1869 = vpop.f32.mrf.mxu0
    %1870 = vdwg.mxu0
    %1871 = vmatpush.bf16.msra.mxu0 %v1200
    %1872 = vmatpush.bf16.msra.mxu0 %v1196
    %1873 = vmatpush.bf16.msra.mxu0 %v1192
    %1874 = vmatpush.bf16.msra.mxu0 %v1188
    %1875 = vmatpush.bf16.msra.mxu0 %v1184
    %1876 = vmatpush.bf16.msra.mxu0 %v1180
    %1877 = vmatpush.bf16.msra.mxu0 %v1176
    %1878 = vmatpush.bf16.msra.mxu0 %v1172
    %1879 = vmatmul.bf16.gmra.mxu0 %v97
    %v1880 = vpop.f32.mrf.mxu0
    %v1881 = vadd.f32 %v1868, %v1880
    %v1882 = vpop.f32.mrf.mxu0
    %1883 = vdwg.mxu0
    %1884 = vmatpush.bf16.msra.mxu0 %v1232
    %1885 = vmatpush.bf16.msra.mxu0 %v1228
    %1886 = vmatpush.bf16.msra.mxu0 %v1224
    %1887 = vmatpush.bf16.msra.mxu0 %v1220
    %1888 = vmatpush.bf16.msra.mxu0 %v1216
    %1889 = vmatpush.bf16.msra.mxu0 %v1212
    %1890 = vmatpush.bf16.msra.mxu0 %v1208
    %1891 = vmatpush.bf16.msra.mxu0 %v1204
    %1892 = vmatmul.bf16.gmra.mxu0 %v98
    %v1893 = vpop.f32.mrf.mxu0
    %v1894 = vadd.f32 %v1881, %v1893
    %v1895 = vpop.f32.mrf.mxu0
    %1896 = vdwg.mxu0
    %1897 = vmatpush.bf16.msra.mxu0 %v1264
    %1898 = vmatpush.bf16.msra.mxu0 %v1260
    %1899 = vmatpush.bf16.msra.mxu0 %v1256
    %1900 = vmatpush.bf16.msra.mxu0 %v1252
    %1901 = vmatpush.bf16.msra.mxu0 %v1248
    %1902 = vmatpush.bf16.msra.mxu0 %v1244
    %1903 = vmatpush.bf16.msra.mxu0 %v1240
    %1904 = vmatpush.bf16.msra.mxu0 %v1236
    %1905 = vmatmul.bf16.gmra.mxu0 %v99
    %v1906 = vpop.f32.mrf.mxu0
    %v1907 = vadd.f32 %v1894, %v1906
    %v1908 = vpop.f32.mrf.mxu0
    %1909 = vdwg.mxu0
    %1910 = vmatpush.bf16.msra.mxu0 %v1296
    %1911 = vmatpush.bf16.msra.mxu0 %v1292
    %1912 = vmatpush.bf16.msra.mxu0 %v1288
    %1913 = vmatpush.bf16.msra.mxu0 %v1284
    %1914 = vmatpush.bf16.msra.mxu0 %v1280
    %1915 = vmatpush.bf16.msra.mxu0 %v1276
    %1916 = vmatpush.bf16.msra.mxu0 %v1272
    %1917 = vmatpush.bf16.msra.mxu0 %v1268
    %1918 = vmatmul.bf16.gmra.mxu0 %v100
    %v1919 = vpop.f32.mrf.mxu0
    %v1920 = vadd.f32 %v1907, %v1919
    %v1921 = vpop.f32.mrf.mxu0
    %1922 = vdwg.mxu0
    %1923 = vmatpush.bf16.msra.mxu0 %v1328
    %1924 = vmatpush.bf16.msra.mxu0 %v1324
    %1925 = vmatpush.bf16.msra.mxu0 %v1320
    %1926 = vmatpush.bf16.msra.mxu0 %v1316
    %1927 = vmatpush.bf16.msra.mxu0 %v1312
    %1928 = vmatpush.bf16.msra.mxu0 %v1308
    %1929 = vmatpush.bf16.msra.mxu0 %v1304
    %1930 = vmatpush.bf16.msra.mxu0 %v1300
    %1931 = vmatmul.bf16.gmra.mxu0 %v101
    %v1932 = vpop.f32.mrf.mxu0
    %v1933 = vadd.f32 %v1920, %v1932
    %v1934 = vpop.f32.mrf.mxu0
    %1935 = vdwg.mxu0
    %1936 = vmatpush.bf16.msra.mxu0 %v1360
    %1937 = vmatpush.bf16.msra.mxu0 %v1356
    %1938 = vmatpush.bf16.msra.mxu0 %v1352
    %1939 = vmatpush.bf16.msra.mxu0 %v1348
    %1940 = vmatpush.bf16.msra.mxu0 %v1344
    %1941 = vmatpush.bf16.msra.mxu0 %v1340
    %1942 = vmatpush.bf16.msra.mxu0 %v1336
    %1943 = vmatpush.bf16.msra.mxu0 %v1332
    %1944 = vmatmul.bf16.gmra.mxu0 %v102
    %v1945 = vpop.f32.mrf.mxu0
    %v1946 = vadd.f32 %v1933, %v1945
    %v1947 = vpop.f32.mrf.mxu0
    %1948 = vdwg.mxu0
    %1949 = vmatpush.bf16.msra.mxu0 %v1392
    %1950 = vmatpush.bf16.msra.mxu0 %v1388
    %1951 = vmatpush.bf16.msra.mxu0 %v1384
    %1952 = vmatpush.bf16.msra.mxu0 %v1380
    %1953 = vmatpush.bf16.msra.mxu0 %v1376
    %1954 = vmatpush.bf16.msra.mxu0 %v1372
    %1955 = vmatpush.bf16.msra.mxu0 %v1368
    %1956 = vmatpush.bf16.msra.mxu0 %v1364
    %1957 = vmatmul.bf16.gmra.mxu0 %v103
    %v1958 = vpop.f32.mrf.mxu0
    %v1959 = vadd.f32 %v1946, %v1958
    %v1960 = vpop.f32.mrf.mxu0
    %1961 = vdwg.mxu0
    %1962 = vmatpush.bf16.msra.mxu0 %v1169
    %1963 = vmatpush.bf16.msra.mxu0 %v1165
    %1964 = vmatpush.bf16.msra.mxu0 %v1161
    %1965 = vmatpush.bf16.msra.mxu0 %v1157
    %1966 = vmatpush.bf16.msra.mxu0 %v1153
    %1967 = vmatpush.bf16.msra.mxu0 %v1149
    %1968 = vmatpush.bf16.msra.mxu0 %v1145
    %1969 = vmatpush.bf16.msra.mxu0 %v1141
    %1970 = vmatmul.bf16.gmra.mxu0 %v96
    %v1971 = vpop.f32.mrf.mxu0
    %v1972 = vadd.f32 %v365, %v1971
    %v1973 = vpop.f32.mrf.mxu0
    %1974 = vdwg.mxu0
    %1975 = vmatpush.bf16.msra.mxu0 %v1201
    %1976 = vmatpush.bf16.msra.mxu0 %v1197
    %1977 = vmatpush.bf16.msra.mxu0 %v1193
    %1978 = vmatpush.bf16.msra.mxu0 %v1189
    %1979 = vmatpush.bf16.msra.mxu0 %v1185
    %1980 = vmatpush.bf16.msra.mxu0 %v1181
    %1981 = vmatpush.bf16.msra.mxu0 %v1177
    %1982 = vmatpush.bf16.msra.mxu0 %v1173
    %1983 = vmatmul.bf16.gmra.mxu0 %v97
    %v1984 = vpop.f32.mrf.mxu0
    %v1985 = vadd.f32 %v1972, %v1984
    %v1986 = vpop.f32.mrf.mxu0
    %1987 = vdwg.mxu0
    %1988 = vmatpush.bf16.msra.mxu0 %v1233
    %1989 = vmatpush.bf16.msra.mxu0 %v1229
    %1990 = vmatpush.bf16.msra.mxu0 %v1225
    %1991 = vmatpush.bf16.msra.mxu0 %v1221
    %1992 = vmatpush.bf16.msra.mxu0 %v1217
    %1993 = vmatpush.bf16.msra.mxu0 %v1213
    %1994 = vmatpush.bf16.msra.mxu0 %v1209
    %1995 = vmatpush.bf16.msra.mxu0 %v1205
    %1996 = vmatmul.bf16.gmra.mxu0 %v98
    %v1997 = vpop.f32.mrf.mxu0
    %v1998 = vadd.f32 %v1985, %v1997
    %v1999 = vpop.f32.mrf.mxu0
    %2000 = vdwg.mxu0
    %2001 = vmatpush.bf16.msra.mxu0 %v1265
    %2002 = vmatpush.bf16.msra.mxu0 %v1261
    %2003 = vmatpush.bf16.msra.mxu0 %v1257
    %2004 = vmatpush.bf16.msra.mxu0 %v1253
    %2005 = vmatpush.bf16.msra.mxu0 %v1249
    %2006 = vmatpush.bf16.msra.mxu0 %v1245
    %2007 = vmatpush.bf16.msra.mxu0 %v1241
    %2008 = vmatpush.bf16.msra.mxu0 %v1237
    %2009 = vmatmul.bf16.gmra.mxu0 %v99
    %v2010 = vpop.f32.mrf.mxu0
    %v2011 = vadd.f32 %v1998, %v2010
    %v2012 = vpop.f32.mrf.mxu0
    %2013 = vdwg.mxu0
    %2014 = vmatpush.bf16.msra.mxu0 %v1297
    %2015 = vmatpush.bf16.msra.mxu0 %v1293
    %2016 = vmatpush.bf16.msra.mxu0 %v1289
    %2017 = vmatpush.bf16.msra.mxu0 %v1285
    %2018 = vmatpush.bf16.msra.mxu0 %v1281
    %2019 = vmatpush.bf16.msra.mxu0 %v1277
    %2020 = vmatpush.bf16.msra.mxu0 %v1273
    %2021 = vmatpush.bf16.msra.mxu0 %v1269
    %2022 = vmatmul.bf16.gmra.mxu0 %v100
    %v2023 = vpop.f32.mrf.mxu0
    %v2024 = vadd.f32 %v2011, %v2023
    %v2025 = vpop.f32.mrf.mxu0
    %2026 = vdwg.mxu0
    %2027 = vmatpush.bf16.msra.mxu0 %v1329
    %2028 = vmatpush.bf16.msra.mxu0 %v1325
    %2029 = vmatpush.bf16.msra.mxu0 %v1321
    %2030 = vmatpush.bf16.msra.mxu0 %v1317
    %2031 = vmatpush.bf16.msra.mxu0 %v1313
    %2032 = vmatpush.bf16.msra.mxu0 %v1309
    %2033 = vmatpush.bf16.msra.mxu0 %v1305
    %2034 = vmatpush.bf16.msra.mxu0 %v1301
    %2035 = vmatmul.bf16.gmra.mxu0 %v101
    %v2036 = vpop.f32.mrf.mxu0
    %v2037 = vadd.f32 %v2024, %v2036
    %v2038 = vpop.f32.mrf.mxu0
    %2039 = vdwg.mxu0
    %2040 = vmatpush.bf16.msra.mxu0 %v1361
    %2041 = vmatpush.bf16.msra.mxu0 %v1357
    %2042 = vmatpush.bf16.msra.mxu0 %v1353
    %2043 = vmatpush.bf16.msra.mxu0 %v1349
    %2044 = vmatpush.bf16.msra.mxu0 %v1345
    %2045 = vmatpush.bf16.msra.mxu0 %v1341
    %2046 = vmatpush.bf16.msra.mxu0 %v1337
    %2047 = vmatpush.bf16.msra.mxu0 %v1333
    %2048 = vmatmul.bf16.gmra.mxu0 %v102
    %v2049 = vpop.f32.mrf.mxu0
    %v2050 = vadd.f32 %v2037, %v2049
    %v2051 = vpop.f32.mrf.mxu0
    %2052 = vdwg.mxu0
    %2053 = vmatpush.bf16.msra.mxu0 %v1393
    %2054 = vmatpush.bf16.msra.mxu0 %v1389
    %2055 = vmatpush.bf16.msra.mxu0 %v1385
    %2056 = vmatpush.bf16.msra.mxu0 %v1381
    %2057 = vmatpush.bf16.msra.mxu0 %v1377
    %2058 = vmatpush.bf16.msra.mxu0 %v1373
    %2059 = vmatpush.bf16.msra.mxu0 %v1369
    %2060 = vmatpush.bf16.msra.mxu0 %v1365
    %2061 = vmatmul.bf16.gmra.mxu0 %v103
    %v2062 = vpop.f32.mrf.mxu0
    %v2063 = vadd.f32 %v2050, %v2062
    %v2064 = vpop.f32.mrf.mxu0
    %2065 = vdwg.mxu0
    %v2066 = vmax.f32 %v1751, 0.0
    %v2067 = vmax.f32 %v1855, 0.0
    %v2068 = vmax.f32 %v1959, 0.0
    %v2069 = vmax.f32 %v2063, 0.0
    %v2070 = vld [vmem:[%s3] sm:$0xff]
    %v2071 = vld [vmem:[%s3 + $0x8] sm:$0xff]
    %v2072 = vld [vmem:[%s3 + $0x10] sm:$0xff]
    %v2073 = vld [vmem:[%s3 + $0x18] sm:$0xff]
    %v2074 = vld [vmem:[%s3 + $0x20] sm:$0xff]
    %v2075 = vld [vmem:[%s3 + $0x28] sm:$0xff]
    %v2076 = vld [vmem:[%s3 + $0x30] sm:$0xff]
    %v2077 = vld [vmem:[%s3 + $0x38] sm:$0xff]
    %v2078 = vld [vmem:[%s3 + $0x40] sm:$0xff]
    %v2079 = vld [vmem:[%s3 + $0x48] sm:$0xff]
    %v2080 = vld [vmem:[%s3 + $0x50] sm:$0xff]
    %v2081 = vld [vmem:[%s3 + $0x58] sm:$0xff]
    %v2082 = vld [vmem:[%s3 + $0x60] sm:$0xff]
    %v2083 = vld [vmem:[%s3 + $0x68] sm:$0xff]
    %v2084 = vld [vmem:[%s3 + $0x70] sm:$0xff]
    %v2085 = vld [vmem:[%s3 + $0x78] sm:$0xff]
    %v2086 = vld [vmem:[%s3 + $0x80] sm:$0xff]
    %v2087 = vld [vmem:[%s3 + $0x88] sm:$0xff]
    %v2088 = vld [vmem:[%s3 + $0x90] sm:$0xff]
    %v2089 = vld [vmem:[%s3 + $0x98] sm:$0xff]
    %v2090 = vld [vmem:[%s3 + $0xa0] sm:$0xff]
    %v2091 = vld [vmem:[%s3 + $0xa8] sm:$0xff]
    %v2092 = vld [vmem:[%s3 + $0xb0] sm:$0xff]
    %v2093 = vld [vmem:[%s3 + $0xb8] sm:$0xff]
    %v2094 = vld [vmem:[%s3 + $0xc0] sm:$0xff]
    %v2095 = vld [vmem:[%s3 + $0xc8] sm:$0xff]
    %v2096 = vld [vmem:[%s3 + $0xd0] sm:$0xff]
    %v2097 = vld [vmem:[%s3 + $0xd8] sm:$0xff]
    %v2098 = vld [vmem:[%s3 + $0xe0] sm:$0xff]
    %v2099 = vld [vmem:[%s3 + $0xe8] sm:$0xff]
    %v2100 = vld [vmem:[%s3 + $0xf0] sm:$0xff]
    %v2101 = vld [vmem:[%s3 + $0xf8] sm:$0xff]
    %v2102 = vld [vmem:[%s3 + $0x100] sm:$0xff]
    %v2103 = vld [vmem:[%s3 + $0x108] sm:$0xff]
    %v2104 = vld [vmem:[%s3 + $0x110] sm:$0xff]
    %v2105 = vld [vmem:[%s3 + $0x118] sm:$0xff]
    %v2106 = vld [vmem:[%s3 + $0x120] sm:$0xff]
    %v2107 = vld [vmem:[%s3 + $0x128] sm:$0xff]
    %v2108 = vld [vmem:[%s3 + $0x130] sm:$0xff]
    %v2109 = vld [vmem:[%s3 + $0x138] sm:$0xff]
    %v2110 = vld [vmem:[%s3 + $0x140] sm:$0xff]
    %v2111 = vld [vmem:[%s3 + $0x148] sm:$0xff]
    %v2112 = vld [vmem:[%s3 + $0x150] sm:$0xff]
    %v2113 = vld [vmem:[%s3 + $0x158] sm:$0xff]
    %v2114 = vld [vmem:[%s3 + $0x160] sm:$0xff]
    %v2115 = vld [vmem:[%s3 + $0x168] sm:$0xff]
    %v2116 = vld [vmem:[%s3 + $0x170] sm:$0xff]
    %v2117 = vld [vmem:[%s3 + $0x178] sm:$0xff]
    %v2118 = vld [vmem:[%s3 + $0x180] sm:$0xff]
    %v2119 = vld [vmem:[%s3 + $0x188] sm:$0xff]
    %v2120 = vld [vmem:[%s3 + $0x190] sm:$0xff]
    %v2121 = vld [vmem:[%s3 + $0x198] sm:$0xff]
    %v2122 = vld [vmem:[%s3 + $0x1a0] sm:$0xff]
    %v2123 = vld [vmem:[%s3 + $0x1a8] sm:$0xff]
    %v2124 = vld [vmem:[%s3 + $0x1b0] sm:$0xff]
    %v2125 = vld [vmem:[%s3 + $0x1b8] sm:$0xff]
    %v2126 = vld [vmem:[%s3 + $0x1c0] sm:$0xff]
    %v2127 = vld [vmem:[%s3 + $0x1c8] sm:$0xff]
    %v2128 = vld [vmem:[%s3 + $0x1d0] sm:$0xff]
    %v2129 = vld [vmem:[%s3 + $0x1d8] sm:$0xff]
    %v2130 = vld [vmem:[%s3 + $0x1e0] sm:$0xff]
    %v2131 = vld [vmem:[%s3 + $0x1e8] sm:$0xff]
    %v2132 = vld [vmem:[%s3 + $0x1f0] sm:$0xff]
    %v2133 = vld [vmem:[%s3 + $0x1f8] sm:$0xff]
    %2134 = vmatpush.msra.mxu0 %v2085
    %2135 = vmatpush.msra.mxu0 %v2084
    %2136 = vmatpush.msra.mxu0 %v2083
    %2137 = vmatpush.msra.mxu0 %v2082
    %2138 = vmatpush.msra.mxu0 %v2081
    %2139 = vmatpush.msra.mxu0 %v2080
    %2140 = vmatpush.msra.mxu0 %v2079
    %2141 = vmatpush.msra.mxu0 %v2078
    %2142 = vmatpush.msra.mxu0 %v2077
    %2143 = vmatpush.msra.mxu0 %v2076
    %2144 = vmatpush.msra.mxu0 %v2075
    %2145 = vmatpush.msra.mxu0 %v2074
    %2146 = vmatpush.msra.mxu0 %v2073
    %2147 = vmatpush.msra.mxu0 %v2072
    %2148 = vmatpush.msra.mxu0 %v2071
    %2149 = vmatpush.msra.mxu0 %v2070
    %2150 = vmatmul.f32.gmra.mxu0 %v2066
    %v2151 = vpop.f32.mrf.mxu0
    %v2152 = vadd.f32 0.0, %v2151
    %2153 = vdwg.mxu0
    %2154 = vmatpush.msra.mxu0 %v2101
    %2155 = vmatpush.msra.mxu0 %v2100
    %2156 = vmatpush.msra.mxu0 %v2099
    %2157 = vmatpush.msra.mxu0 %v2098
    %2158 = vmatpush.msra.mxu0 %v2097
    %2159 = vmatpush.msra.mxu0 %v2096
    %2160 = vmatpush.msra.mxu0 %v2095
    %2161 = vmatpush.msra.mxu0 %v2094
    %2162 = vmatpush.msra.mxu0 %v2093
    %2163 = vmatpush.msra.mxu0 %v2092
    %2164 = vmatpush.msra.mxu0 %v2091
    %2165 = vmatpush.msra.mxu0 %v2090
    %2166 = vmatpush.msra.mxu0 %v2089
    %2167 = vmatpush.msra.mxu0 %v2088
    %2168 = vmatpush.msra.mxu0 %v2087
    %2169 = vmatpush.msra.mxu0 %v2086
    %2170 = vmatmul.f32.gmra.mxu0 %v2067
    %v2171 = vpop.f32.mrf.mxu0
    %v2172 = vadd.f32 %v2152, %v2171
    %2173 = vdwg.mxu0
    %2174 = vmatpush.msra.mxu0 %v2117
    %2175 = vmatpush.msra.mxu0 %v2116
    %2176 = vmatpush.msra.mxu0 %v2115
    %2177 = vmatpush.msra.mxu0 %v2114
    %2178 = vmatpush.msra.mxu0 %v2113
    %2179 = vmatpush.msra.mxu0 %v2112
    %2180 = vmatpush.msra.mxu0 %v2111
    %2181 = vmatpush.msra.mxu0 %v2110
    %2182 = vmatpush.msra.mxu0 %v2109
    %2183 = vmatpush.msra.mxu0 %v2108
    %2184 = vmatpush.msra.mxu0 %v2107
    %2185 = vmatpush.msra.mxu0 %v2106
    %2186 = vmatpush.msra.mxu0 %v2105
    %2187 = vmatpush.msra.mxu0 %v2104
    %2188 = vmatpush.msra.mxu0 %v2103
    %2189 = vmatpush.msra.mxu0 %v2102
    %2190 = vmatmul.f32.gmra.mxu0 %v2068
    %v2191 = vpop.f32.mrf.mxu0
    %v2192 = vadd.f32 %v2172, %v2191
    %2193 = vdwg.mxu0
    %2194 = vmatpush.msra.mxu0 %v2133
    %2195 = vmatpush.msra.mxu0 %v2132
    %2196 = vmatpush.msra.mxu0 %v2131
    %2197 = vmatpush.msra.mxu0 %v2130
    %2198 = vmatpush.msra.mxu0 %v2129
    %2199 = vmatpush.msra.mxu0 %v2128
    %2200 = vmatpush.msra.mxu0 %v2127
    %2201 = vmatpush.msra.mxu0 %v2126
    %2202 = vmatpush.msra.mxu0 %v2125
    %2203 = vmatpush.msra.mxu0 %v2124
    %2204 = vmatpush.msra.mxu0 %v2123
    %2205 = vmatpush.msra.mxu0 %v2122
    %2206 = vmatpush.msra.mxu0 %v2121
    %2207 = vmatpush.msra.mxu0 %v2120
    %2208 = vmatpush.msra.mxu0 %v2119
    %2209 = vmatpush.msra.mxu0 %v2118
    %2210 = vmatmul.f32.gmra.mxu0 %v2069
    %v2211 = vpop.f32.mrf.mxu0
    %v2212 = vadd.f32 %v2192, %v2211
    %2213 = vdwg.mxu0
    %v2214 = vld [vmem:[%s4] sm:$0xff]
    %v2215 = vld [vmem:[%s4 + $0x8] sm:$0xff]
    %v2216 = vld [vmem:[%s4 + $0x10] sm:$0xff]
    %v2217 = vld [vmem:[%s4 + $0x18] sm:$0xff]
    %vm2218 = vcmask 64512
    %v2220 = vsel %vm2218, %v2212, 0
    %2222 = vmatpush.msra.mxu0 0.0
    %2223 = vmatpush.msra.mxu0 0.0
    %2224 = vmatpush.msra.mxu0 0.0
    %2225 = vmatpush.msra.mxu0 0.0
    %2226 = vmatpush.msra.mxu0 0.0
    %2227 = vmatpush.msra.mxu0 0.0
    %2228 = vmatpush.msra.mxu0 0.0
    %2229 = vmatpush.msra.mxu0 0.0
    %2230 = vmatpush.msra.mxu0 0.0
    %2231 = vmatpush.msra.mxu0 0.0
    %2232 = vmatpush.msra.mxu0 0.0
    %2233 = vmatpush.msra.mxu0 0.0
    %2234 = vmatpush.msra.mxu0 0.0
    %2235 = vmatpush.msra.mxu0 0.0
    %2236 = vmatpush.msra.mxu0 0.0
    %2237 = vmatpush.msra.mxu0 %v2214
    %2238 = vmatmul.f32.gmra.mxu0 %v2220
    %v2239 = vpop.f32.mrf.mxu0
    %v2240 = vadd.f32 0.0, %v2239
    %2241 = vdwg.mxu0
    %2242 = vmatpush.msra.mxu0 0.0
    %2243 = vmatpush.msra.mxu0 0.0
    %2244 = vmatpush.msra.mxu0 0.0
    %2245 = vmatpush.msra.mxu0 0.0
    %2246 = vmatpush.msra.mxu0 0.0
    %2247 = vmatpush.msra.mxu0 0.0
    %2248 = vmatpush.msra.mxu0 0.0
    %2249 = vmatpush.msra.mxu0 0.0
    %2250 = vmatpush.msra.mxu0 0.0
    %2251 = vmatpush.msra.mxu0 0.0
    %2252 = vmatpush.msra.mxu0 0.0
    %2253 = vmatpush.msra.mxu0 0.0
    %2254 = vmatpush.msra.mxu0 0.0
    %2255 = vmatpush.msra.mxu0 0.0
    %2256 = vmatpush.msra.mxu0 0.0
    %2257 = vmatpush.msra.mxu0 %v2215
    %2258 = vmatmul.f32.gmra.mxu0 %v2220
    %v2259 = vpop.f32.mrf.mxu0
    %v2260 = vadd.f32 0.0, %v2259
    %2261 = vdwg.mxu0
    %2262 = vmatpush.msra.mxu0 0.0
    %2263 = vmatpush.msra.mxu0 0.0
    %2264 = vmatpush.msra.mxu0 0.0
    %2265 = vmatpush.msra.mxu0 0.0
    %2266 = vmatpush.msra.mxu0 0.0
    %2267 = vmatpush.msra.mxu0 0.0
    %2268 = vmatpush.msra.mxu0 0.0
    %2269 = vmatpush.msra.mxu0 0.0
    %2270 = vmatpush.msra.mxu0 0.0
    %2271 = vmatpush.msra.mxu0 0.0
    %2272 = vmatpush.msra.mxu0 0.0
    %2273 = vmatpush.msra.mxu0 0.0
    %2274 = vmatpush.msra.mxu0 0.0
    %2275 = vmatpush.msra.mxu0 0.0
    %2276 = vmatpush.msra.mxu0 0.0
    %2277 = vmatpush.msra.mxu0 %v2216
    %2278 = vmatmul.f32.gmra.mxu0 %v2220
    %v2279 = vpop.f32.mrf.mxu0
    %v2280 = vadd.f32 0.0, %v2279
    %2281 = vdwg.mxu0
    %2282 = vmatpush.msra.mxu0 0.0
    %2283 = vmatpush.msra.mxu0 0.0
    %2284 = vmatpush.msra.mxu0 0.0
    %2285 = vmatpush.msra.mxu0 0.0
    %2286 = vmatpush.msra.mxu0 0.0
    %2287 = vmatpush.msra.mxu0 0.0
    %2288 = vmatpush.msra.mxu0 0.0
    %2289 = vmatpush.msra.mxu0 0.0
    %2290 = vmatpush.msra.mxu0 0.0
    %2291 = vmatpush.msra.mxu0 0.0
    %2292 = vmatpush.msra.mxu0 0.0
    %2293 = vmatpush.msra.mxu0 0.0
    %2294 = vmatpush.msra.mxu0 0.0
    %2295 = vmatpush.msra.mxu0 0.0
    %2296 = vmatpush.msra.mxu0 0.0
    %2297 = vmatpush.msra.mxu0 %v2217
    %2298 = vmatmul.f32.gmra.mxu0 %v2220
    %v2299 = vpop.f32.mrf.mxu0
    %v2300 = vadd.f32 0.0, %v2299
    %2301 = vdwg.mxu0
    %v2302 = vsub.f32 %v2066, %v2240
    %v2303 = vsub.f32 %v2067, %v2260
    %v2304 = vsub.f32 %v2068, %v2280
    %v2305 = vsub.f32 %v2069, %v2300
    %v2306 = vmul.f32 %v2302, %v2302
    %v2307 = vmul.f32 %v2303, %v2303
    %v2308 = vmul.f32 %v2304, %v2304
    %v2309 = vmul.f32 %v2305, %v2305
    %2310 = vmatpush.msra.mxu0 %v2085
    %2311 = vmatpush.msra.mxu0 %v2084
    %2312 = vmatpush.msra.mxu0 %v2083
    %2313 = vmatpush.msra.mxu0 %v2082
    %2314 = vmatpush.msra.mxu0 %v2081
    %2315 = vmatpush.msra.mxu0 %v2080
    %2316 = vmatpush.msra.mxu0 %v2079
    %2317 = vmatpush.msra.mxu0 %v2078
    %2318 = vmatpush.msra.mxu0 %v2077
    %2319 = vmatpush.msra.mxu0 %v2076
    %2320 = vmatpush.msra.mxu0 %v2075
    %2321 = vmatpush.msra.mxu0 %v2074
    %2322 = vmatpush.msra.mxu0 %v2073
    %2323 = vmatpush.msra.mxu0 %v2072
    %2324 = vmatpush.msra.mxu0 %v2071
    %2325 = vmatpush.msra.mxu0 %v2070
    %2326 = vmatmul.f32.gmra.mxu0 %v2306
    %v2327 = vpop.f32.mrf.mxu0
    %v2328 = vadd.f32 1e-05, %v2327
    %2329 = vdwg.mxu0
    %2330 = vmatpush.msra.mxu0 %v2101
    %2331 = vmatpush.msra.mxu0 %v2100
    %2332 = vmatpush.msra.mxu0 %v2099
    %2333 = vmatpush.msra.mxu0 %v2098
    %2334 = vmatpush.msra.mxu0 %v2097
    %2335 = vmatpush.msra.mxu0 %v2096
    %2336 = vmatpush.msra.mxu0 %v2095
    %2337 = vmatpush.msra.mxu0 %v2094
    %2338 = vmatpush.msra.mxu0 %v2093
    %2339 = vmatpush.msra.mxu0 %v2092
    %2340 = vmatpush.msra.mxu0 %v2091
    %2341 = vmatpush.msra.mxu0 %v2090
    %2342 = vmatpush.msra.mxu0 %v2089
    %2343 = vmatpush.msra.mxu0 %v2088
    %2344 = vmatpush.msra.mxu0 %v2087
    %2345 = vmatpush.msra.mxu0 %v2086
    %2346 = vmatmul.f32.gmra.mxu0 %v2307
    %v2347 = vpop.f32.mrf.mxu0
    %v2348 = vadd.f32 %v2328, %v2347
    %2349 = vdwg.mxu0
    %2350 = vmatpush.msra.mxu0 %v2117
    %2351 = vmatpush.msra.mxu0 %v2116
    %2352 = vmatpush.msra.mxu0 %v2115
    %2353 = vmatpush.msra.mxu0 %v2114
    %2354 = vmatpush.msra.mxu0 %v2113
    %2355 = vmatpush.msra.mxu0 %v2112
    %2356 = vmatpush.msra.mxu0 %v2111
    %2357 = vmatpush.msra.mxu0 %v2110
    %2358 = vmatpush.msra.mxu0 %v2109
    %2359 = vmatpush.msra.mxu0 %v2108
    %2360 = vmatpush.msra.mxu0 %v2107
    %2361 = vmatpush.msra.mxu0 %v2106
    %2362 = vmatpush.msra.mxu0 %v2105
    %2363 = vmatpush.msra.mxu0 %v2104
    %2364 = vmatpush.msra.mxu0 %v2103
    %2365 = vmatpush.msra.mxu0 %v2102
    %2366 = vmatmul.f32.gmra.mxu0 %v2308
    %v2367 = vpop.f32.mrf.mxu0
    %v2368 = vadd.f32 %v2348, %v2367
    %2369 = vdwg.mxu0
    %2370 = vmatpush.msra.mxu0 %v2133
    %2371 = vmatpush.msra.mxu0 %v2132
    %2372 = vmatpush.msra.mxu0 %v2131
    %2373 = vmatpush.msra.mxu0 %v2130
    %2374 = vmatpush.msra.mxu0 %v2129
    %2375 = vmatpush.msra.mxu0 %v2128
    %2376 = vmatpush.msra.mxu0 %v2127
    %2377 = vmatpush.msra.mxu0 %v2126
    %2378 = vmatpush.msra.mxu0 %v2125
    %2379 = vmatpush.msra.mxu0 %v2124
    %2380 = vmatpush.msra.mxu0 %v2123
    %2381 = vmatpush.msra.mxu0 %v2122
    %2382 = vmatpush.msra.mxu0 %v2121
    %2383 = vmatpush.msra.mxu0 %v2120
    %2384 = vmatpush.msra.mxu0 %v2119
    %2385 = vmatpush.msra.mxu0 %v2118
    %2386 = vmatmul.f32.gmra.mxu0 %v2309
    %v2387 = vpop.f32.mrf.mxu0
    %v2388 = vadd.f32 %v2368, %v2387
    %2389 = vdwg.mxu0
    %v2390 = vrsqrt.pop %v2388
    %v2391 = vmul.f32 %v2390, %v2388
    %v2392 = vmul.f32 %v2391, %v2390
    %v2393 = vmul.f32 0.5, %v2392
    %v2394 = vsub.f32 1.5, %v2393
    %v2395 = vmul.f32 %v2390, %v2394
    %vm2396 = vweird.f32 %v2388
    %vm2397 = vweird.f32 %v2390
    %vm2398 = vmor %vm2396, %vm2397
    %v2399 = vsel %vm2398, %v2390, %v2395
    %v2401 = vsel %vm2218, %v2399, 0
    %2403 = vmatpush.msra.mxu0 0.0
    %2404 = vmatpush.msra.mxu0 0.0
    %2405 = vmatpush.msra.mxu0 0.0
    %2406 = vmatpush.msra.mxu0 0.0
    %2407 = vmatpush.msra.mxu0 0.0
    %2408 = vmatpush.msra.mxu0 0.0
    %2409 = vmatpush.msra.mxu0 0.0
    %2410 = vmatpush.msra.mxu0 0.0
    %2411 = vmatpush.msra.mxu0 0.0
    %2412 = vmatpush.msra.mxu0 0.0
    %2413 = vmatpush.msra.mxu0 0.0
    %2414 = vmatpush.msra.mxu0 0.0
    %2415 = vmatpush.msra.mxu0 0.0
    %2416 = vmatpush.msra.mxu0 0.0
    %2417 = vmatpush.msra.mxu0 0.0
    %2418 = vmatpush.msra.mxu0 %v2214
    %2419 = vmatmul.f32.gmra.mxu0 %v2401
    %v2420 = vpop.f32.mrf.mxu0
    %v2421 = vadd.f32 0.0, %v2420
    %2422 = vdwg.mxu0
    %2423 = vmatpush.msra.mxu0 0.0
    %2424 = vmatpush.msra.mxu0 0.0
    %2425 = vmatpush.msra.mxu0 0.0
    %2426 = vmatpush.msra.mxu0 0.0
    %2427 = vmatpush.msra.mxu0 0.0
    %2428 = vmatpush.msra.mxu0 0.0
    %2429 = vmatpush.msra.mxu0 0.0
    %2430 = vmatpush.msra.mxu0 0.0
    %2431 = vmatpush.msra.mxu0 0.0
    %2432 = vmatpush.msra.mxu0 0.0
    %2433 = vmatpush.msra.mxu0 0.0
    %2434 = vmatpush.msra.mxu0 0.0
    %2435 = vmatpush.msra.mxu0 0.0
    %2436 = vmatpush.msra.mxu0 0.0
    %2437 = vmatpush.msra.mxu0 0.0
    %2438 = vmatpush.msra.mxu0 %v2215
    %2439 = vmatmul.f32.gmra.mxu0 %v2401
    %v2440 = vpop.f32.mrf.mxu0
    %v2441 = vadd.f32 0.0, %v2440
    %2442 = vdwg.mxu0
    %2443 = vmatpush.msra.mxu0 0.0
    %2444 = vmatpush.msra.mxu0 0.0
    %2445 = vmatpush.msra.mxu0 0.0
    %2446 = vmatpush.msra.mxu0 0.0
    %2447 = vmatpush.msra.mxu0 0.0
    %2448 = vmatpush.msra.mxu0 0.0
    %2449 = vmatpush.msra.mxu0 0.0
    %2450 = vmatpush.msra.mxu0 0.0
    %2451 = vmatpush.msra.mxu0 0.0
    %2452 = vmatpush.msra.mxu0 0.0
    %2453 = vmatpush.msra.mxu0 0.0
    %2454 = vmatpush.msra.mxu0 0.0
    %2455 = vmatpush.msra.mxu0 0.0
    %2456 = vmatpush.msra.mxu0 0.0
    %2457 = vmatpush.msra.mxu0 0.0
    %2458 = vmatpush.msra.mxu0 %v2216
    %2459 = vmatmul.f32.gmra.mxu0 %v2401
    %v2460 = vpop.f32.mrf.mxu0
    %v2461 = vadd.f32 0.0, %v2460
    %2462 = vdwg.mxu0
    %2463 = vmatpush.msra.mxu0 0.0
    %2464 = vmatpush.msra.mxu0 0.0
    %2465 = vmatpush.msra.mxu0 0.0
    %2466 = vmatpush.msra.mxu0 0.0
    %2467 = vmatpush.msra.mxu0 0.0
    %2468 = vmatpush.msra.mxu0 0.0
    %2469 = vmatpush.msra.mxu0 0.0
    %2470 = vmatpush.msra.mxu0 0.0
    %2471 = vmatpush.msra.mxu0 0.0
    %2472 = vmatpush.msra.mxu0 0.0
    %2473 = vmatpush.msra.mxu0 0.0
    %2474 = vmatpush.msra.mxu0 0.0
    %2475 = vmatpush.msra.mxu0 0.0
    %2476 = vmatpush.msra.mxu0 0.0
    %2477 = vmatpush.msra.mxu0 0.0
    %2478 = vmatpush.msra.mxu0 %v2217
    %2479 = vmatmul.f32.gmra.mxu0 %v2401
    %v2480 = vpop.f32.mrf.mxu0
    %v2481 = vadd.f32 0.0, %v2480
    %2482 = vdwg.mxu0
    %v2483 = vmul.f32 %v2302, %v2421
    %v2484 = vmul.f32 %v2303, %v2441
    %v2485 = vmul.f32 %v2304, %v2461
    %v2486 = vmul.f32 %v2305, %v2481
    %v2487 = vpack.c.bf16 %v2483, %v2483
    %v2488 = vpack.c.bf16 %v2484, %v2484
    %v2489 = vpack.c.bf16 %v2485, %v2485
    %v2490 = vpack.c.bf16 %v2486, %v2486
    %v2491 = vld [vmem:[%s5] sm:$0xff]
    %v2492 = vld [vmem:[%s5 + $0x8] sm:$0xff]
    %v2493 = vld [vmem:[%s5 + $0x10] sm:$0xff]
    %v2494 = vld [vmem:[%s5 + $0x18] sm:$0xff]
    %v2495 = vld [vmem:[%s5 + $0x20] sm:$0xff]
    %v2496 = vld [vmem:[%s5 + $0x28] sm:$0xff]
    %v2497 = vld [vmem:[%s5 + $0x30] sm:$0xff]
    %v2498 = vld [vmem:[%s5 + $0x38] sm:$0xff]
    %v2499 = vld [vmem:[%s5 + $0x40] sm:$0xff]
    %v2500 = vld [vmem:[%s5 + $0x48] sm:$0xff]
    %v2501 = vld [vmem:[%s5 + $0x50] sm:$0xff]
    %v2502 = vld [vmem:[%s5 + $0x58] sm:$0xff]
    %v2503 = vld [vmem:[%s5 + $0x60] sm:$0xff]
    %v2504 = vld [vmem:[%s5 + $0x68] sm:$0xff]
    %v2505 = vld [vmem:[%s5 + $0x70] sm:$0xff]
    %v2506 = vld [vmem:[%s5 + $0x78] sm:$0xff]
    %v2507 = vld [vmem:[%s5 + $0x80] sm:$0xff]
    %v2508 = vld [vmem:[%s5 + $0x88] sm:$0xff]
    %v2509 = vld [vmem:[%s5 + $0x90] sm:$0xff]
    %v2510 = vld [vmem:[%s5 + $0x98] sm:$0xff]
    %v2511 = vld [vmem:[%s5 + $0xa0] sm:$0xff]
    %v2512 = vld [vmem:[%s5 + $0xa8] sm:$0xff]
    %v2513 = vld [vmem:[%s5 + $0xb0] sm:$0xff]
    %v2514 = vld [vmem:[%s5 + $0xb8] sm:$0xff]
    %v2515 = vld [vmem:[%s5 + $0xc0] sm:$0xff]
    %v2516 = vld [vmem:[%s5 + $0xc8] sm:$0xff]
    %v2517 = vld [vmem:[%s5 + $0xd0] sm:$0xff]
    %v2518 = vld [vmem:[%s5 + $0xd8] sm:$0xff]
    %v2519 = vld [vmem:[%s5 + $0xe0] sm:$0xff]
    %v2520 = vld [vmem:[%s5 + $0xe8] sm:$0xff]
    %v2521 = vld [vmem:[%s5 + $0xf0] sm:$0xff]
    %v2522 = vld [vmem:[%s5 + $0xf8] sm:$0xff]
    %v2523 = vld [vmem:[%s5 + $0x100] sm:$0xff]
    %v2524 = vld [vmem:[%s5 + $0x108] sm:$0xff]
    %v2525 = vld [vmem:[%s5 + $0x110] sm:$0xff]
    %v2526 = vld [vmem:[%s5 + $0x118] sm:$0xff]
    %v2527 = vld [vmem:[%s5 + $0x120] sm:$0xff]
    %v2528 = vld [vmem:[%s5 + $0x128] sm:$0xff]
    %v2529 = vld [vmem:[%s5 + $0x130] sm:$0xff]
    %v2530 = vld [vmem:[%s5 + $0x138] sm:$0xff]
    %v2531 = vld [vmem:[%s5 + $0x140] sm:$0xff]
    %v2532 = vld [vmem:[%s5 + $0x148] sm:$0xff]
    %v2533 = vld [vmem:[%s5 + $0x150] sm:$0xff]
    %v2534 = vld [vmem:[%s5 + $0x158] sm:$0xff]
    %v2535 = vld [vmem:[%s5 + $0x160] sm:$0xff]
    %v2536 = vld [vmem:[%s5 + $0x168] sm:$0xff]
    %v2537 = vld [vmem:[%s5 + $0x170] sm:$0xff]
    %v2538 = vld [vmem:[%s5 + $0x178] sm:$0xff]
    %v2539 = vld [vmem:[%s5 + $0x180] sm:$0xff]
    %v2540 = vld [vmem:[%s5 + $0x188] sm:$0xff]
    %v2541 = vld [vmem:[%s5 + $0x190] sm:$0xff]
    %v2542 = vld [vmem:[%s5 + $0x198] sm:$0xff]
    %v2543 = vld [vmem:[%s5 + $0x1a0] sm:$0xff]
    %v2544 = vld [vmem:[%s5 + $0x1a8] sm:$0xff]
    %v2545 = vld [vmem:[%s5 + $0x1b0] sm:$0xff]
    %v2546 = vld [vmem:[%s5 + $0x1b8] sm:$0xff]
    %v2547 = vld [vmem:[%s5 + $0x1c0] sm:$0xff]
    %v2548 = vld [vmem:[%s5 + $0x1c8] sm:$0xff]
    %v2549 = vld [vmem:[%s5 + $0x1d0] sm:$0xff]
    %v2550 = vld [vmem:[%s5 + $0x1d8] sm:$0xff]
    %v2551 = vld [vmem:[%s5 + $0x1e0] sm:$0xff]
    %v2552 = vld [vmem:[%s5 + $0x1e8] sm:$0xff]
    %v2553 = vld [vmem:[%s5 + $0x1f0] sm:$0xff]
    %v2554 = vld [vmem:[%s5 + $0x1f8] sm:$0xff]
    %v2555 = vld [vmem:[%s6] sm:$0x3]
    %v2557 = vperm.slane %v2555, 0
    %v2558 = vperm.slane %v2555, 1
    %v2625 = vunpack.c.l.b16 %v2491
    %v2626 = vunpack.c.h.b16 %v2491
    %v2627 = vunpack.c.l.b16 %v2492
    %v2628 = vunpack.c.h.b16 %v2492
    %v2629 = vunpack.c.l.b16 %v2493
    %v2630 = vunpack.c.h.b16 %v2493
    %v2631 = vunpack.c.l.b16 %v2494
    %v2632 = vunpack.c.h.b16 %v2494
    %v2633 = vunpack.c.l.b16 %v2495
    %v2634 = vunpack.c.h.b16 %v2495
    %v2635 = vunpack.c.l.b16 %v2496
    %v2636 = vunpack.c.h.b16 %v2496
    %v2637 = vunpack.c.l.b16 %v2497
    %v2638 = vunpack.c.h.b16 %v2497
    %v2639 = vunpack.c.l.b16 %v2498
    %v2640 = vunpack.c.h.b16 %v2498
    %v2641 = vunpack.c.l.b16 %v2499
    %v2642 = vunpack.c.h.b16 %v2499
    %v2643 = vunpack.c.l.b16 %v2500
    %v2644 = vunpack.c.h.b16 %v2500
    %v2645 = vunpack.c.l.b16 %v2501
    %v2646 = vunpack.c.h.b16 %v2501
    %v2647 = vunpack.c.l.b16 %v2502
    %v2648 = vunpack.c.h.b16 %v2502
    %v2649 = vunpack.c.l.b16 %v2503
    %v2650 = vunpack.c.h.b16 %v2503
    %v2651 = vunpack.c.l.b16 %v2504
    %v2652 = vunpack.c.h.b16 %v2504
    %v2653 = vunpack.c.l.b16 %v2505
    %v2654 = vunpack.c.h.b16 %v2505
    %v2655 = vunpack.c.l.b16 %v2506
    %v2656 = vunpack.c.h.b16 %v2506
    %v2657 = vunpack.c.l.b16 %v2507
    %v2658 = vunpack.c.h.b16 %v2507
    %v2659 = vunpack.c.l.b16 %v2508
    %v2660 = vunpack.c.h.b16 %v2508
    %v2661 = vunpack.c.l.b16 %v2509
    %v2662 = vunpack.c.h.b16 %v2509
    %v2663 = vunpack.c.l.b16 %v2510
    %v2664 = vunpack.c.h.b16 %v2510
    %v2665 = vunpack.c.l.b16 %v2511
    %v2666 = vunpack.c.h.b16 %v2511
    %v2667 = vunpack.c.l.b16 %v2512
    %v2668 = vunpack.c.h.b16 %v2512
    %v2669 = vunpack.c.l.b16 %v2513
    %v2670 = vunpack.c.h.b16 %v2513
    %v2671 = vunpack.c.l.b16 %v2514
    %v2672 = vunpack.c.h.b16 %v2514
    %v2673 = vunpack.c.l.b16 %v2515
    %v2674 = vunpack.c.h.b16 %v2515
    %v2675 = vunpack.c.l.b16 %v2516
    %v2676 = vunpack.c.h.b16 %v2516
    %v2677 = vunpack.c.l.b16 %v2517
    %v2678 = vunpack.c.h.b16 %v2517
    %v2679 = vunpack.c.l.b16 %v2518
    %v2680 = vunpack.c.h.b16 %v2518
    %v2681 = vunpack.c.l.b16 %v2519
    %v2682 = vunpack.c.h.b16 %v2519
    %v2683 = vunpack.c.l.b16 %v2520
    %v2684 = vunpack.c.h.b16 %v2520
    %v2685 = vunpack.c.l.b16 %v2521
    %v2686 = vunpack.c.h.b16 %v2521
    %v2687 = vunpack.c.l.b16 %v2522
    %v2688 = vunpack.c.h.b16 %v2522
    %v2689 = vunpack.c.l.b16 %v2523
    %v2690 = vunpack.c.h.b16 %v2523
    %v2691 = vunpack.c.l.b16 %v2524
    %v2692 = vunpack.c.h.b16 %v2524
    %v2693 = vunpack.c.l.b16 %v2525
    %v2694 = vunpack.c.h.b16 %v2525
    %v2695 = vunpack.c.l.b16 %v2526
    %v2696 = vunpack.c.h.b16 %v2526
    %v2697 = vunpack.c.l.b16 %v2527
    %v2698 = vunpack.c.h.b16 %v2527
    %v2699 = vunpack.c.l.b16 %v2528
    %v2700 = vunpack.c.h.b16 %v2528
    %v2701 = vunpack.c.l.b16 %v2529
    %v2702 = vunpack.c.h.b16 %v2529
    %v2703 = vunpack.c.l.b16 %v2530
    %v2704 = vunpack.c.h.b16 %v2530
    %v2705 = vunpack.c.l.b16 %v2531
    %v2706 = vunpack.c.h.b16 %v2531
    %v2707 = vunpack.c.l.b16 %v2532
    %v2708 = vunpack.c.h.b16 %v2532
    %v2709 = vunpack.c.l.b16 %v2533
    %v2710 = vunpack.c.h.b16 %v2533
    %v2711 = vunpack.c.l.b16 %v2534
    %v2712 = vunpack.c.h.b16 %v2534
    %v2713 = vunpack.c.l.b16 %v2535
    %v2714 = vunpack.c.h.b16 %v2535
    %v2715 = vunpack.c.l.b16 %v2536
    %v2716 = vunpack.c.h.b16 %v2536
    %v2717 = vunpack.c.l.b16 %v2537
    %v2718 = vunpack.c.h.b16 %v2537
    %v2719 = vunpack.c.l.b16 %v2538
    %v2720 = vunpack.c.h.b16 %v2538
    %v2721 = vunpack.c.l.b16 %v2539
    %v2722 = vunpack.c.h.b16 %v2539
    %v2723 = vunpack.c.l.b16 %v2540
    %v2724 = vunpack.c.h.b16 %v2540
    %v2725 = vunpack.c.l.b16 %v2541
    %v2726 = vunpack.c.h.b16 %v2541
    %v2727 = vunpack.c.l.b16 %v2542
    %v2728 = vunpack.c.h.b16 %v2542
    %v2729 = vunpack.c.l.b16 %v2543
    %v2730 = vunpack.c.h.b16 %v2543
    %v2731 = vunpack.c.l.b16 %v2544
    %v2732 = vunpack.c.h.b16 %v2544
    %v2733 = vunpack.c.l.b16 %v2545
    %v2734 = vunpack.c.h.b16 %v2545
    %v2735 = vunpack.c.l.b16 %v2546
    %v2736 = vunpack.c.h.b16 %v2546
    %v2737 = vunpack.c.l.b16 %v2547
    %v2738 = vunpack.c.h.b16 %v2547
    %v2739 = vunpack.c.l.b16 %v2548
    %v2740 = vunpack.c.h.b16 %v2548
    %v2741 = vunpack.c.l.b16 %v2549
    %v2742 = vunpack.c.h.b16 %v2549
    %v2743 = vunpack.c.l.b16 %v2550
    %v2744 = vunpack.c.h.b16 %v2550
    %v2745 = vunpack.c.l.b16 %v2551
    %v2746 = vunpack.c.h.b16 %v2551
    %v2747 = vunpack.c.l.b16 %v2552
    %v2748 = vunpack.c.h.b16 %v2552
    %v2749 = vunpack.c.l.b16 %v2553
    %v2750 = vunpack.c.h.b16 %v2553
    %v2751 = vunpack.c.l.b16 %v2554
    %v2752 = vunpack.c.h.b16 %v2554
    %v2753 = vpack.c.b16 %v2627, %v2625
    %v2754 = vpack.c.b16 %v2628, %v2626
    %v2755 = vpack.c.b16 %v2631, %v2629
    %v2756 = vpack.c.b16 %v2632, %v2630
    %v2757 = vpack.c.b16 %v2635, %v2633
    %v2758 = vpack.c.b16 %v2636, %v2634
    %v2759 = vpack.c.b16 %v2639, %v2637
    %v2760 = vpack.c.b16 %v2640, %v2638
    %v2761 = vpack.c.b16 %v2643, %v2641
    %v2762 = vpack.c.b16 %v2644, %v2642
    %v2763 = vpack.c.b16 %v2647, %v2645
    %v2764 = vpack.c.b16 %v2648, %v2646
    %v2765 = vpack.c.b16 %v2651, %v2649
    %v2766 = vpack.c.b16 %v2652, %v2650
    %v2767 = vpack.c.b16 %v2655, %v2653
    %v2768 = vpack.c.b16 %v2656, %v2654
    %v2769 = vpack.c.b16 %v2659, %v2657
    %v2770 = vpack.c.b16 %v2660, %v2658
    %v2771 = vpack.c.b16 %v2663, %v2661
    %v2772 = vpack.c.b16 %v2664, %v2662
    %v2773 = vpack.c.b16 %v2667, %v2665
    %v2774 = vpack.c.b16 %v2668, %v2666
    %v2775 = vpack.c.b16 %v2671, %v2669
    %v2776 = vpack.c.b16 %v2672, %v2670
    %v2777 = vpack.c.b16 %v2675, %v2673
    %v2778 = vpack.c.b16 %v2676, %v2674
    %v2779 = vpack.c.b16 %v2679, %v2677
    %v2780 = vpack.c.b16 %v2680, %v2678
    %v2781 = vpack.c.b16 %v2683, %v2681
    %v2782 = vpack.c.b16 %v2684, %v2682
    %v2783 = vpack.c.b16 %v2687, %v2685
    %v2784 = vpack.c.b16 %v2688, %v2686
    %v2785 = vpack.c.b16 %v2691, %v2689
    %v2786 = vpack.c.b16 %v2692, %v2690
    %v2787 = vpack.c.b16 %v2695, %v2693
    %v2788 = vpack.c.b16 %v2696, %v2694
    %v2789 = vpack.c.b16 %v2699, %v2697
    %v2790 = vpack.c.b16 %v2700, %v2698
    %v2791 = vpack.c.b16 %v2703, %v2701
    %v2792 = vpack.c.b16 %v2704, %v2702
    %v2793 = vpack.c.b16 %v2707, %v2705
    %v2794 = vpack.c.b16 %v2708, %v2706
    %v2795 = vpack.c.b16 %v2711, %v2709
    %v2796 = vpack.c.b16 %v2712, %v2710
    %v2797 = vpack.c.b16 %v2715, %v2713
    %v2798 = vpack.c.b16 %v2716, %v2714
    %v2799 = vpack.c.b16 %v2719, %v2717
    %v2800 = vpack.c.b16 %v2720, %v2718
    %v2801 = vpack.c.b16 %v2723, %v2721
    %v2802 = vpack.c.b16 %v2724, %v2722
    %v2803 = vpack.c.b16 %v2727, %v2725
    %v2804 = vpack.c.b16 %v2728, %v2726
    %v2805 = vpack.c.b16 %v2731, %v2729
    %v2806 = vpack.c.b16 %v2732, %v2730
    %v2807 = vpack.c.b16 %v2735, %v2733
    %v2808 = vpack.c.b16 %v2736, %v2734
    %v2809 = vpack.c.b16 %v2739, %v2737
    %v2810 = vpack.c.b16 %v2740, %v2738
    %v2811 = vpack.c.b16 %v2743, %v2741
    %v2812 = vpack.c.b16 %v2744, %v2742
    %v2813 = vpack.c.b16 %v2747, %v2745
    %v2814 = vpack.c.b16 %v2748, %v2746
    %v2815 = vpack.c.b16 %v2751, %v2749
    %v2816 = vpack.c.b16 %v2752, %v2750
    %2881 = vmatpush.bf16.msra.mxu0 %v2767
    %2882 = vmatpush.bf16.msra.mxu0 %v2765
    %2883 = vmatpush.bf16.msra.mxu0 %v2763
    %2884 = vmatpush.bf16.msra.mxu0 %v2761
    %2885 = vmatpush.bf16.msra.mxu0 %v2759
    %2886 = vmatpush.bf16.msra.mxu0 %v2757
    %2887 = vmatpush.bf16.msra.mxu0 %v2755
    %2888 = vmatpush.bf16.msra.mxu0 %v2753
    %2889 = vmatmul.bf16.gmra.mxu0 %v2487
    %v2890 = vpop.f32.mrf.mxu0
    %v2891 = vadd.f32 %v2557, %v2890
    %v2892 = vpop.f32.mrf.mxu0
    %2893 = vdwg.mxu0
    %2894 = vmatpush.bf16.msra.mxu0 %v2783
    %2895 = vmatpush.bf16.msra.mxu0 %v2781
    %2896 = vmatpush.bf16.msra.mxu0 %v2779
    %2897 = vmatpush.bf16.msra.mxu0 %v2777
    %2898 = vmatpush.bf16.msra.mxu0 %v2775
    %2899 = vmatpush.bf16.msra.mxu0 %v2773
    %2900 = vmatpush.bf16.msra.mxu0 %v2771
    %2901 = vmatpush.bf16.msra.mxu0 %v2769
    %2902 = vmatmul.bf16.gmra.mxu0 %v2488
    %v2903 = vpop.f32.mrf.mxu0
    %v2904 = vadd.f32 %v2891, %v2903
    %v2905 = vpop.f32.mrf.mxu0
    %2906 = vdwg.mxu0
    %2907 = vmatpush.bf16.msra.mxu0 %v2799
    %2908 = vmatpush.bf16.msra.mxu0 %v2797
    %2909 = vmatpush.bf16.msra.mxu0 %v2795
    %2910 = vmatpush.bf16.msra.mxu0 %v2793
    %2911 = vmatpush.bf16.msra.mxu0 %v2791
    %2912 = vmatpush.bf16.msra.mxu0 %v2789
    %2913 = vmatpush.bf16.msra.mxu0 %v2787
    %2914 = vmatpush.bf16.msra.mxu0 %v2785
    %2915 = vmatmul.bf16.gmra.mxu0 %v2489
    %v2916 = vpop.f32.mrf.mxu0
    %v2917 = vadd.f32 %v2904, %v2916
    %v2918 = vpop.f32.mrf.mxu0
    %2919 = vdwg.mxu0
    %2920 = vmatpush.bf16.msra.mxu0 %v2815
    %2921 = vmatpush.bf16.msra.mxu0 %v2813
    %2922 = vmatpush.bf16.msra.mxu0 %v2811
    %2923 = vmatpush.bf16.msra.mxu0 %v2809
    %2924 = vmatpush.bf16.msra.mxu0 %v2807
    %2925 = vmatpush.bf16.msra.mxu0 %v2805
    %2926 = vmatpush.bf16.msra.mxu0 %v2803
    %2927 = vmatpush.bf16.msra.mxu0 %v2801
    %2928 = vmatmul.bf16.gmra.mxu0 %v2490
    %v2929 = vpop.f32.mrf.mxu0
    %v2930 = vadd.f32 %v2917, %v2929
    %v2931 = vpop.f32.mrf.mxu0
    %2932 = vdwg.mxu0
    %2933 = vmatpush.bf16.msra.mxu0 %v2768
    %2934 = vmatpush.bf16.msra.mxu0 %v2766
    %2935 = vmatpush.bf16.msra.mxu0 %v2764
    %2936 = vmatpush.bf16.msra.mxu0 %v2762
    %2937 = vmatpush.bf16.msra.mxu0 %v2760
    %2938 = vmatpush.bf16.msra.mxu0 %v2758
    %2939 = vmatpush.bf16.msra.mxu0 %v2756
    %2940 = vmatpush.bf16.msra.mxu0 %v2754
    %2941 = vmatmul.bf16.gmra.mxu0 %v2487
    %v2942 = vpop.f32.mrf.mxu0
    %v2943 = vadd.f32 %v2558, %v2942
    %v2944 = vpop.f32.mrf.mxu0
    %2945 = vdwg.mxu0
    %2946 = vmatpush.bf16.msra.mxu0 %v2784
    %2947 = vmatpush.bf16.msra.mxu0 %v2782
    %2948 = vmatpush.bf16.msra.mxu0 %v2780
    %2949 = vmatpush.bf16.msra.mxu0 %v2778
    %2950 = vmatpush.bf16.msra.mxu0 %v2776
    %2951 = vmatpush.bf16.msra.mxu0 %v2774
    %2952 = vmatpush.bf16.msra.mxu0 %v2772
    %2953 = vmatpush.bf16.msra.mxu0 %v2770
    %2954 = vmatmul.bf16.gmra.mxu0 %v2488
    %v2955 = vpop.f32.mrf.mxu0
    %v2956 = vadd.f32 %v2943, %v2955
    %v2957 = vpop.f32.mrf.mxu0
    %2958 = vdwg.mxu0
    %2959 = vmatpush.bf16.msra.mxu0 %v2800
    %2960 = vmatpush.bf16.msra.mxu0 %v2798
    %2961 = vmatpush.bf16.msra.mxu0 %v2796
    %2962 = vmatpush.bf16.msra.mxu0 %v2794
    %2963 = vmatpush.bf16.msra.mxu0 %v2792
    %2964 = vmatpush.bf16.msra.mxu0 %v2790
    %2965 = vmatpush.bf16.msra.mxu0 %v2788
    %2966 = vmatpush.bf16.msra.mxu0 %v2786
    %2967 = vmatmul.bf16.gmra.mxu0 %v2489
    %v2968 = vpop.f32.mrf.mxu0
    %v2969 = vadd.f32 %v2956, %v2968
    %v2970 = vpop.f32.mrf.mxu0
    %2971 = vdwg.mxu0
    %2972 = vmatpush.bf16.msra.mxu0 %v2816
    %2973 = vmatpush.bf16.msra.mxu0 %v2814
    %2974 = vmatpush.bf16.msra.mxu0 %v2812
    %2975 = vmatpush.bf16.msra.mxu0 %v2810
    %2976 = vmatpush.bf16.msra.mxu0 %v2808
    %2977 = vmatpush.bf16.msra.mxu0 %v2806
    %2978 = vmatpush.bf16.msra.mxu0 %v2804
    %2979 = vmatpush.bf16.msra.mxu0 %v2802
    %2980 = vmatmul.bf16.gmra.mxu0 %v2490
    %v2981 = vpop.f32.mrf.mxu0
    %v2982 = vadd.f32 %v2969, %v2981
    %v2983 = vpop.f32.mrf.mxu0
    %2984 = vdwg.mxu0
    %v2985 = vmax.f32 %v2930, 0.0
    %v2986 = vmax.f32 %v2982, 0.0
    %v2987 = vld [vmem:[%s7] sm:$0xff]
    %v2988 = vld [vmem:[%s7 + $0x8] sm:$0xff]
    %v2989 = vld [vmem:[%s7 + $0x10] sm:$0xff]
    %v2990 = vld [vmem:[%s7 + $0x18] sm:$0xff]
    %v2991 = vld [vmem:[%s7 + $0x20] sm:$0xff]
    %v2992 = vld [vmem:[%s7 + $0x28] sm:$0xff]
    %v2993 = vld [vmem:[%s7 + $0x30] sm:$0xff]
    %v2994 = vld [vmem:[%s7 + $0x38] sm:$0xff]
    %v2995 = vld [vmem:[%s7 + $0x40] sm:$0xff]
    %v2996 = vld [vmem:[%s7 + $0x48] sm:$0xff]
    %v2997 = vld [vmem:[%s7 + $0x50] sm:$0xff]
    %v2998 = vld [vmem:[%s7 + $0x58] sm:$0xff]
    %v2999 = vld [vmem:[%s7 + $0x60] sm:$0xff]
    %v3000 = vld [vmem:[%s7 + $0x68] sm:$0xff]
    %v3001 = vld [vmem:[%s7 + $0x70] sm:$0xff]
    %v3002 = vld [vmem:[%s7 + $0x78] sm:$0xff]
    %v3003 = vld [vmem:[%s7 + $0x80] sm:$0xff]
    %v3004 = vld [vmem:[%s7 + $0x88] sm:$0xff]
    %v3005 = vld [vmem:[%s7 + $0x90] sm:$0xff]
    %v3006 = vld [vmem:[%s7 + $0x98] sm:$0xff]
    %v3007 = vld [vmem:[%s7 + $0xa0] sm:$0xff]
    %v3008 = vld [vmem:[%s7 + $0xa8] sm:$0xff]
    %v3009 = vld [vmem:[%s7 + $0xb0] sm:$0xff]
    %v3010 = vld [vmem:[%s7 + $0xb8] sm:$0xff]
    %v3011 = vld [vmem:[%s7 + $0xc0] sm:$0xff]
    %v3012 = vld [vmem:[%s7 + $0xc8] sm:$0xff]
    %v3013 = vld [vmem:[%s7 + $0xd0] sm:$0xff]
    %v3014 = vld [vmem:[%s7 + $0xd8] sm:$0xff]
    %v3015 = vld [vmem:[%s7 + $0xe0] sm:$0xff]
    %v3016 = vld [vmem:[%s7 + $0xe8] sm:$0xff]
    %v3017 = vld [vmem:[%s7 + $0xf0] sm:$0xff]
    %v3018 = vld [vmem:[%s7 + $0xf8] sm:$0xff]
    %3019 = vmatpush.msra.mxu0 %v3002
    %3020 = vmatpush.msra.mxu0 %v3001
    %3021 = vmatpush.msra.mxu0 %v3000
    %3022 = vmatpush.msra.mxu0 %v2999
    %3023 = vmatpush.msra.mxu0 %v2998
    %3024 = vmatpush.msra.mxu0 %v2997
    %3025 = vmatpush.msra.mxu0 %v2996
    %3026 = vmatpush.msra.mxu0 %v2995
    %3027 = vmatpush.msra.mxu0 %v2994
    %3028 = vmatpush.msra.mxu0 %v2993
    %3029 = vmatpush.msra.mxu0 %v2992
    %3030 = vmatpush.msra.mxu0 %v2991
    %3031 = vmatpush.msra.mxu0 %v2990
    %3032 = vmatpush.msra.mxu0 %v2989
    %3033 = vmatpush.msra.mxu0 %v2988
    %3034 = vmatpush.msra.mxu0 %v2987
    %3035 = vmatmul.f32.gmra.mxu0 %v2985
    %v3036 = vpop.f32.mrf.mxu0
    %v3037 = vadd.f32 0.0, %v3036
    %3038 = vdwg.mxu0
    %3039 = vmatpush.msra.mxu0 %v3018
    %3040 = vmatpush.msra.mxu0 %v3017
    %3041 = vmatpush.msra.mxu0 %v3016
    %3042 = vmatpush.msra.mxu0 %v3015
    %3043 = vmatpush.msra.mxu0 %v3014
    %3044 = vmatpush.msra.mxu0 %v3013
    %3045 = vmatpush.msra.mxu0 %v3012
    %3046 = vmatpush.msra.mxu0 %v3011
    %3047 = vmatpush.msra.mxu0 %v3010
    %3048 = vmatpush.msra.mxu0 %v3009
    %3049 = vmatpush.msra.mxu0 %v3008
    %3050 = vmatpush.msra.mxu0 %v3007
    %3051 = vmatpush.msra.mxu0 %v3006
    %3052 = vmatpush.msra.mxu0 %v3005
    %3053 = vmatpush.msra.mxu0 %v3004
    %3054 = vmatpush.msra.mxu0 %v3003
    %3055 = vmatmul.f32.gmra.mxu0 %v2986
    %v3056 = vpop.f32.mrf.mxu0
    %v3057 = vadd.f32 %v3037, %v3056
    %3058 = vdwg.mxu0
    %v3059 = vld [vmem:[%s8] sm:$0xff]
    %v3060 = vld [vmem:[%s8 + $0x8] sm:$0xff]
    %v3061 = vld [vmem:[%s8 + $0x10] sm:$0xff]
    %v3062 = vld [vmem:[%s8 + $0x18] sm:$0xff]
    %vm3063 = vcmask 130048
    %v3065 = vsel %vm3063, %v3057, 0
    %3067 = vmatpush.msra.mxu0 0.0
    %3068 = vmatpush.msra.mxu0 0.0
    %3069 = vmatpush.msra.mxu0 0.0
    %3070 = vmatpush.msra.mxu0 0.0
    %3071 = vmatpush.msra.mxu0 0.0
    %3072 = vmatpush.msra.mxu0 0.0
    %3073 = vmatpush.msra.mxu0 0.0
    %3074 = vmatpush.msra.mxu0 0.0
    %3075 = vmatpush.msra.mxu0 0.0
    %3076 = vmatpush.msra.mxu0 0.0
    %3077 = vmatpush.msra.mxu0 0.0
    %3078 = vmatpush.msra.mxu0 0.0
    %3079 = vmatpush.msra.mxu0 0.0
    %3080 = vmatpush.msra.mxu0 0.0
    %3081 = vmatpush.msra.mxu0 %v3061
    %3082 = vmatpush.msra.mxu0 %v3059
    %3083 = vmatmul.f32.gmra.mxu0 %v3065
    %v3084 = vpop.f32.mrf.mxu0
    %v3085 = vadd.f32 0.0, %v3084
    %3086 = vdwg.mxu0
    %3087 = vmatpush.msra.mxu0 0.0
    %3088 = vmatpush.msra.mxu0 0.0
    %3089 = vmatpush.msra.mxu0 0.0
    %3090 = vmatpush.msra.mxu0 0.0
    %3091 = vmatpush.msra.mxu0 0.0
    %3092 = vmatpush.msra.mxu0 0.0
    %3093 = vmatpush.msra.mxu0 0.0
    %3094 = vmatpush.msra.mxu0 0.0
    %3095 = vmatpush.msra.mxu0 0.0
    %3096 = vmatpush.msra.mxu0 0.0
    %3097 = vmatpush.msra.mxu0 0.0
    %3098 = vmatpush.msra.mxu0 0.0
    %3099 = vmatpush.msra.mxu0 0.0
    %3100 = vmatpush.msra.mxu0 0.0
    %3101 = vmatpush.msra.mxu0 %v3062
    %3102 = vmatpush.msra.mxu0 %v3060
    %3103 = vmatmul.f32.gmra.mxu0 %v3065
    %v3104 = vpop.f32.mrf.mxu0
    %v3105 = vadd.f32 0.0, %v3104
    %3106 = vdwg.mxu0
    %v3107 = vsub.f32 %v2985, %v3085
    %v3108 = vsub.f32 %v2986, %v3105
    %v3109 = vmul.f32 %v3107, %v3107
    %v3110 = vmul.f32 %v3108, %v3108
    %3111 = vmatpush.msra.mxu0 %v3002
    %3112 = vmatpush.msra.mxu0 %v3001
    %3113 = vmatpush.msra.mxu0 %v3000
    %3114 = vmatpush.msra.mxu0 %v2999
    %3115 = vmatpush.msra.mxu0 %v2998
    %3116 = vmatpush.msra.mxu0 %v2997
    %3117 = vmatpush.msra.mxu0 %v2996
    %3118 = vmatpush.msra.mxu0 %v2995
    %3119 = vmatpush.msra.mxu0 %v2994
    %3120 = vmatpush.msra.mxu0 %v2993
    %3121 = vmatpush.msra.mxu0 %v2992
    %3122 = vmatpush.msra.mxu0 %v2991
    %3123 = vmatpush.msra.mxu0 %v2990
    %3124 = vmatpush.msra.mxu0 %v2989
    %3125 = vmatpush.msra.mxu0 %v2988
    %3126 = vmatpush.msra.mxu0 %v2987
    %3127 = vmatmul.f32.gmra.mxu0 %v3109
    %v3128 = vpop.f32.mrf.mxu0
    %v3129 = vadd.f32 1e-05, %v3128
    %3130 = vdwg.mxu0
    %3131 = vmatpush.msra.mxu0 %v3018
    %3132 = vmatpush.msra.mxu0 %v3017
    %3133 = vmatpush.msra.mxu0 %v3016
    %3134 = vmatpush.msra.mxu0 %v3015
    %3135 = vmatpush.msra.mxu0 %v3014
    %3136 = vmatpush.msra.mxu0 %v3013
    %3137 = vmatpush.msra.mxu0 %v3012
    %3138 = vmatpush.msra.mxu0 %v3011
    %3139 = vmatpush.msra.mxu0 %v3010
    %3140 = vmatpush.msra.mxu0 %v3009
    %3141 = vmatpush.msra.mxu0 %v3008
    %3142 = vmatpush.msra.mxu0 %v3007
    %3143 = vmatpush.msra.mxu0 %v3006
    %3144 = vmatpush.msra.mxu0 %v3005
    %3145 = vmatpush.msra.mxu0 %v3004
    %3146 = vmatpush.msra.mxu0 %v3003
    %3147 = vmatmul.f32.gmra.mxu0 %v3110
    %v3148 = vpop.f32.mrf.mxu0
    %v3149 = vadd.f32 %v3129, %v3148
    %3150 = vdwg.mxu0
    %v3151 = vrsqrt.pop %v3149
    %v3152 = vmul.f32 %v3151, %v3149
    %v3153 = vmul.f32 %v3152, %v3151
    %v3154 = vmul.f32 0.5, %v3153
    %v3155 = vsub.f32 1.5, %v3154
    %v3156 = vmul.f32 %v3151, %v3155
    %vm3157 = vweird.f32 %v3149
    %vm3158 = vweird.f32 %v3151
    %vm3159 = vmor %vm3157, %vm3158
    %v3160 = vsel %vm3159, %v3151, %v3156
    %v3162 = vsel %vm3063, %v3160, 0
    %3164 = vmatpush.msra.mxu0 0.0
    %3165 = vmatpush.msra.mxu0 0.0
    %3166 = vmatpush.msra.mxu0 0.0
    %3167 = vmatpush.msra.mxu0 0.0
    %3168 = vmatpush.msra.mxu0 0.0
    %3169 = vmatpush.msra.mxu0 0.0
    %3170 = vmatpush.msra.mxu0 0.0
    %3171 = vmatpush.msra.mxu0 0.0
    %3172 = vmatpush.msra.mxu0 0.0
    %3173 = vmatpush.msra.mxu0 0.0
    %3174 = vmatpush.msra.mxu0 0.0
    %3175 = vmatpush.msra.mxu0 0.0
    %3176 = vmatpush.msra.mxu0 0.0
    %3177 = vmatpush.msra.mxu0 0.0
    %3178 = vmatpush.msra.mxu0 %v3061
    %3179 = vmatpush.msra.mxu0 %v3059
    %3180 = vmatmul.f32.gmra.mxu0 %v3162
    %v3181 = vpop.f32.mrf.mxu0
    %v3182 = vadd.f32 0.0, %v3181
    %3183 = vdwg.mxu0
    %3184 = vmatpush.msra.mxu0 0.0
    %3185 = vmatpush.msra.mxu0 0.0
    %3186 = vmatpush.msra.mxu0 0.0
    %3187 = vmatpush.msra.mxu0 0.0
    %3188 = vmatpush.msra.mxu0 0.0
    %3189 = vmatpush.msra.mxu0 0.0
    %3190 = vmatpush.msra.mxu0 0.0
    %3191 = vmatpush.msra.mxu0 0.0
    %3192 = vmatpush.msra.mxu0 0.0
    %3193 = vmatpush.msra.mxu0 0.0
    %3194 = vmatpush.msra.mxu0 0.0
    %3195 = vmatpush.msra.mxu0 0.0
    %3196 = vmatpush.msra.mxu0 0.0
    %3197 = vmatpush.msra.mxu0 0.0
    %3198 = vmatpush.msra.mxu0 %v3062
    %3199 = vmatpush.msra.mxu0 %v3060
    %3200 = vmatmul.f32.gmra.mxu0 %v3162
    %v3201 = vpop.f32.mrf.mxu0
    %v3202 = vadd.f32 0.0, %v3201
    %3203 = vdwg.mxu0
    %v3204 = vmul.f32 %v3107, %v3182
    %v3205 = vmul.f32 %v3108, %v3202
    %v3206 = vpack.c.bf16 %v3204, %v3204
    %v3207 = vpack.c.bf16 %v3205, %v3205
    %v3208 = vld [vmem:[%s9] sm:$0xf]
    %v3209 = vld [vmem:[%s9 + $0x4] sm:$0xf]
    %v3210 = vld [vmem:[%s9 + $0x8] sm:$0xf]
    %v3211 = vld [vmem:[%s9 + $0xc] sm:$0xf]
    %v3212 = vld [vmem:[%s9 + $0x10] sm:$0xf]
    %v3213 = vld [vmem:[%s9 + $0x14] sm:$0xf]
    %v3214 = vld [vmem:[%s9 + $0x18] sm:$0xf]
    %v3215 = vld [vmem:[%s9 + $0x1c] sm:$0xf]
    %v3216 = vld [vmem:[%s9 + $0x20] sm:$0xf]
    %v3217 = vld [vmem:[%s9 + $0x24] sm:$0xf]
    %v3218 = vld [vmem:[%s9 + $0x28] sm:$0xf]
    %v3219 = vld [vmem:[%s9 + $0x2c] sm:$0xf]
    %v3220 = vld [vmem:[%s9 + $0x30] sm:$0xf]
    %v3221 = vld [vmem:[%s9 + $0x34] sm:$0xf]
    %v3222 = vld [vmem:[%s9 + $0x38] sm:$0xf]
    %v3223 = vld [vmem:[%s9 + $0x3c] sm:$0xf]
    %v3224 = vld [vmem:[%s9 + $0x40] sm:$0xf]
    %v3225 = vld [vmem:[%s9 + $0x44] sm:$0xf]
    %v3226 = vld [vmem:[%s9 + $0x48] sm:$0xf]
    %v3227 = vld [vmem:[%s9 + $0x4c] sm:$0xf]
    %v3228 = vld [vmem:[%s9 + $0x50] sm:$0xf]
    %v3229 = vld [vmem:[%s9 + $0x54] sm:$0xf]
    %v3230 = vld [vmem:[%s9 + $0x58] sm:$0xf]
    %v3231 = vld [vmem:[%s9 + $0x5c] sm:$0xf]
    %v3232 = vld [vmem:[%s9 + $0x60] sm:$0xf]
    %v3233 = vld [vmem:[%s9 + $0x64] sm:$0xf]
    %v3234 = vld [vmem:[%s9 + $0x68] sm:$0xf]
    %v3235 = vld [vmem:[%s9 + $0x6c] sm:$0xf]
    %v3236 = vld [vmem:[%s9 + $0x70] sm:$0xf]
    %v3237 = vld [vmem:[%s9 + $0x74] sm:$0xf]
    %v3238 = vld [vmem:[%s9 + $0x78] sm:$0xf]
    %v3239 = vld [vmem:[%s9 + $0x7c] sm:$0xf]
    %v3240 = vld [vmem:[%s10] sm:$0x1]
    %v3242 = vperm.slane %v3240, 0
    %v3276 = vunpack.c.l.b16 %v3208
    %v3277 = vunpack.c.l.b16 %v3209
    %v3278 = vunpack.c.l.b16 %v3210
    %v3279 = vunpack.c.l.b16 %v3211
    %v3280 = vunpack.c.l.b16 %v3212
    %v3281 = vunpack.c.l.b16 %v3213
    %v3282 = vunpack.c.l.b16 %v3214
    %v3283 = vunpack.c.l.b16 %v3215
    %v3284 = vunpack.c.l.b16 %v3216
    %v3285 = vunpack.c.l.b16 %v3217
    %v3286 = vunpack.c.l.b16 %v3218
    %v3287 = vunpack.c.l.b16 %v3219
    %v3288 = vunpack.c.l.b16 %v3220
    %v3289 = vunpack.c.l.b16 %v3221
    %v3290 = vunpack.c.l.b16 %v3222
    %v3291 = vunpack.c.l.b16 %v3223
    %v3292 = vunpack.c.l.b16 %v3224
    %v3293 = vunpack.c.l.b16 %v3225
    %v3294 = vunpack.c.l.b16 %v3226
    %v3295 = vunpack.c.l.b16 %v3227
    %v3296 = vunpack.c.l.b16 %v3228
    %v3297 = vunpack.c.l.b16 %v3229
    %v3298 = vunpack.c.l.b16 %v3230
    %v3299 = vunpack.c.l.b16 %v3231
    %v3300 = vunpack.c.l.b16 %v3232
    %v3301 = vunpack.c.l.b16 %v3233
    %v3302 = vunpack.c.l.b16 %v3234
    %v3303 = vunpack.c.l.b16 %v3235
    %v3304 = vunpack.c.l.b16 %v3236
    %v3305 = vunpack.c.l.b16 %v3237
    %v3306 = vunpack.c.l.b16 %v3238
    %v3307 = vunpack.c.l.b16 %v3239
    %v3308 = vpack.c.b16 %v3277, %v3276
    %v3309 = vpack.c.b16 %v3279, %v3278
    %v3310 = vpack.c.b16 %v3281, %v3280
    %v3311 = vpack.c.b16 %v3283, %v3282
    %v3312 = vpack.c.b16 %v3285, %v3284
    %v3313 = vpack.c.b16 %v3287, %v3286
    %v3314 = vpack.c.b16 %v3289, %v3288
    %v3315 = vpack.c.b16 %v3291, %v3290
    %v3316 = vpack.c.b16 %v3293, %v3292
    %v3317 = vpack.c.b16 %v3295, %v3294
    %v3318 = vpack.c.b16 %v3297, %v3296
    %v3319 = vpack.c.b16 %v3299, %v3298
    %v3320 = vpack.c.b16 %v3301, %v3300
    %v3321 = vpack.c.b16 %v3303, %v3302
    %v3322 = vpack.c.b16 %v3305, %v3304
    %v3323 = vpack.c.b16 %v3307, %v3306
    %3340 = vmatpush.bf16.msra.mxu0 %v3315
    %3341 = vmatpush.bf16.msra.mxu0 %v3314
    %3342 = vmatpush.bf16.msra.mxu0 %v3313
    %3343 = vmatpush.bf16.msra.mxu0 %v3312
    %3344 = vmatpush.bf16.msra.mxu0 %v3311
    %3345 = vmatpush.bf16.msra.mxu0 %v3310
    %3346 = vmatpush.bf16.msra.mxu0 %v3309
    %3347 = vmatpush.bf16.msra.mxu0 %v3308
    %3348 = vmatmul.bf16.gmra.mxu0 %v3206
    %v3349 = vpop.f32.mrf.mxu0
    %v3350 = vadd.f32 %v3242, %v3349
    %v3351 = vpop.f32.mrf.mxu0
    %3352 = vdwg.mxu0
    %3353 = vmatpush.bf16.msra.mxu0 %v3323
    %3354 = vmatpush.bf16.msra.mxu0 %v3322
    %3355 = vmatpush.bf16.msra.mxu0 %v3321
    %3356 = vmatpush.bf16.msra.mxu0 %v3320
    %3357 = vmatpush.bf16.msra.mxu0 %v3319
    %3358 = vmatpush.bf16.msra.mxu0 %v3318
    %3359 = vmatpush.bf16.msra.mxu0 %v3317
    %3360 = vmatpush.bf16.msra.mxu0 %v3316
    %3361 = vmatmul.bf16.gmra.mxu0 %v3207
    %v3362 = vpop.f32.mrf.mxu0
    %v3363 = vadd.f32 %v3350, %v3362
    %v3364 = vpop.f32.mrf.mxu0
    %3365 = vdwg.mxu0
    %v3366 = vmax.f32 %v3363, 0.0
    %v3367 = vld [vmem:[%s11] sm:$0xff]
    %v3368 = vld [vmem:[%s11 + $0x8] sm:$0xff]
    %v3369 = vld [vmem:[%s11 + $0x10] sm:$0xff]
    %v3370 = vld [vmem:[%s11 + $0x18] sm:$0xff]
    %v3371 = vld [vmem:[%s11 + $0x20] sm:$0xff]
    %v3372 = vld [vmem:[%s11 + $0x28] sm:$0xff]
    %v3373 = vld [vmem:[%s11 + $0x30] sm:$0xff]
    %v3374 = vld [vmem:[%s11 + $0x38] sm:$0xff]
    %v3375 = vld [vmem:[%s11 + $0x40] sm:$0xff]
    %v3376 = vld [vmem:[%s11 + $0x48] sm:$0xff]
    %v3377 = vld [vmem:[%s11 + $0x50] sm:$0xff]
    %v3378 = vld [vmem:[%s11 + $0x58] sm:$0xff]
    %v3379 = vld [vmem:[%s11 + $0x60] sm:$0xff]
    %v3380 = vld [vmem:[%s11 + $0x68] sm:$0xff]
    %v3381 = vld [vmem:[%s11 + $0x70] sm:$0xff]
    %v3382 = vld [vmem:[%s11 + $0x78] sm:$0xff]
    %3383 = vmatpush.msra.mxu0 %v3382
    %3384 = vmatpush.msra.mxu0 %v3381
    %3385 = vmatpush.msra.mxu0 %v3380
    %3386 = vmatpush.msra.mxu0 %v3379
    %3387 = vmatpush.msra.mxu0 %v3378
    %3388 = vmatpush.msra.mxu0 %v3377
    %3389 = vmatpush.msra.mxu0 %v3376
    %3390 = vmatpush.msra.mxu0 %v3375
    %3391 = vmatpush.msra.mxu0 %v3374
    %3392 = vmatpush.msra.mxu0 %v3373
    %3393 = vmatpush.msra.mxu0 %v3372
    %3394 = vmatpush.msra.mxu0 %v3371
    %3395 = vmatpush.msra.mxu0 %v3370
    %3396 = vmatpush.msra.mxu0 %v3369
    %3397 = vmatpush.msra.mxu0 %v3368
    %3398 = vmatpush.msra.mxu0 %v3367
    %3399 = vmatmul.f32.gmra.mxu0 %v3366
    %v3400 = vpop.f32.mrf.mxu0
    %v3401 = vadd.f32 0.0, %v3400
    %3402 = vdwg.mxu0
    %v3403 = vld [vmem:[%s12] sm:$0xff]
    %v3404 = vld [vmem:[%s12 + $0x8] sm:$0xff]
    %v3405 = vld [vmem:[%s12 + $0x10] sm:$0xff]
    %v3406 = vld [vmem:[%s12 + $0x18] sm:$0xff]
    %vm3407 = vcmask 261120
    %v3409 = vsel %vm3407, %v3401, 0
    %3411 = vmatpush.msra.mxu0 0.0
    %3412 = vmatpush.msra.mxu0 0.0
    %3413 = vmatpush.msra.mxu0 0.0
    %3414 = vmatpush.msra.mxu0 0.0
    %3415 = vmatpush.msra.mxu0 0.0
    %3416 = vmatpush.msra.mxu0 0.0
    %3417 = vmatpush.msra.mxu0 0.0
    %3418 = vmatpush.msra.mxu0 0.0
    %3419 = vmatpush.msra.mxu0 0.0
    %3420 = vmatpush.msra.mxu0 0.0
    %3421 = vmatpush.msra.mxu0 0.0
    %3422 = vmatpush.msra.mxu0 0.0
    %3423 = vmatpush.msra.mxu0 %v3406
    %3424 = vmatpush.msra.mxu0 %v3405
    %3425 = vmatpush.msra.mxu0 %v3404
    %3426 = vmatpush.msra.mxu0 %v3403
    %3427 = vmatmul.f32.gmra.mxu0 %v3409
    %v3428 = vpop.f32.mrf.mxu0
    %v3429 = vadd.f32 0.0, %v3428
    %3430 = vdwg.mxu0
    %v3431 = vsub.f32 %v3366, %v3429
    %v3432 = vmul.f32 %v3431, %v3431
    %3433 = vmatpush.msra.mxu0 %v3382
    %3434 = vmatpush.msra.mxu0 %v3381
    %3435 = vmatpush.msra.mxu0 %v3380
    %3436 = vmatpush.msra.mxu0 %v3379
    %3437 = vmatpush.msra.mxu0 %v3378
    %3438 = vmatpush.msra.mxu0 %v3377
    %3439 = vmatpush.msra.mxu0 %v3376
    %3440 = vmatpush.msra.mxu0 %v3375
    %3441 = vmatpush.msra.mxu0 %v3374
    %3442 = vmatpush.msra.mxu0 %v3373
    %3443 = vmatpush.msra.mxu0 %v3372
    %3444 = vmatpush.msra.mxu0 %v3371
    %3445 = vmatpush.msra.mxu0 %v3370
    %3446 = vmatpush.msra.mxu0 %v3369
    %3447 = vmatpush.msra.mxu0 %v3368
    %3448 = vmatpush.msra.mxu0 %v3367
    %3449 = vmatmul.f32.gmra.mxu0 %v3432
    %v3450 = vpop.f32.mrf.mxu0
    %v3451 = vadd.f32 1e-05, %v3450
    %3452 = vdwg.mxu0
    %v3453 = vrsqrt.pop %v3451
    %v3454 = vmul.f32 %v3453, %v3451
    %v3455 = vmul.f32 %v3454, %v3453
    %v3456 = vmul.f32 0.5, %v3455
    %v3457 = vsub.f32 1.5, %v3456
    %v3458 = vmul.f32 %v3453, %v3457
    %vm3459 = vweird.f32 %v3451
    %vm3460 = vweird.f32 %v3453
    %vm3461 = vmor %vm3459, %vm3460
    %v3462 = vsel %vm3461, %v3453, %v3458
    %v3464 = vsel %vm3407, %v3462, 0
    %3466 = vmatpush.msra.mxu0 0.0
    %3467 = vmatpush.msra.mxu0 0.0
    %3468 = vmatpush.msra.mxu0 0.0
    %3469 = vmatpush.msra.mxu0 0.0
    %3470 = vmatpush.msra.mxu0 0.0
    %3471 = vmatpush.msra.mxu0 0.0
    %3472 = vmatpush.msra.mxu0 0.0
    %3473 = vmatpush.msra.mxu0 0.0
    %3474 = vmatpush.msra.mxu0 0.0
    %3475 = vmatpush.msra.mxu0 0.0
    %3476 = vmatpush.msra.mxu0 0.0
    %3477 = vmatpush.msra.mxu0 0.0
    %3478 = vmatpush.msra.mxu0 %v3406
    %3479 = vmatpush.msra.mxu0 %v3405
    %3480 = vmatpush.msra.mxu0 %v3404
    %3481 = vmatpush.msra.mxu0 %v3403
    %3482 = vmatmul.f32.gmra.mxu0 %v3464
    %v3483 = vpop.f32.mrf.mxu0
    %v3484 = vadd.f32 0.0, %v3483
    %3485 = vdwg.mxu0
    %v3486 = vmul.f32 %v3431, %v3484
    %v3487 = vpack.c.bf16 %v3486, %v3486
    %v3488 = vld [vmem:[%s13] sm:$0xf]
    %v3489 = vld [vmem:[%s13 + $0x4] sm:$0xf]
    %v3490 = vld [vmem:[%s13 + $0x8] sm:$0xf]
    %v3491 = vld [vmem:[%s13 + $0xc] sm:$0xf]
    %v3492 = vld [vmem:[%s13 + $0x10] sm:$0xf]
    %v3493 = vld [vmem:[%s13 + $0x14] sm:$0xf]
    %v3494 = vld [vmem:[%s13 + $0x18] sm:$0xf]
    %v3495 = vld [vmem:[%s13 + $0x1c] sm:$0xf]
    %v3496 = vld [vmem:[%s13 + $0x20] sm:$0xf]
    %v3497 = vld [vmem:[%s13 + $0x24] sm:$0xf]
    %v3498 = vld [vmem:[%s13 + $0x28] sm:$0xf]
    %v3499 = vld [vmem:[%s13 + $0x2c] sm:$0xf]
    %v3500 = vld [vmem:[%s13 + $0x30] sm:$0xf]
    %v3501 = vld [vmem:[%s13 + $0x34] sm:$0xf]
    %v3502 = vld [vmem:[%s13 + $0x38] sm:$0xf]
    %v3503 = vld [vmem:[%s13 + $0x3c] sm:$0xf]
    %v3504 = vld [vmem:[%s14] sm:$0x1]
    %v3506 = vperm.slane %v3504, 0
    %v3524 = vunpack.c.l.b16 %v3488
    %v3525 = vunpack.c.l.b16 %v3489
    %v3526 = vunpack.c.l.b16 %v3490
    %v3527 = vunpack.c.l.b16 %v3491
    %v3528 = vunpack.c.l.b16 %v3492
    %v3529 = vunpack.c.l.b16 %v3493
    %v3530 = vunpack.c.l.b16 %v3494
    %v3531 = vunpack.c.l.b16 %v3495
    %v3532 = vunpack.c.l.b16 %v3496
    %v3533 = vunpack.c.l.b16 %v3497
    %v3534 = vunpack.c.l.b16 %v3498
    %v3535 = vunpack.c.l.b16 %v3499
    %v3536 = vunpack.c.l.b16 %v3500
    %v3537 = vunpack.c.l.b16 %v3501
    %v3538 = vunpack.c.l.b16 %v3502
    %v3539 = vunpack.c.l.b16 %v3503
    %v3540 = vpack.c.b16 %v3525, %v3524
    %v3541 = vpack.c.b16 %v3527, %v3526
    %v3542 = vpack.c.b16 %v3529, %v3528
    %v3543 = vpack.c.b16 %v3531, %v3530
    %v3544 = vpack.c.b16 %v3533, %v3532
    %v3545 = vpack.c.b16 %v3535, %v3534
    %v3546 = vpack.c.b16 %v3537, %v3536
    %v3547 = vpack.c.b16 %v3539, %v3538
    %3556 = vmatpush.bf16.msra.mxu0 %v3547
    %3557 = vmatpush.bf16.msra.mxu0 %v3546
    %3558 = vmatpush.bf16.msra.mxu0 %v3545
    %3559 = vmatpush.bf16.msra.mxu0 %v3544
    %3560 = vmatpush.bf16.msra.mxu0 %v3543
    %3561 = vmatpush.bf16.msra.mxu0 %v3542
    %3562 = vmatpush.bf16.msra.mxu0 %v3541
    %3563 = vmatpush.bf16.msra.mxu0 %v3540
    %3564 = vmatmul.bf16.gmra.mxu0 %v3487
    %v3565 = vpop.f32.mrf.mxu0
    %v3566 = vadd.f32 %v3506, %v3565
    %v3567 = vpop.f32.mrf.mxu0
    %3568 = vdwg.mxu0
    %v3569 = vpack.c.bf16 %v3566, %v3566
    %v3570 = vld [vmem:[%s15] sm:$0xf]
    %v3571 = vld [vmem:[%s15 + $0x4] sm:$0xf]
    %v3572 = vld [vmem:[%s15 + $0x8] sm:$0xf]
    %v3573 = vld [vmem:[%s15 + $0xc] sm:$0xf]
    %v3574 = vld [vmem:[%s15 + $0x10] sm:$0xf]
    %v3575 = vld [vmem:[%s15 + $0x14] sm:$0xf]
    %v3576 = vld [vmem:[%s15 + $0x18] sm:$0xf]
    %v3577 = vld [vmem:[%s15 + $0x1c] sm:$0xf]
    %v3578 = vld [vmem:[%s15 + $0x20] sm:$0xf]
    %v3579 = vld [vmem:[%s15 + $0x24] sm:$0xf]
    %v3580 = vld [vmem:[%s15 + $0x28] sm:$0xf]
    %v3581 = vld [vmem:[%s15 + $0x2c] sm:$0xf]
    %v3582 = vld [vmem:[%s15 + $0x30] sm:$0xf]
    %v3583 = vld [vmem:[%s15 + $0x34] sm:$0xf]
    %v3584 = vld [vmem:[%s15 + $0x38] sm:$0xf]
    %v3585 = vld [vmem:[%s15 + $0x3c] sm:$0xf]
    %v3586 = vld [vmem:[%s16] sm:$0x1]
    %v3588 = vperm.slane %v3586, 0
    %v3606 = vunpack.c.l.b16 %v3570
    %v3607 = vunpack.c.l.b16 %v3571
    %v3608 = vunpack.c.l.b16 %v3572
    %v3609 = vunpack.c.l.b16 %v3573
    %v3610 = vunpack.c.l.b16 %v3574
    %v3611 = vunpack.c.l.b16 %v3575
    %v3612 = vunpack.c.l.b16 %v3576
    %v3613 = vunpack.c.l.b16 %v3577
    %v3614 = vunpack.c.l.b16 %v3578
    %v3615 = vunpack.c.l.b16 %v3579
    %v3616 = vunpack.c.l.b16 %v3580
    %v3617 = vunpack.c.l.b16 %v3581
    %v3618 = vunpack.c.l.b16 %v3582
    %v3619 = vunpack.c.l.b16 %v3583
    %v3620 = vunpack.c.l.b16 %v3584
    %v3621 = vunpack.c.l.b16 %v3585
    %v3622 = vpack.c.b16 %v3607, %v3606
    %v3623 = vpack.c.b16 %v3609, %v3608
    %v3624 = vpack.c.b16 %v3611, %v3610
    %v3625 = vpack.c.b16 %v3613, %v3612
    %v3626 = vpack.c.b16 %v3615, %v3614
    %v3627 = vpack.c.b16 %v3617, %v3616
    %v3628 = vpack.c.b16 %v3619, %v3618
    %v3629 = vpack.c.b16 %v3621, %v3620
    %3638 = vmatpush.bf16.msra.mxu0 %v3629
    %3639 = vmatpush.bf16.msra.mxu0 %v3628
    %3640 = vmatpush.bf16.msra.mxu0 %v3627
    %3641 = vmatpush.bf16.msra.mxu0 %v3626
    %3642 = vmatpush.bf16.msra.mxu0 %v3625
    %3643 = vmatpush.bf16.msra.mxu0 %v3624
    %3644 = vmatpush.bf16.msra.mxu0 %v3623
    %3645 = vmatpush.bf16.msra.mxu0 %v3622
    %3646 = vmatmul.bf16.gmra.mxu0 %v3569
    %v3647 = vpop.f32.mrf.mxu0
    %v3648 = vadd.f32 %v3588, %v3647
    %v3649 = vpop.f32.mrf.mxu0
    %3650 = vdwg.mxu0
    %vm3651 = vcmask 74752
    %3652 = vst.msk [vmem:[#allocation5] sm:$0x3] %vm3651, %v3648
    // Predicated region
    $region74: #{cnn_forward.1} parent=1 // pred_check
      _
    $region75: #{cnn_forward.1} parent=1 // pred_check_branch
      %3654 = sbr.rel (0) target = $region77
    $region76: #{cnn_forward.1} parent=1 // pred_region
      %3656 = vsyncadd [#allocation4], 0
      %s3658 = sshll.u32 [#allocation5], 4
      %s3659 = int_to_ptr.vmem [resolvable:$true] %s3658
      %s3660 = sshll.u32 %s17, 4
      %s3661 = int_to_ptr.hbm [resolvable:$true] %s3660
      %3663 = dma.vmem_to_hbm [thread:$0]  %s3659, 32, %s3661, [#allocation4]
    $region77: #{cnn_forward.1} parent=1 // pred_fallthru
      _
    // Predicated region
    $region78: #{cnn_forward.1} parent=1 // pred_check
      _
    $region79: #{cnn_forward.1} parent=1 // pred_check_branch
      %3665 = sbr.rel (0) target = $region81
    $region80: #{cnn_forward.1} parent=1 // pred_region
      %3667 = dma.done [#allocation4], 32
    $region81: #{cnn_forward.1} parent=1 // pred_fallthru
      _
    %3668 = vsyncpa [#allocation3], 1
    %3669 = vsyncpa [#allocation4], 1

</llo_original>
